<compile_context>
chip_gen: v6e
topology: v6e:2x2x1
jax: 0.10.0
libtpu: 0.0.40
codegen_flags: <defaults>
</compile_context>

<pallas_src>
import functools

import jax
import jax.numpy as jnp
from jax import lax
from jax.experimental import pallas as pl
from jax.experimental.pallas import tpu as pltpu


def _layer_norm(x, g, b, eps=1e-5):
    mu = jnp.mean(x, axis=-1, keepdims=True)
    var = jnp.mean((x - mu) ** 2, axis=-1, keepdims=True)
    return (x - mu) * lax.rsqrt(var + eps) * g + b


def _boxes_embedding_kernel(nhead, num_layers, nb, n,
                            x_ref, pw_ref, pb_ref, hm_ref, seg_ref,
                            wqkv_ref, bqkv_ref, wo_ref, bo_ref,
                            ln1g_ref, ln1b_ref,
                            f1w_ref, f1b_ref, f2w_ref, f2b_ref,
                            ln2g_ref, ln2b_ref,
                            o_ref):
    f32 = jnp.float32
    bf16 = jnp.bfloat16

    x = x_ref[...]                                             # (nb*n, a) f32

    # ---- box_proj: Linear (eval BatchNorm folded into pw/pb) -> ReLU ----
    # Contraction depth is only `a` (=4): kept in f32 on purpose (same MXU
    # time, better accuracy through the first small-variance LayerNorm).
    src = jnp.dot(x, pw_ref[...], preferred_element_type=f32) + pb_ref[...]
    src = jnp.maximum(src, 0.0)                                # (nb*n, H) f32

    H = src.shape[1]
    hm = hm_ref[...]                                           # (nhead, H) bf16 0/1 lane masks
    seg = seg_ref[...]                                         # (nhead*n, nhead*n) f32 block-diag ones

    # num_layers is small (3) -> static unroll is fine; switch to a layer grid
    # axis with streamed weights if this ever grows.
    for l in range(num_layers):
        # ----- multi-head self attention (post-norm) -----
        # fused QKV: one (nb*n, H) x (H, 3H) bf16 dot (Q weights pre-scaled
        # by 1/sqrt(dh) in the wrapper).
        qkv = jnp.dot(src.astype(bf16), wqkv_ref[l],
                      preferred_element_type=f32) + bqkv_ref[l]
        qkv = qkv.astype(bf16)
        q3 = qkv[:, :H].reshape(nb, n, H)
        k3 = qkv[:, H:2 * H].reshape(nb, n, H)
        v3 = qkv[:, 2 * H:].reshape(nb, n, H)

        # Stacked-head K/V: key rows [hd*n,(hd+1)*n) hold K/V masked to head
        # hd's lanes -> all heads in ONE score matmul and ONE PV matmul.
        k_stk = jnp.concatenate([k3 * hm[hd] for hd in range(nhead)], axis=1)
        v_stk = jnp.concatenate([v3 * hm[hd] for hd in range(nhead)], axis=1)

        s = jnp.einsum('bqd,bkd->bqk', q3, k_stk,
                       preferred_element_type=f32)             # (nb, n, nhead*n)
        # Segmented softmax: a shared row-max shift is valid inside every head
        # segment; per-segment denominators via one block-diagonal matmul.
        s = s - jnp.max(s, axis=-1, keepdims=True)
        e = jnp.exp(s)
        denom = jnp.dot(e.reshape(nb * n, nhead * n), seg,
                        preferred_element_type=f32).reshape(nb, n, nhead * n)
        p = e * pl.reciprocal(denom, approx=True)

        # Disjoint-lane V segments => this single PV matmul IS the head concat.
        attn = jnp.einsum('bqk,bkd->bqd', p.astype(bf16), v_stk,
                          preferred_element_type=f32)          # (nb, n, H)
        attn = attn.reshape(nb * n, H)
        attn = jnp.dot(attn.astype(bf16), wo_ref[l],
                       preferred_element_type=f32) + bo_ref[l]
        src = _layer_norm(src + attn, ln1g_ref[l], ln1b_ref[l])

        # ----- feed-forward (Linear -> ReLU -> Linear) -----
        ff = jnp.dot(src.astype(bf16), f1w_ref[l],
                     preferred_element_type=f32) + f1b_ref[l]
        ff = jnp.maximum(ff, 0.0)
        ff = jnp.dot(ff.astype(bf16), f2w_ref[l],
                     preferred_element_type=f32) + f2b_ref[l]
        src = _layer_norm(src + ff, ln2g_ref[l], ln2b_ref[l])

    o_ref[...] = src                                           # single dense store


def _const_index_map(ndim):
    return lambda i: (0,) * ndim


def _auto_batch_blocks(bs):
    """v7x has 2 TensorCores per chip: shard the batch across them.  On
    v5e/v6e (one TC) keep a single grid step (no per-step overhead)."""
    try:
        kind = jax.devices()[0].device_kind.lower()
    except Exception:
        return 1
    if ("v7" in kind or "7x" in kind) and bs % 2 == 0 and bs >= 2:
        return 2
    return 1


def boxes_embedding_forward(x, params, *, nhead, num_layers, num_batch_blocks=None):
    """x: (bs, n, in_channels) float32 -> (bs, n*hidden) float32."""
    bs, n, a = x.shape
    H = params["pw"].shape[1]
    dh = H // nhead

    if num_batch_blocks is None:
        num_batch_blocks = _auto_batch_blocks(bs)
    if bs % num_batch_blocks != 0:
        num_batch_blocks = 1
    nb = bs // num_batch_blocks

    # ---- fold eval-mode BatchNorm1d into the box_proj linear (exact) ----
    bn_scale = params["bng"] * lax.rsqrt(params["bnv"] + 1e-5)            # (1, H)
    pw_eff = params["pw"] * bn_scale                                      # (a, H) f32 (kept f32)
    pb_eff = (params["pb"] - params["bnm"]) * bn_scale + params["bnb"]    # (1, H) f32

    # ---- fuse Q|K|V, fold 1/sqrt(dh) into Q, pre-cast MXU weights to bf16 ----
    qscale = 1.0 / (dh ** 0.5)
    wqkv = jnp.concatenate([params["wq"] * qscale, params["wk"], params["wv"]],
                           axis=-1).astype(jnp.bfloat16)                  # (L, H, 3H)
    bqkv = jnp.concatenate([params["bq"] * qscale, params["bk"], params["bv"]],
                           axis=-1)                                        # (L, 1, 3H) f32
    wo = params["wo"].astype(jnp.bfloat16)
    f1w = params["f1w"].astype(jnp.bfloat16)
    f2w = params["f2w"].astype(jnp.bfloat16)

    # 0/1 lane masks selecting each head's dh channels (exact in bf16).
    head_mask = (jnp.arange(H)[None, :] // dh
                 == jnp.arange(nhead)[:, None]).astype(jnp.bfloat16)      # (nhead, H)
    # Block-diagonal ones: per-head-segment softmax denominators via one matmul.
    kidx = jnp.arange(nhead * n) // n
    seg_ones = (kidx[:, None] == kidx[None, :]).astype(jnp.float32)       # (nhead*n, nhead*n)

    x2d = x.reshape(bs * n, a)                                            # free reshape

    weights = [pw_eff, pb_eff, head_mask, seg_ones, wqkv, bqkv,
               wo, params["bo"], params["ln1g"], params["ln1b"],
               f1w, params["f1b"], f2w, params["f2b"],
               params["ln2g"], params["ln2b"]]

    in_specs = ([pl.BlockSpec((nb * n, a), lambda i: (i, 0))]
                + [pl.BlockSpec(w.shape, _const_index_map(w.ndim)) for w in weights])

    out = pl.pallas_call(
        functools.partial(_boxes_embedding_kernel, nhead, num_layers, nb, n),
        out_shape=jax.ShapeDtypeStruct((bs * n, H), jnp.float32),
        grid_spec=pltpu.PrefetchScalarGridSpec(
            num_scalar_prefetch=0,
            grid=(num_batch_blocks,),            # 1 step (v5e/v6e) or 2 (v7x, one per TC)
            in_specs=in_specs,
            out_specs=pl.BlockSpec((nb * n, H), lambda i: (i, 0)),
        ),
        compiler_params=pltpu.CompilerParams(
            dimension_semantics=(("parallel",) if num_batch_blocks > 1
                                 else ("arbitrary",))),
    )(x2d, *weights)

    # flatten(1): (bs*n, H) -> (bs, n*H) is a contiguous row-major metadata
    # reshape -- free in the wrapper; the kernel stored one dense block.
    return out.reshape(bs, n * H)


def init_params(key, in_channels, hidden, num_layers, ffn):
    """Deterministic synthetic parameters (shapes match the PyTorch module)."""
    ks = iter(jax.random.split(key, 64))
    nrm = lambda shp, s=0.05: (s * jax.random.normal(next(ks), shp)).astype(jnp.float32)
    p = {
        # box_proj Linear (stored pre-transposed: (in, out)) + bias as (1, H)
        "pw": nrm((in_channels, hidden)),
        "pb": nrm((1, hidden)),
        # BatchNorm1d (eval): gamma, beta, running_mean, running_var
        "bng": 1.0 + nrm((1, hidden)),
        "bnb": nrm((1, hidden)),
        "bnm": nrm((1, hidden)),
        "bnv": (0.5 + jax.random.uniform(next(ks), (1, hidden))).astype(jnp.float32),
        # transformer encoder layers, stacked along leading L axis
        "wq": nrm((num_layers, hidden, hidden)), "bq": nrm((num_layers, 1, hidden)),
        "wk": nrm((num_layers, hidden, hidden)), "bk": nrm((num_layers, 1, hidden)),
        "wv": nrm((num_layers, hidden, hidden)), "bv": nrm((num_layers, 1, hidden)),
        "wo": nrm((num_layers, hidden, hidden)), "bo": nrm((num_layers, 1, hidden)),
        "ln1g": 1.0 + nrm((num_layers, 1, hidden)), "ln1b": nrm((num_layers, 1, hidden)),
        "f1w": nrm((num_layers, hidden, ffn)), "f1b": nrm((num_layers, 1, ffn)),
        "f2w": nrm((num_layers, ffn, hidden)), "f2b": nrm((num_layers, 1, hidden)),
        "ln2g": 1.0 + nrm((num_layers, 1, hidden)), "ln2b": nrm((num_layers, 1, hidden)),
    }
    return p


def reference_forward(x, p, *, nhead, num_layers):
    """Pure-JAX f32 reference of the same math (unfused; validates the kernel,
    the BN/QKV/scale folding and the stacked-head attention trick)."""
    bs, n, a = x.shape
    h = x.reshape(bs * n, a) @ p["pw"] + p["pb"]
    h = (h - p["bnm"]) / jnp.sqrt(p["bnv"] + 1e-5) * p["bng"] + p["bnb"]
    src = jnp.maximum(h, 0.0).reshape(bs, n, -1)
    H = src.shape[-1]
    dh = H // nhead
    scale = 1.0 / (dh ** 0.5)

    def ln(x_, g, b, eps=1e-5):
        mu = jnp.mean(x_, axis=-1, keepdims=True)
        var = jnp.mean((x_ - mu) ** 2, axis=-1, keepdims=True)
        return (x_ - mu) / jnp.sqrt(var + eps) * g + b

    for l in range(num_layers):
        q = src @ p["wq"][l] + p["bq"][l]
        k = src @ p["wk"][l] + p["bk"][l]
        v = src @ p["wv"][l] + p["bv"][l]
        heads = []
        for hd in range(nhead):
            sl = slice(hd * dh, (hd + 1) * dh)
            s = jnp.einsum("bqd,bkd->bqk", q[..., sl], k[..., sl]) * scale
            pmat = jax.nn.softmax(s, axis=-1)
            heads.append(jnp.einsum("bqk,bkd->bqd", pmat, v[..., sl]))
        attn = jnp.concatenate(heads, axis=-1) @ p["wo"][l] + p["bo"][l]
        src = ln(src + attn, p["ln1g"][l], p["ln1b"][l])
        ff = jnp.maximum(src @ p["f1w"][l] + p["f1b"][l], 0.0) @ p["f2w"][l] + p["f2b"][l]
        src = ln(src + ff, p["ln2g"][l], p["ln2b"][l])
    return src.reshape(bs, -1)


if __name__ == "__main__":
    bs, n, in_channels = 2, 8, 4
    hidden, nhead, num_layers = 32, 4, 3
    ffn = 4 * hidden

    key = jax.random.PRNGKey(0)
    kx, kp = jax.random.split(key)
    x = jax.random.normal(kx, (bs, n, in_channels), dtype=jnp.float32)
    params = init_params(kp, in_channels, hidden, num_layers, ffn)

    out = boxes_embedding_forward(x, params, nhead=nhead, num_layers=num_layers)
    out = jax.block_until_ready(out)
    assert out.shape == (bs, n * hidden), out.shape

    ref = jax.block_until_ready(
        reference_forward(x, params, nhead=nhead, num_layers=num_layers))
    # bf16 MXU operands (f32 accumulation) + approx reciprocal give ~1e-2-level
    # drift vs the pure-f32 reference; still well inside the 5e-2 tolerance.
    max_diff = float(jnp.max(jnp.abs(out - ref)))
    assert max_diff < 5e-2, f"mismatch vs reference: {max_diff}"

    print("KERNEL_OK")
</pallas_src>

<mosaic_0001>
module attributes {stable_mosaic.version = 11 : i64} {
  func.func @_boxes_embedding_kernel(%arg0: i32, %arg1: memref<16x4xf32, #tpu.memory_space<vmem>>, %arg2: memref<4x32xf32, #tpu.memory_space<vmem>>, %arg3: memref<1x32xf32, #tpu.memory_space<vmem>>, %arg4: memref<4x32xbf16, #tpu.memory_space<vmem>>, %arg5: memref<32x32xf32, #tpu.memory_space<vmem>>, %arg6: memref<3x32x96xbf16, #tpu.memory_space<vmem>>, %arg7: memref<3x1x96xf32, #tpu.memory_space<vmem>>, %arg8: memref<3x32x32xbf16, #tpu.memory_space<vmem>>, %arg9: memref<3x1x32xf32, #tpu.memory_space<vmem>>, %arg10: memref<3x1x32xf32, #tpu.memory_space<vmem>>, %arg11: memref<3x1x32xf32, #tpu.memory_space<vmem>>, %arg12: memref<3x32x128xbf16, #tpu.memory_space<vmem>>, %arg13: memref<3x1x128xf32, #tpu.memory_space<vmem>>, %arg14: memref<3x128x32xbf16, #tpu.memory_space<vmem>>, %arg15: memref<3x1x32xf32, #tpu.memory_space<vmem>>, %arg16: memref<3x1x32xf32, #tpu.memory_space<vmem>>, %arg17: memref<3x1x32xf32, #tpu.memory_space<vmem>>, %arg18: memref<16x32xf32, #tpu.memory_space<vmem>>) attributes {dimension_semantics = [#tpu.dimension_semantics<arbitrary>], iteration_bounds = array<i64: 1>, scalar_prefetch = 0 : i64, scratch_operands = 0 : i64, tpu.core_type = #tpu.core_type<tc>, window_params = [{transform_indices = @transform_0, window_bounds = array<i64: 16, 4>}, {pipeline_mode = #tpu.pipeline_mode<synchronous>, transform_indices = @transform_1, window_bounds = array<i64: 4, 32>}, {pipeline_mode = #tpu.pipeline_mode<synchronous>, transform_indices = @transform_2, window_bounds = array<i64: 1, 32>}, {pipeline_mode = #tpu.pipeline_mode<synchronous>, transform_indices = @transform_3, window_bounds = array<i64: 4, 32>}, {pipeline_mode = #tpu.pipeline_mode<synchronous>, transform_indices = @transform_4, window_bounds = array<i64: 32, 32>}, {pipeline_mode = #tpu.pipeline_mode<synchronous>, transform_indices = @transform_5, window_bounds = array<i64: 3, 32, 96>}, {pipeline_mode = #tpu.pipeline_mode<synchronous>, transform_indices = @transform_6, window_bounds = array<i64: 3, 1, 96>}, {pipeline_mode = #tpu.pipeline_mode<synchronous>, transform_indices = @transform_7, window_bounds = array<i64: 3, 32, 32>}, {pipeline_mode = #tpu.pipeline_mode<synchronous>, transform_indices = @transform_8, window_bounds = array<i64: 3, 1, 32>}, {pipeline_mode = #tpu.pipeline_mode<synchronous>, transform_indices = @transform_9, window_bounds = array<i64: 3, 1, 32>}, {pipeline_mode = #tpu.pipeline_mode<synchronous>, transform_indices = @transform_10, window_bounds = array<i64: 3, 1, 32>}, {pipeline_mode = #tpu.pipeline_mode<synchronous>, transform_indices = @transform_11, window_bounds = array<i64: 3, 32, 128>}, {pipeline_mode = #tpu.pipeline_mode<synchronous>, transform_indices = @transform_12, window_bounds = array<i64: 3, 1, 128>}, {pipeline_mode = #tpu.pipeline_mode<synchronous>, transform_indices = @transform_13, window_bounds = array<i64: 3, 128, 32>}, {pipeline_mode = #tpu.pipeline_mode<synchronous>, transform_indices = @transform_14, window_bounds = array<i64: 3, 1, 32>}, {pipeline_mode = #tpu.pipeline_mode<synchronous>, transform_indices = @transform_15, window_bounds = array<i64: 3, 1, 32>}, {pipeline_mode = #tpu.pipeline_mode<synchronous>, transform_indices = @transform_16, window_bounds = array<i64: 3, 1, 32>}, {transform_indices = @transform_17, window_bounds = array<i64: 16, 32>}]} {
    %c0 = arith.constant 0 : index
    %c0_0 = arith.constant 0 : index
    %0 = vector.load %arg1[%c0, %c0_0] : memref<16x4xf32, #tpu.memory_space<vmem>>, vector<16x4xf32>
    %c0_1 = arith.constant 0 : index
    %c0_2 = arith.constant 0 : index
    %1 = vector.load %arg2[%c0_1, %c0_2] : memref<4x32xf32, #tpu.memory_space<vmem>>, vector<4x32xf32>
    %cst = arith.constant dense<0.000000e+00> : vector<16x32xf32>
    %2 = tpu.matmul %0, %1, %cst {dimension_numbers = #tpu.dot_dimension_numbers<[1], [0], [0], [1], [0, 0, 1, 1], [], []>} : vector<16x4xf32>, vector<4x32xf32>, vector<16x32xf32> -> vector<16x32xf32>
    %c0_3 = arith.constant 0 : index
    %c0_4 = arith.constant 0 : index
    %3 = vector.load %arg3[%c0_3, %c0_4] : memref<1x32xf32, #tpu.memory_space<vmem>>, vector<1x32xf32>
    %4 = vector.broadcast %3 : vector<1x32xf32> to vector<16x32xf32>
    %5 = arith.addf %2, %4 : vector<16x32xf32>
    %cst_5 = arith.constant 0.000000e+00 : f32
    %6 = vector.broadcast %cst_5 : f32 to vector<16x32xf32>
    %7 = arith.maximumf %5, %6 : vector<16x32xf32>
    %c0_6 = arith.constant 0 : index
    %c0_7 = arith.constant 0 : index
    %8 = vector.load %arg4[%c0_6, %c0_7] : memref<4x32xbf16, #tpu.memory_space<vmem>>, vector<4x32xbf16>
    %c0_8 = arith.constant 0 : index
    %c0_9 = arith.constant 0 : index
    %9 = vector.load %arg5[%c0_8, %c0_9] : memref<32x32xf32, #tpu.memory_space<vmem>>, vector<32x32xf32>
    %10 = arith.truncf %7 : vector<16x32xf32> to vector<16x32xbf16>
    %c0_10 = arith.constant 0 : index
    %c0_11 = arith.constant 0 : index
    %c0_12 = arith.constant 0 : index
    %11 = vector.load %arg6[%c0_10, %c0_11, %c0_12] : memref<3x32x96xbf16, #tpu.memory_space<vmem>>, vector<1x32x96xbf16>
    %12 = vector.shape_cast %11 : vector<1x32x96xbf16> to vector<32x96xbf16>
    %cst_13 = arith.constant dense<0.000000e+00> : vector<16x96xf32>
    %13 = tpu.matmul %10, %12, %cst_13 {dimension_numbers = #tpu.dot_dimension_numbers<[1], [0], [0], [1], [0, 0, 1, 1], [], []>} : vector<16x32xbf16>, vector<32x96xbf16>, vector<16x96xf32> -> vector<16x96xf32>
    %c0_14 = arith.constant 0 : index
    %c0_15 = arith.constant 0 : index
    %c0_16 = arith.constant 0 : index
    %14 = vector.load %arg7[%c0_14, %c0_15, %c0_16] : memref<3x1x96xf32, #tpu.memory_space<vmem>>, vector<1x1x96xf32>
    %15 = vector.shape_cast %14 : vector<1x1x96xf32> to vector<1x96xf32>
    %16 = vector.broadcast %15 : vector<1x96xf32> to vector<16x96xf32>
    %17 = arith.addf %13, %16 : vector<16x96xf32>
    %18 = arith.truncf %17 : vector<16x96xf32> to vector<16x96xbf16>
    %19 = vector.extract_strided_slice %18 {offsets = [0, 0], sizes = [16, 32], strides = [1, 1]} : vector<16x96xbf16> to vector<16x32xbf16>
    %20 = vector.shape_cast %19 : vector<16x32xbf16> to vector<2x8x32xbf16>
    %21 = vector.extract_strided_slice %18 {offsets = [0, 32], sizes = [16, 32], strides = [1, 1]} : vector<16x96xbf16> to vector<16x32xbf16>
    %22 = vector.shape_cast %21 : vector<16x32xbf16> to vector<2x8x32xbf16>
    %23 = vector.extract_strided_slice %18 {offsets = [0, 64], sizes = [16, 32], strides = [1, 1]} : vector<16x96xbf16> to vector<16x32xbf16>
    %24 = vector.shape_cast %23 : vector<16x32xbf16> to vector<2x8x32xbf16>
    %25 = vector.extract_strided_slice %8 {offsets = [0, 0], sizes = [1, 32], strides = [1, 1]} : vector<4x32xbf16> to vector<1x32xbf16>
    %26 = vector.shape_cast %25 : vector<1x32xbf16> to vector<32xbf16>
    %27 = vector.shape_cast %26 : vector<32xbf16> to vector<1x1x32xbf16>
    %28 = vector.broadcast %27 : vector<1x1x32xbf16> to vector<2x8x32xbf16>
    %29 = arith.mulf %22, %28 : vector<2x8x32xbf16>
    %30 = vector.extract_strided_slice %8 {offsets = [1, 0], sizes = [1, 32], strides = [1, 1]} : vector<4x32xbf16> to vector<1x32xbf16>
    %31 = vector.shape_cast %30 : vector<1x32xbf16> to vector<32xbf16>
    %32 = vector.shape_cast %31 : vector<32xbf16> to vector<1x1x32xbf16>
    %33 = vector.broadcast %32 : vector<1x1x32xbf16> to vector<2x8x32xbf16>
    %34 = arith.mulf %22, %33 : vector<2x8x32xbf16>
    %35 = vector.extract_strided_slice %8 {offsets = [2, 0], sizes = [1, 32], strides = [1, 1]} : vector<4x32xbf16> to vector<1x32xbf16>
    %36 = vector.shape_cast %35 : vector<1x32xbf16> to vector<32xbf16>
    %37 = vector.shape_cast %36 : vector<32xbf16> to vector<1x1x32xbf16>
    %38 = vector.broadcast %37 : vector<1x1x32xbf16> to vector<2x8x32xbf16>
    %39 = arith.mulf %22, %38 : vector<2x8x32xbf16>
    %40 = vector.extract_strided_slice %8 {offsets = [3, 0], sizes = [1, 32], strides = [1, 1]} : vector<4x32xbf16> to vector<1x32xbf16>
    %41 = vector.shape_cast %40 : vector<1x32xbf16> to vector<32xbf16>
    %42 = vector.shape_cast %41 : vector<32xbf16> to vector<1x1x32xbf16>
    %43 = vector.broadcast %42 : vector<1x1x32xbf16> to vector<2x8x32xbf16>
    %44 = arith.mulf %22, %43 : vector<2x8x32xbf16>
    %45 = tpu.concatenate %29, %34, %39, %44 in 1 : vector<2x8x32xbf16>, vector<2x8x32xbf16>, vector<2x8x32xbf16>, vector<2x8x32xbf16> -> vector<2x32x32xbf16>
    %46 = vector.extract_strided_slice %8 {offsets = [0, 0], sizes = [1, 32], strides = [1, 1]} : vector<4x32xbf16> to vector<1x32xbf16>
    %47 = vector.shape_cast %46 : vector<1x32xbf16> to vector<32xbf16>
    %48 = vector.shape_cast %47 : vector<32xbf16> to vector<1x1x32xbf16>
    %49 = vector.broadcast %48 : vector<1x1x32xbf16> to vector<2x8x32xbf16>
    %50 = arith.mulf %24, %49 : vector<2x8x32xbf16>
    %51 = vector.extract_strided_slice %8 {offsets = [1, 0], sizes = [1, 32], strides = [1, 1]} : vector<4x32xbf16> to vector<1x32xbf16>
    %52 = vector.shape_cast %51 : vector<1x32xbf16> to vector<32xbf16>
    %53 = vector.shape_cast %52 : vector<32xbf16> to vector<1x1x32xbf16>
    %54 = vector.broadcast %53 : vector<1x1x32xbf16> to vector<2x8x32xbf16>
    %55 = arith.mulf %24, %54 : vector<2x8x32xbf16>
    %56 = vector.extract_strided_slice %8 {offsets = [2, 0], sizes = [1, 32], strides = [1, 1]} : vector<4x32xbf16> to vector<1x32xbf16>
    %57 = vector.shape_cast %56 : vector<1x32xbf16> to vector<32xbf16>
    %58 = vector.shape_cast %57 : vector<32xbf16> to vector<1x1x32xbf16>
    %59 = vector.broadcast %58 : vector<1x1x32xbf16> to vector<2x8x32xbf16>
    %60 = arith.mulf %24, %59 : vector<2x8x32xbf16>
    %61 = vector.extract_strided_slice %8 {offsets = [3, 0], sizes = [1, 32], strides = [1, 1]} : vector<4x32xbf16> to vector<1x32xbf16>
    %62 = vector.shape_cast %61 : vector<1x32xbf16> to vector<32xbf16>
    %63 = vector.shape_cast %62 : vector<32xbf16> to vector<1x1x32xbf16>
    %64 = vector.broadcast %63 : vector<1x1x32xbf16> to vector<2x8x32xbf16>
    %65 = arith.mulf %24, %64 : vector<2x8x32xbf16>
    %66 = tpu.concatenate %50, %55, %60, %65 in 1 : vector<2x8x32xbf16>, vector<2x8x32xbf16>, vector<2x8x32xbf16>, vector<2x8x32xbf16> -> vector<2x32x32xbf16>
    "tpu.trace_start"() <{level = 10 : i32, message = "bqd,bkd->bqk"}> : () -> ()
    %cst_17 = arith.constant dense<0.000000e+00> : vector<2x8x32xf32>
    %67 = tpu.matmul %20, %45, %cst_17 {dimension_numbers = #tpu.dot_dimension_numbers<[2], [2], [1], [1], [0, 0, 0, 1, 1, 1], [0], [0]>} : vector<2x8x32xbf16>, vector<2x32x32xbf16>, vector<2x8x32xf32> -> vector<2x8x32xf32>
    "tpu.trace_stop"() : () -> ()
    %cst_18 = arith.constant dense<0xFF800000> : vector<2x8xf32>
    %68 = vector.multi_reduction <maximumf>, %67, %cst_18 [2] : vector<2x8x32xf32> to vector<2x8xf32>
    %69 = vector.shape_cast %68 : vector<2x8xf32> to vector<2x8x1xf32>
    %70 = vector.broadcast %69 : vector<2x8x1xf32> to vector<2x8x32xf32>
    %71 = arith.subf %67, %70 : vector<2x8x32xf32>
    %72 = math.exp %71 : vector<2x8x32xf32>
    %73 = vector.shape_cast %72 : vector<2x8x32xf32> to vector<16x32xf32>
    %cst_19 = arith.constant dense<0.000000e+00> : vector<16x32xf32>
    %74 = tpu.matmul %73, %9, %cst_19 {dimension_numbers = #tpu.dot_dimension_numbers<[1], [0], [0], [1], [0, 0, 1, 1], [], []>} : vector<16x32xf32>, vector<32x32xf32>, vector<16x32xf32> -> vector<16x32xf32>
    %75 = vector.shape_cast %74 : vector<16x32xf32> to vector<2x8x32xf32>
    %76 = tpu.reciprocal %75 {approx = true} : vector<2x8x32xf32> -> vector<2x8x32xf32>
    %77 = arith.mulf %72, %76 : vector<2x8x32xf32>
    %78 = arith.truncf %77 : vector<2x8x32xf32> to vector<2x8x32xbf16>
    "tpu.trace_start"() <{level = 10 : i32, message = "bqk,bkd->bqd"}> : () -> ()
    %cst_20 = arith.constant dense<0.000000e+00> : vector<2x8x32xf32>
    %79 = tpu.matmul %78, %66, %cst_20 {dimension_numbers = #tpu.dot_dimension_numbers<[2], [1], [1], [2], [0, 0, 0, 1, 1, 2], [0], [0]>} : vector<2x8x32xbf16>, vector<2x32x32xbf16>, vector<2x8x32xf32> -> vector<2x8x32xf32>
    "tpu.trace_stop"() : () -> ()
    %80 = vector.shape_cast %79 : vector<2x8x32xf32> to vector<16x32xf32>
    %81 = arith.truncf %80 : vector<16x32xf32> to vector<16x32xbf16>
    %c0_21 = arith.constant 0 : index
    %c0_22 = arith.constant 0 : index
    %c0_23 = arith.constant 0 : index
    %82 = vector.load %arg8[%c0_21, %c0_22, %c0_23] : memref<3x32x32xbf16, #tpu.memory_space<vmem>>, vector<1x32x32xbf16>
    %83 = vector.shape_cast %82 : vector<1x32x32xbf16> to vector<32x32xbf16>
    %cst_24 = arith.constant dense<0.000000e+00> : vector<16x32xf32>
    %84 = tpu.matmul %81, %83, %cst_24 {dimension_numbers = #tpu.dot_dimension_numbers<[1], [0], [0], [1], [0, 0, 1, 1], [], []>} : vector<16x32xbf16>, vector<32x32xbf16>, vector<16x32xf32> -> vector<16x32xf32>
    %c0_25 = arith.constant 0 : index
    %c0_26 = arith.constant 0 : index
    %c0_27 = arith.constant 0 : index
    %85 = vector.load %arg9[%c0_25, %c0_26, %c0_27] : memref<3x1x32xf32, #tpu.memory_space<vmem>>, vector<1x1x32xf32>
    %86 = vector.shape_cast %85 : vector<1x1x32xf32> to vector<1x32xf32>
    %87 = vector.broadcast %86 : vector<1x32xf32> to vector<16x32xf32>
    %88 = arith.addf %84, %87 : vector<16x32xf32>
    %89 = arith.addf %7, %88 : vector<16x32xf32>
    %c0_28 = arith.constant 0 : index
    %c0_29 = arith.constant 0 : index
    %c0_30 = arith.constant 0 : index
    %90 = vector.load %arg10[%c0_28, %c0_29, %c0_30] : memref<3x1x32xf32, #tpu.memory_space<vmem>>, vector<1x1x32xf32>
    %91 = vector.shape_cast %90 : vector<1x1x32xf32> to vector<1x32xf32>
    %c0_31 = arith.constant 0 : index
    %c0_32 = arith.constant 0 : index
    %c0_33 = arith.constant 0 : index
    %92 = vector.load %arg11[%c0_31, %c0_32, %c0_33] : memref<3x1x32xf32, #tpu.memory_space<vmem>>, vector<1x1x32xf32>
    %93 = vector.shape_cast %92 : vector<1x1x32xf32> to vector<1x32xf32>
    %cst_34 = arith.constant dense<0.000000e+00> : vector<16xf32>
    %94 = vector.multi_reduction <add>, %89, %cst_34 [1] : vector<16x32xf32> to vector<16xf32>
    %95 = vector.shape_cast %94 : vector<16xf32> to vector<16x1xf32>
    %cst_35 = arith.constant 3.200000e+01 : f32
    %96 = vector.broadcast %cst_35 : f32 to vector<16x1xf32>
    %97 = arith.divf %95, %96 : vector<16x1xf32>
    %98 = vector.broadcast %97 : vector<16x1xf32> to vector<16x32xf32>
    %99 = arith.subf %89, %98 : vector<16x32xf32>
    %100 = arith.mulf %99, %99 : vector<16x32xf32>
    %cst_36 = arith.constant dense<0.000000e+00> : vector<16xf32>
    %101 = vector.multi_reduction <add>, %100, %cst_36 [1] : vector<16x32xf32> to vector<16xf32>
    %102 = vector.shape_cast %101 : vector<16xf32> to vector<16x1xf32>
    %cst_37 = arith.constant 3.200000e+01 : f32
    %103 = vector.broadcast %cst_37 : f32 to vector<16x1xf32>
    %104 = arith.divf %102, %103 : vector<16x1xf32>
    %105 = vector.broadcast %97 : vector<16x1xf32> to vector<16x32xf32>
    %106 = arith.subf %89, %105 : vector<16x32xf32>
    %cst_38 = arith.constant 9.99999974E-6 : f32
    %107 = vector.broadcast %cst_38 : f32 to vector<16x1xf32>
    %108 = arith.addf %104, %107 : vector<16x1xf32>
    %109 = math.rsqrt %108 : vector<16x1xf32>
    %110 = vector.broadcast %109 : vector<16x1xf32> to vector<16x32xf32>
    %111 = arith.mulf %106, %110 : vector<16x32xf32>
    %112 = vector.broadcast %91 : vector<1x32xf32> to vector<16x32xf32>
    %113 = arith.mulf %111, %112 : vector<16x32xf32>
    %114 = vector.broadcast %93 : vector<1x32xf32> to vector<16x32xf32>
    %115 = arith.addf %113, %114 : vector<16x32xf32>
    %116 = arith.truncf %115 : vector<16x32xf32> to vector<16x32xbf16>
    %c0_39 = arith.constant 0 : index
    %c0_40 = arith.constant 0 : index
    %c0_41 = arith.constant 0 : index
    %117 = vector.load %arg12[%c0_39, %c0_40, %c0_41] : memref<3x32x128xbf16, #tpu.memory_space<vmem>>, vector<1x32x128xbf16>
    %118 = vector.shape_cast %117 : vector<1x32x128xbf16> to vector<32x128xbf16>
    %cst_42 = arith.constant dense<0.000000e+00> : vector<16x128xf32>
    %119 = tpu.matmul %116, %118, %cst_42 {dimension_numbers = #tpu.dot_dimension_numbers<[1], [0], [0], [1], [0, 0, 1, 1], [], []>} : vector<16x32xbf16>, vector<32x128xbf16>, vector<16x128xf32> -> vector<16x128xf32>
    %c0_43 = arith.constant 0 : index
    %c0_44 = arith.constant 0 : index
    %c0_45 = arith.constant 0 : index
    %120 = vector.load %arg13[%c0_43, %c0_44, %c0_45] : memref<3x1x128xf32, #tpu.memory_space<vmem>>, vector<1x1x128xf32>
    %121 = vector.shape_cast %120 : vector<1x1x128xf32> to vector<1x128xf32>
    %122 = vector.broadcast %121 : vector<1x128xf32> to vector<16x128xf32>
    %123 = arith.addf %119, %122 : vector<16x128xf32>
    %cst_46 = arith.constant 0.000000e+00 : f32
    %124 = vector.broadcast %cst_46 : f32 to vector<16x128xf32>
    %125 = arith.maximumf %123, %124 : vector<16x128xf32>
    %126 = arith.truncf %125 : vector<16x128xf32> to vector<16x128xbf16>
    %c0_47 = arith.constant 0 : index
    %c0_48 = arith.constant 0 : index
    %c0_49 = arith.constant 0 : index
    %127 = vector.load %arg14[%c0_47, %c0_48, %c0_49] : memref<3x128x32xbf16, #tpu.memory_space<vmem>>, vector<1x128x32xbf16>
    %128 = vector.shape_cast %127 : vector<1x128x32xbf16> to vector<128x32xbf16>
    %cst_50 = arith.constant dense<0.000000e+00> : vector<16x32xf32>
    %129 = tpu.matmul %126, %128, %cst_50 {dimension_numbers = #tpu.dot_dimension_numbers<[1], [0], [0], [1], [0, 0, 1, 1], [], []>} : vector<16x128xbf16>, vector<128x32xbf16>, vector<16x32xf32> -> vector<16x32xf32>
    %c0_51 = arith.constant 0 : index
    %c0_52 = arith.constant 0 : index
    %c0_53 = arith.constant 0 : index
    %130 = vector.load %arg15[%c0_51, %c0_52, %c0_53] : memref<3x1x32xf32, #tpu.memory_space<vmem>>, vector<1x1x32xf32>
    %131 = vector.shape_cast %130 : vector<1x1x32xf32> to vector<1x32xf32>
    %132 = vector.broadcast %131 : vector<1x32xf32> to vector<16x32xf32>
    %133 = arith.addf %129, %132 : vector<16x32xf32>
    %134 = arith.addf %115, %133 : vector<16x32xf32>
    %c0_54 = arith.constant 0 : index
    %c0_55 = arith.constant 0 : index
    %c0_56 = arith.constant 0 : index
    %135 = vector.load %arg16[%c0_54, %c0_55, %c0_56] : memref<3x1x32xf32, #tpu.memory_space<vmem>>, vector<1x1x32xf32>
    %136 = vector.shape_cast %135 : vector<1x1x32xf32> to vector<1x32xf32>
    %c0_57 = arith.constant 0 : index
    %c0_58 = arith.constant 0 : index
    %c0_59 = arith.constant 0 : index
    %137 = vector.load %arg17[%c0_57, %c0_58, %c0_59] : memref<3x1x32xf32, #tpu.memory_space<vmem>>, vector<1x1x32xf32>
    %138 = vector.shape_cast %137 : vector<1x1x32xf32> to vector<1x32xf32>
    %cst_60 = arith.constant dense<0.000000e+00> : vector<16xf32>
    %139 = vector.multi_reduction <add>, %134, %cst_60 [1] : vector<16x32xf32> to vector<16xf32>
    %140 = vector.shape_cast %139 : vector<16xf32> to vector<16x1xf32>
    %cst_61 = arith.constant 3.200000e+01 : f32
    %141 = vector.broadcast %cst_61 : f32 to vector<16x1xf32>
    %142 = arith.divf %140, %141 : vector<16x1xf32>
    %143 = vector.broadcast %142 : vector<16x1xf32> to vector<16x32xf32>
    %144 = arith.subf %134, %143 : vector<16x32xf32>
    %145 = arith.mulf %144, %144 : vector<16x32xf32>
    %cst_62 = arith.constant dense<0.000000e+00> : vector<16xf32>
    %146 = vector.multi_reduction <add>, %145, %cst_62 [1] : vector<16x32xf32> to vector<16xf32>
    %147 = vector.shape_cast %146 : vector<16xf32> to vector<16x1xf32>
    %cst_63 = arith.constant 3.200000e+01 : f32
    %148 = vector.broadcast %cst_63 : f32 to vector<16x1xf32>
    %149 = arith.divf %147, %148 : vector<16x1xf32>
    %150 = vector.broadcast %142 : vector<16x1xf32> to vector<16x32xf32>
    %151 = arith.subf %134, %150 : vector<16x32xf32>
    %cst_64 = arith.constant 9.99999974E-6 : f32
    %152 = vector.broadcast %cst_64 : f32 to vector<16x1xf32>
    %153 = arith.addf %149, %152 : vector<16x1xf32>
    %154 = math.rsqrt %153 : vector<16x1xf32>
    %155 = vector.broadcast %154 : vector<16x1xf32> to vector<16x32xf32>
    %156 = arith.mulf %151, %155 : vector<16x32xf32>
    %157 = vector.broadcast %136 : vector<1x32xf32> to vector<16x32xf32>
    %158 = arith.mulf %156, %157 : vector<16x32xf32>
    %159 = vector.broadcast %138 : vector<1x32xf32> to vector<16x32xf32>
    %160 = arith.addf %158, %159 : vector<16x32xf32>
    %161 = arith.truncf %160 : vector<16x32xf32> to vector<16x32xbf16>
    %c1 = arith.constant 1 : index
    %c0_65 = arith.constant 0 : index
    %c0_66 = arith.constant 0 : index
    %162 = vector.load %arg6[%c1, %c0_65, %c0_66] : memref<3x32x96xbf16, #tpu.memory_space<vmem>>, vector<1x32x96xbf16>
    %163 = vector.shape_cast %162 : vector<1x32x96xbf16> to vector<32x96xbf16>
    %cst_67 = arith.constant dense<0.000000e+00> : vector<16x96xf32>
    %164 = tpu.matmul %161, %163, %cst_67 {dimension_numbers = #tpu.dot_dimension_numbers<[1], [0], [0], [1], [0, 0, 1, 1], [], []>} : vector<16x32xbf16>, vector<32x96xbf16>, vector<16x96xf32> -> vector<16x96xf32>
    %c1_68 = arith.constant 1 : index
    %c0_69 = arith.constant 0 : index
    %c0_70 = arith.constant 0 : index
    %165 = vector.load %arg7[%c1_68, %c0_69, %c0_70] : memref<3x1x96xf32, #tpu.memory_space<vmem>>, vector<1x1x96xf32>
    %166 = vector.shape_cast %165 : vector<1x1x96xf32> to vector<1x96xf32>
    %167 = vector.broadcast %166 : vector<1x96xf32> to vector<16x96xf32>
    %168 = arith.addf %164, %167 : vector<16x96xf32>
    %169 = arith.truncf %168 : vector<16x96xf32> to vector<16x96xbf16>
    %170 = vector.extract_strided_slice %169 {offsets = [0, 0], sizes = [16, 32], strides = [1, 1]} : vector<16x96xbf16> to vector<16x32xbf16>
    %171 = vector.shape_cast %170 : vector<16x32xbf16> to vector<2x8x32xbf16>
    %172 = vector.extract_strided_slice %169 {offsets = [0, 32], sizes = [16, 32], strides = [1, 1]} : vector<16x96xbf16> to vector<16x32xbf16>
    %173 = vector.shape_cast %172 : vector<16x32xbf16> to vector<2x8x32xbf16>
    %174 = vector.extract_strided_slice %169 {offsets = [0, 64], sizes = [16, 32], strides = [1, 1]} : vector<16x96xbf16> to vector<16x32xbf16>
    %175 = vector.shape_cast %174 : vector<16x32xbf16> to vector<2x8x32xbf16>
    %176 = vector.extract_strided_slice %8 {offsets = [0, 0], sizes = [1, 32], strides = [1, 1]} : vector<4x32xbf16> to vector<1x32xbf16>
    %177 = vector.shape_cast %176 : vector<1x32xbf16> to vector<32xbf16>
    %178 = vector.shape_cast %177 : vector<32xbf16> to vector<1x1x32xbf16>
    %179 = vector.broadcast %178 : vector<1x1x32xbf16> to vector<2x8x32xbf16>
    %180 = arith.mulf %173, %179 : vector<2x8x32xbf16>
    %181 = vector.extract_strided_slice %8 {offsets = [1, 0], sizes = [1, 32], strides = [1, 1]} : vector<4x32xbf16> to vector<1x32xbf16>
    %182 = vector.shape_cast %181 : vector<1x32xbf16> to vector<32xbf16>
    %183 = vector.shape_cast %182 : vector<32xbf16> to vector<1x1x32xbf16>
    %184 = vector.broadcast %183 : vector<1x1x32xbf16> to vector<2x8x32xbf16>
    %185 = arith.mulf %173, %184 : vector<2x8x32xbf16>
    %186 = vector.extract_strided_slice %8 {offsets = [2, 0], sizes = [1, 32], strides = [1, 1]} : vector<4x32xbf16> to vector<1x32xbf16>
    %187 = vector.shape_cast %186 : vector<1x32xbf16> to vector<32xbf16>
    %188 = vector.shape_cast %187 : vector<32xbf16> to vector<1x1x32xbf16>
    %189 = vector.broadcast %188 : vector<1x1x32xbf16> to vector<2x8x32xbf16>
    %190 = arith.mulf %173, %189 : vector<2x8x32xbf16>
    %191 = vector.extract_strided_slice %8 {offsets = [3, 0], sizes = [1, 32], strides = [1, 1]} : vector<4x32xbf16> to vector<1x32xbf16>
    %192 = vector.shape_cast %191 : vector<1x32xbf16> to vector<32xbf16>
    %193 = vector.shape_cast %192 : vector<32xbf16> to vector<1x1x32xbf16>
    %194 = vector.broadcast %193 : vector<1x1x32xbf16> to vector<2x8x32xbf16>
    %195 = arith.mulf %173, %194 : vector<2x8x32xbf16>
    %196 = tpu.concatenate %180, %185, %190, %195 in 1 : vector<2x8x32xbf16>, vector<2x8x32xbf16>, vector<2x8x32xbf16>, vector<2x8x32xbf16> -> vector<2x32x32xbf16>
    %197 = vector.extract_strided_slice %8 {offsets = [0, 0], sizes = [1, 32], strides = [1, 1]} : vector<4x32xbf16> to vector<1x32xbf16>
    %198 = vector.shape_cast %197 : vector<1x32xbf16> to vector<32xbf16>
    %199 = vector.shape_cast %198 : vector<32xbf16> to vector<1x1x32xbf16>
    %200 = vector.broadcast %199 : vector<1x1x32xbf16> to vector<2x8x32xbf16>
    %201 = arith.mulf %175, %200 : vector<2x8x32xbf16>
    %202 = vector.extract_strided_slice %8 {offsets = [1, 0], sizes = [1, 32], strides = [1, 1]} : vector<4x32xbf16> to vector<1x32xbf16>
    %203 = vector.shape_cast %202 : vector<1x32xbf16> to vector<32xbf16>
    %204 = vector.shape_cast %203 : vector<32xbf16> to vector<1x1x32xbf16>
    %205 = vector.broadcast %204 : vector<1x1x32xbf16> to vector<2x8x32xbf16>
    %206 = arith.mulf %175, %205 : vector<2x8x32xbf16>
    %207 = vector.extract_strided_slice %8 {offsets = [2, 0], sizes = [1, 32], strides = [1, 1]} : vector<4x32xbf16> to vector<1x32xbf16>
    %208 = vector.shape_cast %207 : vector<1x32xbf16> to vector<32xbf16>
    %209 = vector.shape_cast %208 : vector<32xbf16> to vector<1x1x32xbf16>
    %210 = vector.broadcast %209 : vector<1x1x32xbf16> to vector<2x8x32xbf16>
    %211 = arith.mulf %175, %210 : vector<2x8x32xbf16>
    %212 = vector.extract_strided_slice %8 {offsets = [3, 0], sizes = [1, 32], strides = [1, 1]} : vector<4x32xbf16> to vector<1x32xbf16>
    %213 = vector.shape_cast %212 : vector<1x32xbf16> to vector<32xbf16>
    %214 = vector.shape_cast %213 : vector<32xbf16> to vector<1x1x32xbf16>
    %215 = vector.broadcast %214 : vector<1x1x32xbf16> to vector<2x8x32xbf16>
    %216 = arith.mulf %175, %215 : vector<2x8x32xbf16>
    %217 = tpu.concatenate %201, %206, %211, %216 in 1 : vector<2x8x32xbf16>, vector<2x8x32xbf16>, vector<2x8x32xbf16>, vector<2x8x32xbf16> -> vector<2x32x32xbf16>
    "tpu.trace_start"() <{level = 10 : i32, message = "bqd,bkd->bqk"}> : () -> ()
    %cst_71 = arith.constant dense<0.000000e+00> : vector<2x8x32xf32>
    %218 = tpu.matmul %171, %196, %cst_71 {dimension_numbers = #tpu.dot_dimension_numbers<[2], [2], [1], [1], [0, 0, 0, 1, 1, 1], [0], [0]>} : vector<2x8x32xbf16>, vector<2x32x32xbf16>, vector<2x8x32xf32> -> vector<2x8x32xf32>
    "tpu.trace_stop"() : () -> ()
    %cst_72 = arith.constant dense<0xFF800000> : vector<2x8xf32>
    %219 = vector.multi_reduction <maximumf>, %218, %cst_72 [2] : vector<2x8x32xf32> to vector<2x8xf32>
    %220 = vector.shape_cast %219 : vector<2x8xf32> to vector<2x8x1xf32>
    %221 = vector.broadcast %220 : vector<2x8x1xf32> to vector<2x8x32xf32>
    %222 = arith.subf %218, %221 : vector<2x8x32xf32>
    %223 = math.exp %222 : vector<2x8x32xf32>
    %224 = vector.shape_cast %223 : vector<2x8x32xf32> to vector<16x32xf32>
    %cst_73 = arith.constant dense<0.000000e+00> : vector<16x32xf32>
    %225 = tpu.matmul %224, %9, %cst_73 {dimension_numbers = #tpu.dot_dimension_numbers<[1], [0], [0], [1], [0, 0, 1, 1], [], []>} : vector<16x32xf32>, vector<32x32xf32>, vector<16x32xf32> -> vector<16x32xf32>
    %226 = vector.shape_cast %225 : vector<16x32xf32> to vector<2x8x32xf32>
    %227 = tpu.reciprocal %226 {approx = true} : vector<2x8x32xf32> -> vector<2x8x32xf32>
    %228 = arith.mulf %223, %227 : vector<2x8x32xf32>
    %229 = arith.truncf %228 : vector<2x8x32xf32> to vector<2x8x32xbf16>
    "tpu.trace_start"() <{level = 10 : i32, message = "bqk,bkd->bqd"}> : () -> ()
    %cst_74 = arith.constant dense<0.000000e+00> : vector<2x8x32xf32>
    %230 = tpu.matmul %229, %217, %cst_74 {dimension_numbers = #tpu.dot_dimension_numbers<[2], [1], [1], [2], [0, 0, 0, 1, 1, 2], [0], [0]>} : vector<2x8x32xbf16>, vector<2x32x32xbf16>, vector<2x8x32xf32> -> vector<2x8x32xf32>
    "tpu.trace_stop"() : () -> ()
    %231 = vector.shape_cast %230 : vector<2x8x32xf32> to vector<16x32xf32>
    %232 = arith.truncf %231 : vector<16x32xf32> to vector<16x32xbf16>
    %c1_75 = arith.constant 1 : index
    %c0_76 = arith.constant 0 : index
    %c0_77 = arith.constant 0 : index
    %233 = vector.load %arg8[%c1_75, %c0_76, %c0_77] : memref<3x32x32xbf16, #tpu.memory_space<vmem>>, vector<1x32x32xbf16>
    %234 = vector.shape_cast %233 : vector<1x32x32xbf16> to vector<32x32xbf16>
    %cst_78 = arith.constant dense<0.000000e+00> : vector<16x32xf32>
    %235 = tpu.matmul %232, %234, %cst_78 {dimension_numbers = #tpu.dot_dimension_numbers<[1], [0], [0], [1], [0, 0, 1, 1], [], []>} : vector<16x32xbf16>, vector<32x32xbf16>, vector<16x32xf32> -> vector<16x32xf32>
    %c1_79 = arith.constant 1 : index
    %c0_80 = arith.constant 0 : index
    %c0_81 = arith.constant 0 : index
    %236 = vector.load %arg9[%c1_79, %c0_80, %c0_81] : memref<3x1x32xf32, #tpu.memory_space<vmem>>, vector<1x1x32xf32>
    %237 = vector.shape_cast %236 : vector<1x1x32xf32> to vector<1x32xf32>
    %238 = vector.broadcast %237 : vector<1x32xf32> to vector<16x32xf32>
    %239 = arith.addf %235, %238 : vector<16x32xf32>
    %240 = arith.addf %160, %239 : vector<16x32xf32>
    %c1_82 = arith.constant 1 : index
    %c0_83 = arith.constant 0 : index
    %c0_84 = arith.constant 0 : index
    %241 = vector.load %arg10[%c1_82, %c0_83, %c0_84] : memref<3x1x32xf32, #tpu.memory_space<vmem>>, vector<1x1x32xf32>
    %242 = vector.shape_cast %241 : vector<1x1x32xf32> to vector<1x32xf32>
    %c1_85 = arith.constant 1 : index
    %c0_86 = arith.constant 0 : index
    %c0_87 = arith.constant 0 : index
    %243 = vector.load %arg11[%c1_85, %c0_86, %c0_87] : memref<3x1x32xf32, #tpu.memory_space<vmem>>, vector<1x1x32xf32>
    %244 = vector.shape_cast %243 : vector<1x1x32xf32> to vector<1x32xf32>
    %cst_88 = arith.constant dense<0.000000e+00> : vector<16xf32>
    %245 = vector.multi_reduction <add>, %240, %cst_88 [1] : vector<16x32xf32> to vector<16xf32>
    %246 = vector.shape_cast %245 : vector<16xf32> to vector<16x1xf32>
    %cst_89 = arith.constant 3.200000e+01 : f32
    %247 = vector.broadcast %cst_89 : f32 to vector<16x1xf32>
    %248 = arith.divf %246, %247 : vector<16x1xf32>
    %249 = vector.broadcast %248 : vector<16x1xf32> to vector<16x32xf32>
    %250 = arith.subf %240, %249 : vector<16x32xf32>
    %251 = arith.mulf %250, %250 : vector<16x32xf32>
    %cst_90 = arith.constant dense<0.000000e+00> : vector<16xf32>
    %252 = vector.multi_reduction <add>, %251, %cst_90 [1] : vector<16x32xf32> to vector<16xf32>
    %253 = vector.shape_cast %252 : vector<16xf32> to vector<16x1xf32>
    %cst_91 = arith.constant 3.200000e+01 : f32
    %254 = vector.broadcast %cst_91 : f32 to vector<16x1xf32>
    %255 = arith.divf %253, %254 : vector<16x1xf32>
    %256 = vector.broadcast %248 : vector<16x1xf32> to vector<16x32xf32>
    %257 = arith.subf %240, %256 : vector<16x32xf32>
    %cst_92 = arith.constant 9.99999974E-6 : f32
    %258 = vector.broadcast %cst_92 : f32 to vector<16x1xf32>
    %259 = arith.addf %255, %258 : vector<16x1xf32>
    %260 = math.rsqrt %259 : vector<16x1xf32>
    %261 = vector.broadcast %260 : vector<16x1xf32> to vector<16x32xf32>
    %262 = arith.mulf %257, %261 : vector<16x32xf32>
    %263 = vector.broadcast %242 : vector<1x32xf32> to vector<16x32xf32>
    %264 = arith.mulf %262, %263 : vector<16x32xf32>
    %265 = vector.broadcast %244 : vector<1x32xf32> to vector<16x32xf32>
    %266 = arith.addf %264, %265 : vector<16x32xf32>
    %267 = arith.truncf %266 : vector<16x32xf32> to vector<16x32xbf16>
    %c1_93 = arith.constant 1 : index
    %c0_94 = arith.constant 0 : index
    %c0_95 = arith.constant 0 : index
    %268 = vector.load %arg12[%c1_93, %c0_94, %c0_95] : memref<3x32x128xbf16, #tpu.memory_space<vmem>>, vector<1x32x128xbf16>
    %269 = vector.shape_cast %268 : vector<1x32x128xbf16> to vector<32x128xbf16>
    %cst_96 = arith.constant dense<0.000000e+00> : vector<16x128xf32>
    %270 = tpu.matmul %267, %269, %cst_96 {dimension_numbers = #tpu.dot_dimension_numbers<[1], [0], [0], [1], [0, 0, 1, 1], [], []>} : vector<16x32xbf16>, vector<32x128xbf16>, vector<16x128xf32> -> vector<16x128xf32>
    %c1_97 = arith.constant 1 : index
    %c0_98 = arith.constant 0 : index
    %c0_99 = arith.constant 0 : index
    %271 = vector.load %arg13[%c1_97, %c0_98, %c0_99] : memref<3x1x128xf32, #tpu.memory_space<vmem>>, vector<1x1x128xf32>
    %272 = vector.shape_cast %271 : vector<1x1x128xf32> to vector<1x128xf32>
    %273 = vector.broadcast %272 : vector<1x128xf32> to vector<16x128xf32>
    %274 = arith.addf %270, %273 : vector<16x128xf32>
    %cst_100 = arith.constant 0.000000e+00 : f32
    %275 = vector.broadcast %cst_100 : f32 to vector<16x128xf32>
    %276 = arith.maximumf %274, %275 : vector<16x128xf32>
    %277 = arith.truncf %276 : vector<16x128xf32> to vector<16x128xbf16>
    %c1_101 = arith.constant 1 : index
    %c0_102 = arith.constant 0 : index
    %c0_103 = arith.constant 0 : index
    %278 = vector.load %arg14[%c1_101, %c0_102, %c0_103] : memref<3x128x32xbf16, #tpu.memory_space<vmem>>, vector<1x128x32xbf16>
    %279 = vector.shape_cast %278 : vector<1x128x32xbf16> to vector<128x32xbf16>
    %cst_104 = arith.constant dense<0.000000e+00> : vector<16x32xf32>
    %280 = tpu.matmul %277, %279, %cst_104 {dimension_numbers = #tpu.dot_dimension_numbers<[1], [0], [0], [1], [0, 0, 1, 1], [], []>} : vector<16x128xbf16>, vector<128x32xbf16>, vector<16x32xf32> -> vector<16x32xf32>
    %c1_105 = arith.constant 1 : index
    %c0_106 = arith.constant 0 : index
    %c0_107 = arith.constant 0 : index
    %281 = vector.load %arg15[%c1_105, %c0_106, %c0_107] : memref<3x1x32xf32, #tpu.memory_space<vmem>>, vector<1x1x32xf32>
    %282 = vector.shape_cast %281 : vector<1x1x32xf32> to vector<1x32xf32>
    %283 = vector.broadcast %282 : vector<1x32xf32> to vector<16x32xf32>
    %284 = arith.addf %280, %283 : vector<16x32xf32>
    %285 = arith.addf %266, %284 : vector<16x32xf32>
    %c1_108 = arith.constant 1 : index
    %c0_109 = arith.constant 0 : index
    %c0_110 = arith.constant 0 : index
    %286 = vector.load %arg16[%c1_108, %c0_109, %c0_110] : memref<3x1x32xf32, #tpu.memory_space<vmem>>, vector<1x1x32xf32>
    %287 = vector.shape_cast %286 : vector<1x1x32xf32> to vector<1x32xf32>
    %c1_111 = arith.constant 1 : index
    %c0_112 = arith.constant 0 : index
    %c0_113 = arith.constant 0 : index
    %288 = vector.load %arg17[%c1_111, %c0_112, %c0_113] : memref<3x1x32xf32, #tpu.memory_space<vmem>>, vector<1x1x32xf32>
    %289 = vector.shape_cast %288 : vector<1x1x32xf32> to vector<1x32xf32>
    %cst_114 = arith.constant dense<0.000000e+00> : vector<16xf32>
    %290 = vector.multi_reduction <add>, %285, %cst_114 [1] : vector<16x32xf32> to vector<16xf32>
    %291 = vector.shape_cast %290 : vector<16xf32> to vector<16x1xf32>
    %cst_115 = arith.constant 3.200000e+01 : f32
    %292 = vector.broadcast %cst_115 : f32 to vector<16x1xf32>
    %293 = arith.divf %291, %292 : vector<16x1xf32>
    %294 = vector.broadcast %293 : vector<16x1xf32> to vector<16x32xf32>
    %295 = arith.subf %285, %294 : vector<16x32xf32>
    %296 = arith.mulf %295, %295 : vector<16x32xf32>
    %cst_116 = arith.constant dense<0.000000e+00> : vector<16xf32>
    %297 = vector.multi_reduction <add>, %296, %cst_116 [1] : vector<16x32xf32> to vector<16xf32>
    %298 = vector.shape_cast %297 : vector<16xf32> to vector<16x1xf32>
    %cst_117 = arith.constant 3.200000e+01 : f32
    %299 = vector.broadcast %cst_117 : f32 to vector<16x1xf32>
    %300 = arith.divf %298, %299 : vector<16x1xf32>
    %301 = vector.broadcast %293 : vector<16x1xf32> to vector<16x32xf32>
    %302 = arith.subf %285, %301 : vector<16x32xf32>
    %cst_118 = arith.constant 9.99999974E-6 : f32
    %303 = vector.broadcast %cst_118 : f32 to vector<16x1xf32>
    %304 = arith.addf %300, %303 : vector<16x1xf32>
    %305 = math.rsqrt %304 : vector<16x1xf32>
    %306 = vector.broadcast %305 : vector<16x1xf32> to vector<16x32xf32>
    %307 = arith.mulf %302, %306 : vector<16x32xf32>
    %308 = vector.broadcast %287 : vector<1x32xf32> to vector<16x32xf32>
    %309 = arith.mulf %307, %308 : vector<16x32xf32>
    %310 = vector.broadcast %289 : vector<1x32xf32> to vector<16x32xf32>
    %311 = arith.addf %309, %310 : vector<16x32xf32>
    %312 = arith.truncf %311 : vector<16x32xf32> to vector<16x32xbf16>
    %c2 = arith.constant 2 : index
    %c0_119 = arith.constant 0 : index
    %c0_120 = arith.constant 0 : index
    %313 = vector.load %arg6[%c2, %c0_119, %c0_120] : memref<3x32x96xbf16, #tpu.memory_space<vmem>>, vector<1x32x96xbf16>
    %314 = vector.shape_cast %313 : vector<1x32x96xbf16> to vector<32x96xbf16>
    %cst_121 = arith.constant dense<0.000000e+00> : vector<16x96xf32>
    %315 = tpu.matmul %312, %314, %cst_121 {dimension_numbers = #tpu.dot_dimension_numbers<[1], [0], [0], [1], [0, 0, 1, 1], [], []>} : vector<16x32xbf16>, vector<32x96xbf16>, vector<16x96xf32> -> vector<16x96xf32>
    %c2_122 = arith.constant 2 : index
    %c0_123 = arith.constant 0 : index
    %c0_124 = arith.constant 0 : index
    %316 = vector.load %arg7[%c2_122, %c0_123, %c0_124] : memref<3x1x96xf32, #tpu.memory_space<vmem>>, vector<1x1x96xf32>
    %317 = vector.shape_cast %316 : vector<1x1x96xf32> to vector<1x96xf32>
    %318 = vector.broadcast %317 : vector<1x96xf32> to vector<16x96xf32>
    %319 = arith.addf %315, %318 : vector<16x96xf32>
    %320 = arith.truncf %319 : vector<16x96xf32> to vector<16x96xbf16>
    %321 = vector.extract_strided_slice %320 {offsets = [0, 0], sizes = [16, 32], strides = [1, 1]} : vector<16x96xbf16> to vector<16x32xbf16>
    %322 = vector.shape_cast %321 : vector<16x32xbf16> to vector<2x8x32xbf16>
    %323 = vector.extract_strided_slice %320 {offsets = [0, 32], sizes = [16, 32], strides = [1, 1]} : vector<16x96xbf16> to vector<16x32xbf16>
    %324 = vector.shape_cast %323 : vector<16x32xbf16> to vector<2x8x32xbf16>
    %325 = vector.extract_strided_slice %320 {offsets = [0, 64], sizes = [16, 32], strides = [1, 1]} : vector<16x96xbf16> to vector<16x32xbf16>
    %326 = vector.shape_cast %325 : vector<16x32xbf16> to vector<2x8x32xbf16>
    %327 = vector.extract_strided_slice %8 {offsets = [0, 0], sizes = [1, 32], strides = [1, 1]} : vector<4x32xbf16> to vector<1x32xbf16>
    %328 = vector.shape_cast %327 : vector<1x32xbf16> to vector<32xbf16>
    %329 = vector.shape_cast %328 : vector<32xbf16> to vector<1x1x32xbf16>
    %330 = vector.broadcast %329 : vector<1x1x32xbf16> to vector<2x8x32xbf16>
    %331 = arith.mulf %324, %330 : vector<2x8x32xbf16>
    %332 = vector.extract_strided_slice %8 {offsets = [1, 0], sizes = [1, 32], strides = [1, 1]} : vector<4x32xbf16> to vector<1x32xbf16>
    %333 = vector.shape_cast %332 : vector<1x32xbf16> to vector<32xbf16>
    %334 = vector.shape_cast %333 : vector<32xbf16> to vector<1x1x32xbf16>
    %335 = vector.broadcast %334 : vector<1x1x32xbf16> to vector<2x8x32xbf16>
    %336 = arith.mulf %324, %335 : vector<2x8x32xbf16>
    %337 = vector.extract_strided_slice %8 {offsets = [2, 0], sizes = [1, 32], strides = [1, 1]} : vector<4x32xbf16> to vector<1x32xbf16>
    %338 = vector.shape_cast %337 : vector<1x32xbf16> to vector<32xbf16>
    %339 = vector.shape_cast %338 : vector<32xbf16> to vector<1x1x32xbf16>
    %340 = vector.broadcast %339 : vector<1x1x32xbf16> to vector<2x8x32xbf16>
    %341 = arith.mulf %324, %340 : vector<2x8x32xbf16>
    %342 = vector.extract_strided_slice %8 {offsets = [3, 0], sizes = [1, 32], strides = [1, 1]} : vector<4x32xbf16> to vector<1x32xbf16>
    %343 = vector.shape_cast %342 : vector<1x32xbf16> to vector<32xbf16>
    %344 = vector.shape_cast %343 : vector<32xbf16> to vector<1x1x32xbf16>
    %345 = vector.broadcast %344 : vector<1x1x32xbf16> to vector<2x8x32xbf16>
    %346 = arith.mulf %324, %345 : vector<2x8x32xbf16>
    %347 = tpu.concatenate %331, %336, %341, %346 in 1 : vector<2x8x32xbf16>, vector<2x8x32xbf16>, vector<2x8x32xbf16>, vector<2x8x32xbf16> -> vector<2x32x32xbf16>
    %348 = vector.extract_strided_slice %8 {offsets = [0, 0], sizes = [1, 32], strides = [1, 1]} : vector<4x32xbf16> to vector<1x32xbf16>
    %349 = vector.shape_cast %348 : vector<1x32xbf16> to vector<32xbf16>
    %350 = vector.shape_cast %349 : vector<32xbf16> to vector<1x1x32xbf16>
    %351 = vector.broadcast %350 : vector<1x1x32xbf16> to vector<2x8x32xbf16>
    %352 = arith.mulf %326, %351 : vector<2x8x32xbf16>
    %353 = vector.extract_strided_slice %8 {offsets = [1, 0], sizes = [1, 32], strides = [1, 1]} : vector<4x32xbf16> to vector<1x32xbf16>
    %354 = vector.shape_cast %353 : vector<1x32xbf16> to vector<32xbf16>
    %355 = vector.shape_cast %354 : vector<32xbf16> to vector<1x1x32xbf16>
    %356 = vector.broadcast %355 : vector<1x1x32xbf16> to vector<2x8x32xbf16>
    %357 = arith.mulf %326, %356 : vector<2x8x32xbf16>
    %358 = vector.extract_strided_slice %8 {offsets = [2, 0], sizes = [1, 32], strides = [1, 1]} : vector<4x32xbf16> to vector<1x32xbf16>
    %359 = vector.shape_cast %358 : vector<1x32xbf16> to vector<32xbf16>
    %360 = vector.shape_cast %359 : vector<32xbf16> to vector<1x1x32xbf16>
    %361 = vector.broadcast %360 : vector<1x1x32xbf16> to vector<2x8x32xbf16>
    %362 = arith.mulf %326, %361 : vector<2x8x32xbf16>
    %363 = vector.extract_strided_slice %8 {offsets = [3, 0], sizes = [1, 32], strides = [1, 1]} : vector<4x32xbf16> to vector<1x32xbf16>
    %364 = vector.shape_cast %363 : vector<1x32xbf16> to vector<32xbf16>
    %365 = vector.shape_cast %364 : vector<32xbf16> to vector<1x1x32xbf16>
    %366 = vector.broadcast %365 : vector<1x1x32xbf16> to vector<2x8x32xbf16>
    %367 = arith.mulf %326, %366 : vector<2x8x32xbf16>
    %368 = tpu.concatenate %352, %357, %362, %367 in 1 : vector<2x8x32xbf16>, vector<2x8x32xbf16>, vector<2x8x32xbf16>, vector<2x8x32xbf16> -> vector<2x32x32xbf16>
    "tpu.trace_start"() <{level = 10 : i32, message = "bqd,bkd->bqk"}> : () -> ()
    %cst_125 = arith.constant dense<0.000000e+00> : vector<2x8x32xf32>
    %369 = tpu.matmul %322, %347, %cst_125 {dimension_numbers = #tpu.dot_dimension_numbers<[2], [2], [1], [1], [0, 0, 0, 1, 1, 1], [0], [0]>} : vector<2x8x32xbf16>, vector<2x32x32xbf16>, vector<2x8x32xf32> -> vector<2x8x32xf32>
    "tpu.trace_stop"() : () -> ()
    %cst_126 = arith.constant dense<0xFF800000> : vector<2x8xf32>
    %370 = vector.multi_reduction <maximumf>, %369, %cst_126 [2] : vector<2x8x32xf32> to vector<2x8xf32>
    %371 = vector.shape_cast %370 : vector<2x8xf32> to vector<2x8x1xf32>
    %372 = vector.broadcast %371 : vector<2x8x1xf32> to vector<2x8x32xf32>
    %373 = arith.subf %369, %372 : vector<2x8x32xf32>
    %374 = math.exp %373 : vector<2x8x32xf32>
    %375 = vector.shape_cast %374 : vector<2x8x32xf32> to vector<16x32xf32>
    %cst_127 = arith.constant dense<0.000000e+00> : vector<16x32xf32>
    %376 = tpu.matmul %375, %9, %cst_127 {dimension_numbers = #tpu.dot_dimension_numbers<[1], [0], [0], [1], [0, 0, 1, 1], [], []>} : vector<16x32xf32>, vector<32x32xf32>, vector<16x32xf32> -> vector<16x32xf32>
    %377 = vector.shape_cast %376 : vector<16x32xf32> to vector<2x8x32xf32>
    %378 = tpu.reciprocal %377 {approx = true} : vector<2x8x32xf32> -> vector<2x8x32xf32>
    %379 = arith.mulf %374, %378 : vector<2x8x32xf32>
    %380 = arith.truncf %379 : vector<2x8x32xf32> to vector<2x8x32xbf16>
    "tpu.trace_start"() <{level = 10 : i32, message = "bqk,bkd->bqd"}> : () -> ()
    %cst_128 = arith.constant dense<0.000000e+00> : vector<2x8x32xf32>
    %381 = tpu.matmul %380, %368, %cst_128 {dimension_numbers = #tpu.dot_dimension_numbers<[2], [1], [1], [2], [0, 0, 0, 1, 1, 2], [0], [0]>} : vector<2x8x32xbf16>, vector<2x32x32xbf16>, vector<2x8x32xf32> -> vector<2x8x32xf32>
    "tpu.trace_stop"() : () -> ()
    %382 = vector.shape_cast %381 : vector<2x8x32xf32> to vector<16x32xf32>
    %383 = arith.truncf %382 : vector<16x32xf32> to vector<16x32xbf16>
    %c2_129 = arith.constant 2 : index
    %c0_130 = arith.constant 0 : index
    %c0_131 = arith.constant 0 : index
    %384 = vector.load %arg8[%c2_129, %c0_130, %c0_131] : memref<3x32x32xbf16, #tpu.memory_space<vmem>>, vector<1x32x32xbf16>
    %385 = vector.shape_cast %384 : vector<1x32x32xbf16> to vector<32x32xbf16>
    %cst_132 = arith.constant dense<0.000000e+00> : vector<16x32xf32>
    %386 = tpu.matmul %383, %385, %cst_132 {dimension_numbers = #tpu.dot_dimension_numbers<[1], [0], [0], [1], [0, 0, 1, 1], [], []>} : vector<16x32xbf16>, vector<32x32xbf16>, vector<16x32xf32> -> vector<16x32xf32>
    %c2_133 = arith.constant 2 : index
    %c0_134 = arith.constant 0 : index
    %c0_135 = arith.constant 0 : index
    %387 = vector.load %arg9[%c2_133, %c0_134, %c0_135] : memref<3x1x32xf32, #tpu.memory_space<vmem>>, vector<1x1x32xf32>
    %388 = vector.shape_cast %387 : vector<1x1x32xf32> to vector<1x32xf32>
    %389 = vector.broadcast %388 : vector<1x32xf32> to vector<16x32xf32>
    %390 = arith.addf %386, %389 : vector<16x32xf32>
    %391 = arith.addf %311, %390 : vector<16x32xf32>
    %c2_136 = arith.constant 2 : index
    %c0_137 = arith.constant 0 : index
    %c0_138 = arith.constant 0 : index
    %392 = vector.load %arg10[%c2_136, %c0_137, %c0_138] : memref<3x1x32xf32, #tpu.memory_space<vmem>>, vector<1x1x32xf32>
    %393 = vector.shape_cast %392 : vector<1x1x32xf32> to vector<1x32xf32>
    %c2_139 = arith.constant 2 : index
    %c0_140 = arith.constant 0 : index
    %c0_141 = arith.constant 0 : index
    %394 = vector.load %arg11[%c2_139, %c0_140, %c0_141] : memref<3x1x32xf32, #tpu.memory_space<vmem>>, vector<1x1x32xf32>
    %395 = vector.shape_cast %394 : vector<1x1x32xf32> to vector<1x32xf32>
    %cst_142 = arith.constant dense<0.000000e+00> : vector<16xf32>
    %396 = vector.multi_reduction <add>, %391, %cst_142 [1] : vector<16x32xf32> to vector<16xf32>
    %397 = vector.shape_cast %396 : vector<16xf32> to vector<16x1xf32>
    %cst_143 = arith.constant 3.200000e+01 : f32
    %398 = vector.broadcast %cst_143 : f32 to vector<16x1xf32>
    %399 = arith.divf %397, %398 : vector<16x1xf32>
    %400 = vector.broadcast %399 : vector<16x1xf32> to vector<16x32xf32>
    %401 = arith.subf %391, %400 : vector<16x32xf32>
    %402 = arith.mulf %401, %401 : vector<16x32xf32>
    %cst_144 = arith.constant dense<0.000000e+00> : vector<16xf32>
    %403 = vector.multi_reduction <add>, %402, %cst_144 [1] : vector<16x32xf32> to vector<16xf32>
    %404 = vector.shape_cast %403 : vector<16xf32> to vector<16x1xf32>
    %cst_145 = arith.constant 3.200000e+01 : f32
    %405 = vector.broadcast %cst_145 : f32 to vector<16x1xf32>
    %406 = arith.divf %404, %405 : vector<16x1xf32>
    %407 = vector.broadcast %399 : vector<16x1xf32> to vector<16x32xf32>
    %408 = arith.subf %391, %407 : vector<16x32xf32>
    %cst_146 = arith.constant 9.99999974E-6 : f32
    %409 = vector.broadcast %cst_146 : f32 to vector<16x1xf32>
    %410 = arith.addf %406, %409 : vector<16x1xf32>
    %411 = math.rsqrt %410 : vector<16x1xf32>
    %412 = vector.broadcast %411 : vector<16x1xf32> to vector<16x32xf32>
    %413 = arith.mulf %408, %412 : vector<16x32xf32>
    %414 = vector.broadcast %393 : vector<1x32xf32> to vector<16x32xf32>
    %415 = arith.mulf %413, %414 : vector<16x32xf32>
    %416 = vector.broadcast %395 : vector<1x32xf32> to vector<16x32xf32>
    %417 = arith.addf %415, %416 : vector<16x32xf32>
    %418 = arith.truncf %417 : vector<16x32xf32> to vector<16x32xbf16>
    %c2_147 = arith.constant 2 : index
    %c0_148 = arith.constant 0 : index
    %c0_149 = arith.constant 0 : index
    %419 = vector.load %arg12[%c2_147, %c0_148, %c0_149] : memref<3x32x128xbf16, #tpu.memory_space<vmem>>, vector<1x32x128xbf16>
    %420 = vector.shape_cast %419 : vector<1x32x128xbf16> to vector<32x128xbf16>
    %cst_150 = arith.constant dense<0.000000e+00> : vector<16x128xf32>
    %421 = tpu.matmul %418, %420, %cst_150 {dimension_numbers = #tpu.dot_dimension_numbers<[1], [0], [0], [1], [0, 0, 1, 1], [], []>} : vector<16x32xbf16>, vector<32x128xbf16>, vector<16x128xf32> -> vector<16x128xf32>
    %c2_151 = arith.constant 2 : index
    %c0_152 = arith.constant 0 : index
    %c0_153 = arith.constant 0 : index
    %422 = vector.load %arg13[%c2_151, %c0_152, %c0_153] : memref<3x1x128xf32, #tpu.memory_space<vmem>>, vector<1x1x128xf32>
    %423 = vector.shape_cast %422 : vector<1x1x128xf32> to vector<1x128xf32>
    %424 = vector.broadcast %423 : vector<1x128xf32> to vector<16x128xf32>
    %425 = arith.addf %421, %424 : vector<16x128xf32>
    %cst_154 = arith.constant 0.000000e+00 : f32
    %426 = vector.broadcast %cst_154 : f32 to vector<16x128xf32>
    %427 = arith.maximumf %425, %426 : vector<16x128xf32>
    %428 = arith.truncf %427 : vector<16x128xf32> to vector<16x128xbf16>
    %c2_155 = arith.constant 2 : index
    %c0_156 = arith.constant 0 : index
    %c0_157 = arith.constant 0 : index
    %429 = vector.load %arg14[%c2_155, %c0_156, %c0_157] : memref<3x128x32xbf16, #tpu.memory_space<vmem>>, vector<1x128x32xbf16>
    %430 = vector.shape_cast %429 : vector<1x128x32xbf16> to vector<128x32xbf16>
    %cst_158 = arith.constant dense<0.000000e+00> : vector<16x32xf32>
    %431 = tpu.matmul %428, %430, %cst_158 {dimension_numbers = #tpu.dot_dimension_numbers<[1], [0], [0], [1], [0, 0, 1, 1], [], []>} : vector<16x128xbf16>, vector<128x32xbf16>, vector<16x32xf32> -> vector<16x32xf32>
    %c2_159 = arith.constant 2 : index
    %c0_160 = arith.constant 0 : index
    %c0_161 = arith.constant 0 : index
    %432 = vector.load %arg15[%c2_159, %c0_160, %c0_161] : memref<3x1x32xf32, #tpu.memory_space<vmem>>, vector<1x1x32xf32>
    %433 = vector.shape_cast %432 : vector<1x1x32xf32> to vector<1x32xf32>
    %434 = vector.broadcast %433 : vector<1x32xf32> to vector<16x32xf32>
    %435 = arith.addf %431, %434 : vector<16x32xf32>
    %436 = arith.addf %417, %435 : vector<16x32xf32>
    %c2_162 = arith.constant 2 : index
    %c0_163 = arith.constant 0 : index
    %c0_164 = arith.constant 0 : index
    %437 = vector.load %arg16[%c2_162, %c0_163, %c0_164] : memref<3x1x32xf32, #tpu.memory_space<vmem>>, vector<1x1x32xf32>
    %438 = vector.shape_cast %437 : vector<1x1x32xf32> to vector<1x32xf32>
    %c2_165 = arith.constant 2 : index
    %c0_166 = arith.constant 0 : index
    %c0_167 = arith.constant 0 : index
    %439 = vector.load %arg17[%c2_165, %c0_166, %c0_167] : memref<3x1x32xf32, #tpu.memory_space<vmem>>, vector<1x1x32xf32>
    %440 = vector.shape_cast %439 : vector<1x1x32xf32> to vector<1x32xf32>
    %cst_168 = arith.constant dense<0.000000e+00> : vector<16xf32>
    %441 = vector.multi_reduction <add>, %436, %cst_168 [1] : vector<16x32xf32> to vector<16xf32>
    %442 = vector.shape_cast %441 : vector<16xf32> to vector<16x1xf32>
    %cst_169 = arith.constant 3.200000e+01 : f32
    %443 = vector.broadcast %cst_169 : f32 to vector<16x1xf32>
    %444 = arith.divf %442, %443 : vector<16x1xf32>
    %445 = vector.broadcast %444 : vector<16x1xf32> to vector<16x32xf32>
    %446 = arith.subf %436, %445 : vector<16x32xf32>
    %447 = arith.mulf %446, %446 : vector<16x32xf32>
    %cst_170 = arith.constant dense<0.000000e+00> : vector<16xf32>
    %448 = vector.multi_reduction <add>, %447, %cst_170 [1] : vector<16x32xf32> to vector<16xf32>
    %449 = vector.shape_cast %448 : vector<16xf32> to vector<16x1xf32>
    %cst_171 = arith.constant 3.200000e+01 : f32
    %450 = vector.broadcast %cst_171 : f32 to vector<16x1xf32>
    %451 = arith.divf %449, %450 : vector<16x1xf32>
    %452 = vector.broadcast %444 : vector<16x1xf32> to vector<16x32xf32>
    %453 = arith.subf %436, %452 : vector<16x32xf32>
    %cst_172 = arith.constant 9.99999974E-6 : f32
    %454 = vector.broadcast %cst_172 : f32 to vector<16x1xf32>
    %455 = arith.addf %451, %454 : vector<16x1xf32>
    %456 = math.rsqrt %455 : vector<16x1xf32>
    %457 = vector.broadcast %456 : vector<16x1xf32> to vector<16x32xf32>
    %458 = arith.mulf %453, %457 : vector<16x32xf32>
    %459 = vector.broadcast %438 : vector<1x32xf32> to vector<16x32xf32>
    %460 = arith.mulf %458, %459 : vector<16x32xf32>
    %461 = vector.broadcast %440 : vector<1x32xf32> to vector<16x32xf32>
    %462 = arith.addf %460, %461 : vector<16x32xf32>
    %c0_173 = arith.constant 0 : index
    %c0_174 = arith.constant 0 : index
    %463 = vector.load %arg18[%c0_173, %c0_174] : memref<16x32xf32, #tpu.memory_space<vmem>>, vector<16x32xf32>
    tpu.vector_store %arg18[%c0_173, %c0_174], %462 {strides = array<i32>} : memref<16x32xf32, #tpu.memory_space<vmem>>, vector<16x32xf32>,
    return
  }
  func.func @transform_0(%arg0: i32) -> (i32, i32) {
    %c0_i32 = arith.constant 0 : i32
    %c0_i32_0 = arith.constant 0 : i32
    return %arg0, %c0_i32 : i32, i32
  }
  func.func @transform_1(%arg0: i32) -> (i32, i32) {
    %c0_i32 = arith.constant 0 : i32
    %c0_i32_0 = arith.constant 0 : i32
    %c0_i32_1 = arith.constant 0 : i32
    return %c0_i32, %c0_i32_0 : i32, i32
  }
  func.func @transform_2(%arg0: i32) -> (i32, i32) {
    %c0_i32 = arith.constant 0 : i32
    %c0_i32_0 = arith.constant 0 : i32
    %c0_i32_1 = arith.constant 0 : i32
    return %c0_i32, %c0_i32_0 : i32, i32
  }
  func.func @transform_3(%arg0: i32) -> (i32, i32) {
    %c0_i32 = arith.constant 0 : i32
    %c0_i32_0 = arith.constant 0 : i32
    %c0_i32_1 = arith.constant 0 : i32
    return %c0_i32, %c0_i32_0 : i32, i32
  }
  func.func @transform_4(%arg0: i32) -> (i32, i32) {
    %c0_i32 = arith.constant 0 : i32
    %c0_i32_0 = arith.constant 0 : i32
    %c0_i32_1 = arith.constant 0 : i32
    return %c0_i32, %c0_i32_0 : i32, i32
  }
  func.func @transform_5(%arg0: i32) -> (i32, i32, i32) {
    %c0_i32 = arith.constant 0 : i32
    %c0_i32_0 = arith.constant 0 : i32
    %c0_i32_1 = arith.constant 0 : i32
    %c0_i32_2 = arith.constant 0 : i32
    return %c0_i32, %c0_i32_0, %c0_i32_1 : i32, i32, i32
  }
  func.func @transform_6(%arg0: i32) -> (i32, i32, i32) {
    %c0_i32 = arith.constant 0 : i32
    %c0_i32_0 = arith.constant 0 : i32
    %c0_i32_1 = arith.constant 0 : i32
    %c0_i32_2 = arith.constant 0 : i32
    return %c0_i32, %c0_i32_0, %c0_i32_1 : i32, i32, i32
  }
  func.func @transform_7(%arg0: i32) -> (i32, i32, i32) {
    %c0_i32 = arith.constant 0 : i32
    %c0_i32_0 = arith.constant 0 : i32
    %c0_i32_1 = arith.constant 0 : i32
    %c0_i32_2 = arith.constant 0 : i32
    return %c0_i32, %c0_i32_0, %c0_i32_1 : i32, i32, i32
  }
  func.func @transform_8(%arg0: i32) -> (i32, i32, i32) {
    %c0_i32 = arith.constant 0 : i32
    %c0_i32_0 = arith.constant 0 : i32
    %c0_i32_1 = arith.constant 0 : i32
    %c0_i32_2 = arith.constant 0 : i32
    return %c0_i32, %c0_i32_0, %c0_i32_1 : i32, i32, i32
  }
  func.func @transform_9(%arg0: i32) -> (i32, i32, i32) {
    %c0_i32 = arith.constant 0 : i32
    %c0_i32_0 = arith.constant 0 : i32
    %c0_i32_1 = arith.constant 0 : i32
    %c0_i32_2 = arith.constant 0 : i32
    return %c0_i32, %c0_i32_0, %c0_i32_1 : i32, i32, i32
  }
  func.func @transform_10(%arg0: i32) -> (i32, i32, i32) {
    %c0_i32 = arith.constant 0 : i32
    %c0_i32_0 = arith.constant 0 : i32
    %c0_i32_1 = arith.constant 0 : i32
    %c0_i32_2 = arith.constant 0 : i32
    return %c0_i32, %c0_i32_0, %c0_i32_1 : i32, i32, i32
  }
  func.func @transform_11(%arg0: i32) -> (i32, i32, i32) {
    %c0_i32 = arith.constant 0 : i32
    %c0_i32_0 = arith.constant 0 : i32
    %c0_i32_1 = arith.constant 0 : i32
    %c0_i32_2 = arith.constant 0 : i32
    return %c0_i32, %c0_i32_0, %c0_i32_1 : i32, i32, i32
  }
  func.func @transform_12(%arg0: i32) -> (i32, i32, i32) {
    %c0_i32 = arith.constant 0 : i32
    %c0_i32_0 = arith.constant 0 : i32
    %c0_i32_1 = arith.constant 0 : i32
    %c0_i32_2 = arith.constant 0 : i32
    return %c0_i32, %c0_i32_0, %c0_i32_1 : i32, i32, i32
  }
  func.func @transform_13(%arg0: i32) -> (i32, i32, i32) {
    %c0_i32 = arith.constant 0 : i32
    %c0_i32_0 = arith.constant 0 : i32
    %c0_i32_1 = arith.constant 0 : i32
    %c0_i32_2 = arith.constant 0 : i32
    return %c0_i32, %c0_i32_0, %c0_i32_1 : i32, i32, i32
  }
  func.func @transform_14(%arg0: i32) -> (i32, i32, i32) {
    %c0_i32 = arith.constant 0 : i32
    %c0_i32_0 = arith.constant 0 : i32
    %c0_i32_1 = arith.constant 0 : i32
    %c0_i32_2 = arith.constant 0 : i32
    return %c0_i32, %c0_i32_0, %c0_i32_1 : i32, i32, i32
  }
  func.func @transform_15(%arg0: i32) -> (i32, i32, i32) {
    %c0_i32 = arith.constant 0 : i32
    %c0_i32_0 = arith.constant 0 : i32
    %c0_i32_1 = arith.constant 0 : i32
    %c0_i32_2 = arith.constant 0 : i32
    return %c0_i32, %c0_i32_0, %c0_i32_1 : i32, i32, i32
  }
  func.func @transform_16(%arg0: i32) -> (i32, i32, i32) {
    %c0_i32 = arith.constant 0 : i32
    %c0_i32_0 = arith.constant 0 : i32
    %c0_i32_1 = arith.constant 0 : i32
    %c0_i32_2 = arith.constant 0 : i32
    return %c0_i32, %c0_i32_0, %c0_i32_1 : i32, i32, i32
  }
  func.func @transform_17(%arg0: i32) -> (i32, i32) {
    %c0_i32 = arith.constant 0 : i32
    %c0_i32_0 = arith.constant 0 : i32
    return %arg0, %c0_i32 : i32, i32
  }
}

</mosaic_0001>

<llo_original>
// kernel: tpu_custom_call.1
$region0: #{tpu_custom_call.1}
  #allocation0 [shape = 'u32[]', space=smem, size = 0x4, offset = 0x4, fixed_abs, tag = 'smem constant byte address 0x4 - core index']
  #allocation1 [shape = 'u32[144,128]{1,0:T(1,128)}', space=vmem, size = 0x12000, scoped, tag = 'internal scratch']
  %s0 = inlined_call_operand.vmem [shape: f32[16,4], index: 0, kind: input, shape index: {}]
  %s1 = inlined_call_operand.vmem [shape: f32[4,32], index: 1, kind: input, shape index: {}]
  %s2 = inlined_call_operand.vmem [shape: f32[1,32], index: 2, kind: input, shape index: {}]
  %s3 = inlined_call_operand.vmem [shape: bf16[4,32], index: 3, kind: input, shape index: {}]
  %s4 = inlined_call_operand.vmem [shape: f32[32,32], index: 4, kind: input, shape index: {}]
  %s5 = inlined_call_operand.vmem [shape: bf16[3,32,96], index: 5, kind: input, shape index: {}]
  %s6 = inlined_call_operand.vmem [shape: f32[3,1,96], index: 6, kind: input, shape index: {}]
  %s7 = inlined_call_operand.vmem [shape: bf16[3,32,32], index: 7, kind: input, shape index: {}]
  %s8 = inlined_call_operand.vmem [shape: f32[3,1,32], index: 8, kind: input, shape index: {}]
  %s9 = inlined_call_operand.vmem [shape: f32[3,1,32], index: 9, kind: input, shape index: {}]
  %s10 = inlined_call_operand.vmem [shape: f32[3,1,32], index: 10, kind: input, shape index: {}]
  %s11 = inlined_call_operand.vmem [shape: bf16[3,32,128], index: 11, kind: input, shape index: {}]
  %s12 = inlined_call_operand.vmem [shape: f32[3,1,128], index: 12, kind: input, shape index: {}]
  %s13 = inlined_call_operand.vmem [shape: bf16[3,128,32], index: 13, kind: input, shape index: {}]
  %s14 = inlined_call_operand.vmem [shape: f32[3,1,32], index: 14, kind: input, shape index: {}]
  %s15 = inlined_call_operand.vmem [shape: f32[3,1,32], index: 15, kind: input, shape index: {}]
  %s16 = inlined_call_operand.vmem [shape: f32[3,1,32], index: 16, kind: input, shape index: {}]
  %s17 = inlined_call_operand.hbm [shape: f32[16,32], index: 17, kind: output, shape index: {}]
  %s18 = sld [smem:[#allocation0]]
  $region78: #{tpu_custom_call.1} parent=0
    _
  %s20 = ssub.s32 1, %s18
  %s21 = scalar_select 0, %s20, %s18
  $region1: #{tpu_custom_call.1} parent=0
    #allocation2 [shape = 'u8[8192]{0}', space=vmem, size = 0x2000, scoped, tag = 'output window, operand 0, single buffered']
    #allocation3 [shape = 's32[1]{0}', space=sflag, size = 0x4, scoped, tag = 'scoped memory for tpu_custom_call.1']
    %22 = vsyncpa [#allocation3], 0
    // Predicated region
    $region2: #{tpu_custom_call.1} parent=1 // pred_check
      _
    $region3: #{tpu_custom_call.1} parent=1 // pred_check_branch
      %24 = sbr.rel (0) target = $region5
    $region4: #{tpu_custom_call.1} parent=1 // pred_region
      _
    $region5: #{tpu_custom_call.1} parent=1 // pred_fallthru
      _
    // Predicated region
    $region6: #{tpu_custom_call.1} parent=1 // pred_check
      _
    $region7: #{tpu_custom_call.1} parent=1 // pred_check_branch
      %26 = sbr.rel (0) target = $region9
    $region8: #{tpu_custom_call.1} parent=1 // pred_region
      _
    $region9: #{tpu_custom_call.1} parent=1 // pred_fallthru
      _
    // Predicated region
    $region10: #{tpu_custom_call.1} parent=1 // pred_check
      _
    $region11: #{tpu_custom_call.1} parent=1 // pred_check_branch
      %28 = sbr.rel (0) target = $region13
    $region12: #{tpu_custom_call.1} parent=1 // pred_region
      _
    $region13: #{tpu_custom_call.1} parent=1 // pred_fallthru
      _
    // Predicated region
    $region14: #{tpu_custom_call.1} parent=1 // pred_check
      _
    $region15: #{tpu_custom_call.1} parent=1 // pred_check_branch
      %30 = sbr.rel (0) target = $region17
    $region16: #{tpu_custom_call.1} parent=1 // pred_region
      _
    $region17: #{tpu_custom_call.1} parent=1 // pred_fallthru
      _
    // Predicated region
    $region18: #{tpu_custom_call.1} parent=1 // pred_check
      _
    $region19: #{tpu_custom_call.1} parent=1 // pred_check_branch
      %32 = sbr.rel (0) target = $region21
    $region20: #{tpu_custom_call.1} parent=1 // pred_region
      _
    $region21: #{tpu_custom_call.1} parent=1 // pred_fallthru
      _
    // Predicated region
    $region22: #{tpu_custom_call.1} parent=1 // pred_check
      _
    $region23: #{tpu_custom_call.1} parent=1 // pred_check_branch
      %34 = sbr.rel (0) target = $region25
    $region24: #{tpu_custom_call.1} parent=1 // pred_region
      _
    $region25: #{tpu_custom_call.1} parent=1 // pred_fallthru
      _
    // Predicated region
    $region26: #{tpu_custom_call.1} parent=1 // pred_check
      _
    $region27: #{tpu_custom_call.1} parent=1 // pred_check_branch
      %36 = sbr.rel (0) target = $region29
    $region28: #{tpu_custom_call.1} parent=1 // pred_region
      _
    $region29: #{tpu_custom_call.1} parent=1 // pred_fallthru
      _
    // Predicated region
    $region30: #{tpu_custom_call.1} parent=1 // pred_check
      _
    $region31: #{tpu_custom_call.1} parent=1 // pred_check_branch
      %38 = sbr.rel (0) target = $region33
    $region32: #{tpu_custom_call.1} parent=1 // pred_region
      _
    $region33: #{tpu_custom_call.1} parent=1 // pred_fallthru
      _
    // Predicated region
    $region34: #{tpu_custom_call.1} parent=1 // pred_check
      _
    $region35: #{tpu_custom_call.1} parent=1 // pred_check_branch
      %40 = sbr.rel (0) target = $region37
    $region36: #{tpu_custom_call.1} parent=1 // pred_region
      _
    $region37: #{tpu_custom_call.1} parent=1 // pred_fallthru
      _
    // Predicated region
    $region38: #{tpu_custom_call.1} parent=1 // pred_check
      _
    $region39: #{tpu_custom_call.1} parent=1 // pred_check_branch
      %42 = sbr.rel (0) target = $region41
    $region40: #{tpu_custom_call.1} parent=1 // pred_region
      _
    $region41: #{tpu_custom_call.1} parent=1 // pred_fallthru
      _
    // Predicated region
    $region42: #{tpu_custom_call.1} parent=1 // pred_check
      _
    $region43: #{tpu_custom_call.1} parent=1 // pred_check_branch
      %44 = sbr.rel (0) target = $region45
    $region44: #{tpu_custom_call.1} parent=1 // pred_region
      _
    $region45: #{tpu_custom_call.1} parent=1 // pred_fallthru
      _
    // Predicated region
    $region46: #{tpu_custom_call.1} parent=1 // pred_check
      _
    $region47: #{tpu_custom_call.1} parent=1 // pred_check_branch
      %46 = sbr.rel (0) target = $region49
    $region48: #{tpu_custom_call.1} parent=1 // pred_region
      _
    $region49: #{tpu_custom_call.1} parent=1 // pred_fallthru
      _
    // Predicated region
    $region50: #{tpu_custom_call.1} parent=1 // pred_check
      _
    $region51: #{tpu_custom_call.1} parent=1 // pred_check_branch
      %48 = sbr.rel (0) target = $region53
    $region52: #{tpu_custom_call.1} parent=1 // pred_region
      _
    $region53: #{tpu_custom_call.1} parent=1 // pred_fallthru
      _
    // Predicated region
    $region54: #{tpu_custom_call.1} parent=1 // pred_check
      _
    $region55: #{tpu_custom_call.1} parent=1 // pred_check_branch
      %50 = sbr.rel (0) target = $region57
    $region56: #{tpu_custom_call.1} parent=1 // pred_region
      _
    $region57: #{tpu_custom_call.1} parent=1 // pred_fallthru
      _
    // Predicated region
    $region58: #{tpu_custom_call.1} parent=1 // pred_check
      _
    $region59: #{tpu_custom_call.1} parent=1 // pred_check_branch
      %52 = sbr.rel (0) target = $region61
    $region60: #{tpu_custom_call.1} parent=1 // pred_region
      _
    $region61: #{tpu_custom_call.1} parent=1 // pred_fallthru
      _
    // Predicated region
    $region62: #{tpu_custom_call.1} parent=1 // pred_check
      _
    $region63: #{tpu_custom_call.1} parent=1 // pred_check_branch
      %54 = sbr.rel (0) target = $region65
    $region64: #{tpu_custom_call.1} parent=1 // pred_region
      _
    $region65: #{tpu_custom_call.1} parent=1 // pred_fallthru
      _
    // Predicated region
    $region66: #{tpu_custom_call.1} parent=1 // pred_check
      _
    $region67: #{tpu_custom_call.1} parent=1 // pred_check_branch
      %56 = sbr.rel (0) target = $region69
    $region68: #{tpu_custom_call.1} parent=1 // pred_region
      _
    $region69: #{tpu_custom_call.1} parent=1 // pred_fallthru
      _
    %v58 = vld [vmem:[%s0] sm:$0xff]
    %v59 = vld [vmem:[%s0 + $0x8] sm:$0xff]
    %v60 = vld [vmem:[%s1] sm:$0xf]
    %v61 = vld [vmem:[%s2] sm:$0x1]
    %v63 = vlaneseq
    %v64 = vshrl.u32 %v63, 7
    %v65 = vsub.s32 0, %v64
    %v66 = vrot.slane %v61, %v65
    %vm68 = vcmask 31744
    %v70 = vsel %vm68, %v58, 0
    %v73 = vsel %vm68, %v59, 0
    %vm75 = vcmask 1043456
    %v77 = vsel %vm75, %v60, 0
    %79 = vmatprep.subr.mxu0 0.0
    %80 = vmatpush1.msra.mxu0 0.0
    %81 = vmatprep.subr.mxu0 0.0
    %82 = vmatpush1.msra.mxu0 0.0
    %83 = vmatprep.subr.mxu0 0.0
    %84 = vmatpush1.msra.mxu0 0.0
    %85 = vmatprep.subr.mxu0 0.0
    %86 = vmatpush1.msra.mxu0 0.0
    %87 = vmatprep.subr.mxu0 0.0
    %88 = vmatpush1.msra.mxu0 0.0
    %89 = vmatprep.subr.mxu0 0.0
    %90 = vmatpush1.msra.mxu0 0.0
    %91 = vmatprep.subr.mxu0 0.0
    %92 = vmatpush1.msra.mxu0 0.0
    %93 = vmatprep.subr.mxu0 0.0
    %94 = vmatpush1.msra.mxu0 0.0
    %95 = vmatprep.subr.mxu0 0.0
    %96 = vmatpush1.msra.mxu0 0.0
    %97 = vmatprep.subr.mxu0 0.0
    %98 = vmatpush1.msra.mxu0 0.0
    %99 = vmatprep.subr.mxu0 0.0
    %100 = vmatpush1.msra.mxu0 0.0
    %101 = vmatprep.subr.mxu0 0.0
    %102 = vmatpush1.msra.mxu0 0.0
    %103 = vmatprep.subr.mxu0 0.0
    %104 = vmatpush1.msra.mxu0 0.0
    %105 = vmatprep.subr.mxu0 0.0
    %106 = vmatpush1.msra.mxu0 0.0
    %107 = vmatprep.subr.mxu0 0.0
    %108 = vmatpush1.msra.mxu0 0.0
    %109 = vmatprep.subr.mxu0 0.0
    %110 = vmatpush1.msra.mxu0 %v77
    %111 = vmatprep.subr.mxu0 0.0
    %112 = vmatpush2.msra.mxu0 0.0
    %113 = vmatprep.subr.mxu0 0.0
    %114 = vmatpush2.msra.mxu0 0.0
    %115 = vmatprep.subr.mxu0 0.0
    %116 = vmatpush2.msra.mxu0 0.0
    %117 = vmatprep.subr.mxu0 0.0
    %118 = vmatpush2.msra.mxu0 0.0
    %119 = vmatprep.subr.mxu0 0.0
    %120 = vmatpush2.msra.mxu0 0.0
    %121 = vmatprep.subr.mxu0 0.0
    %122 = vmatpush2.msra.mxu0 0.0
    %123 = vmatprep.subr.mxu0 0.0
    %124 = vmatpush2.msra.mxu0 0.0
    %125 = vmatprep.subr.mxu0 0.0
    %126 = vmatpush2.msra.mxu0 0.0
    %127 = vmatprep.subr.mxu0 0.0
    %128 = vmatpush2.msra.mxu0 0.0
    %129 = vmatprep.subr.mxu0 0.0
    %130 = vmatpush2.msra.mxu0 0.0
    %131 = vmatprep.subr.mxu0 0.0
    %132 = vmatpush2.msra.mxu0 0.0
    %133 = vmatprep.subr.mxu0 0.0
    %134 = vmatpush2.msra.mxu0 0.0
    %135 = vmatprep.subr.mxu0 0.0
    %136 = vmatpush2.msra.mxu0 0.0
    %137 = vmatprep.subr.mxu0 0.0
    %138 = vmatpush2.msra.mxu0 0.0
    %139 = vmatprep.subr.mxu0 0.0
    %140 = vmatpush2.msra.mxu0 0.0
    %141 = vmatprep.subr.mxu0 0.0
    %142 = vmatpush2.msra.mxu0 0.0
    %143 = vmatprep.mubr.f32.mxu0 0.0
    %144 = vmatmul.mubr.f32.gmra.mxu0 %v70
    %v145 = vpop.f32.mrf.mxu0
    %v146 = vadd.f32 %v66, %v145
    %v147 = vpop.f32.mrf.mxu0
    %148 = vmatprep.mubr.f32.mxu0 0.0
    %149 = vmatmul.mubr.f32.gmra.mxu0 %v73
    %v150 = vpop.f32.mrf.mxu0
    %v151 = vadd.f32 %v66, %v150
    %v152 = vpop.f32.mrf.mxu0
    %153 = vdwg.mxu0
    %v154 = vmax.f32 %v146, 0.0
    %v155 = vmax.f32 %v151, 0.0
    %v156 = vld [vmem:[%s3] sm:$0x3]
    %v157 = vld [vmem:[%s4] sm:$0xff]
    %v158 = vld [vmem:[%s4 + $0x8] sm:$0xff]
    %v159 = vld [vmem:[%s4 + $0x10] sm:$0xff]
    %v160 = vld [vmem:[%s4 + $0x18] sm:$0xff]
    %v161 = vpack.c.bf16 %v155, %v154
    %v162 = vld [vmem:[%s5] sm:$0xf]
    %v163 = vld [vmem:[%s5 + $0x4] sm:$0xf]
    %v164 = vld [vmem:[%s5 + $0x8] sm:$0xf]
    %v165 = vld [vmem:[%s5 + $0xc] sm:$0xf]
    %v166 = vld [vmem:[%s6] sm:$0x1]
    %v168 = vlaneseq
    %v169 = vshrl.u32 %v168, 7
    %v170 = vsub.s32 0, %v169
    %v171 = vrot.slane %v166, %v170
    %v177 = vunpack.c.l.b16 %v162
    %v178 = vunpack.c.l.b16 %v163
    %v179 = vunpack.c.l.b16 %v164
    %v180 = vunpack.c.l.b16 %v165
    %v181 = vpack.c.b16 %v178, %v177
    %v182 = vpack.c.b16 %v180, %v179
    %vm185 = vcmask 261120
    %v187 = vsel %vm185, %v161, 0
    %189 = vmatprep.subr.bf16.mxu0 0
    %190 = vmatpush1.bf16.msra.mxu0 0
    %191 = vmatprep.subr.bf16.mxu0 0
    %192 = vmatpush1.bf16.msra.mxu0 0
    %193 = vmatprep.subr.bf16.mxu0 0
    %194 = vmatpush1.bf16.msra.mxu0 0
    %195 = vmatprep.subr.bf16.mxu0 0
    %196 = vmatpush1.bf16.msra.mxu0 0
    %197 = vmatprep.subr.bf16.mxu0 0
    %198 = vmatpush1.bf16.msra.mxu0 0
    %199 = vmatprep.subr.bf16.mxu0 0
    %200 = vmatpush1.bf16.msra.mxu0 0
    %201 = vmatprep.subr.bf16.mxu0 0
    %202 = vmatpush1.bf16.msra.mxu0 %v182
    %203 = vmatprep.subr.bf16.mxu0 0
    %204 = vmatpush1.bf16.msra.mxu0 %v181
    %205 = vmatprep.subr.bf16.mxu0 0
    %206 = vmatpush2.bf16.msra.mxu0 0
    %207 = vmatprep.subr.bf16.mxu0 0
    %208 = vmatpush2.bf16.msra.mxu0 0
    %209 = vmatprep.subr.bf16.mxu0 0
    %210 = vmatpush2.bf16.msra.mxu0 0
    %211 = vmatprep.subr.bf16.mxu0 0
    %212 = vmatpush2.bf16.msra.mxu0 0
    %213 = vmatprep.subr.bf16.mxu0 0
    %214 = vmatpush2.bf16.msra.mxu0 0
    %215 = vmatprep.subr.bf16.mxu0 0
    %216 = vmatpush2.bf16.msra.mxu0 0
    %217 = vmatprep.subr.bf16.mxu0 0
    %218 = vmatpush2.bf16.msra.mxu0 0
    %219 = vmatprep.subr.bf16.mxu0 0
    %220 = vmatpush2.bf16.msra.mxu0 0
    %221 = vmatprep.mubr.bf16.mxu0 0
    %222 = vmatmul.mubr.bf16.gmra.mxu0 %v187
    %v223 = vpop.f32.mrf.mxu0
    %v224 = vadd.f32 %v171, %v223
    %v225 = vpop.f32.mrf.mxu0
    %v226 = vpop.f32.mrf.mxu0
    %v227 = vadd.f32 %v171, %v226
    %v228 = vpop.f32.mrf.mxu0
    %229 = vdwg.mxu0
    %v230 = vpack.c.bf16 %v227, %v224
    %v232 = vunpack.c.l.b16 %v230
    %v233 = vunpack.c.h.b16 %v230
    %v234 = vpack.c.b16 %v232, %v232
    %v235 = vpack.c.b16 %v233, %v233
    %v239 = vpack.i.b16 %v156, %v156
    %v241 = vlaneseq
    %v242 = vshrl.u32 %v241, 7
    %v243 = vsub.s32 0, %v242
    %v244 = vrot.slane %v239, %v243
    %v246 = vunpack.c.l.b16 %v244
    %v247 = vpack.c.b16 %v246, %v246
    %248 = vrot.lane.b32.xlu0 %v247, 32
    %v249 = vpop.permute.xlu0 %248
    %v251 = vmul.bf16 %v234, %v249
    %v252 = vmul.bf16 %v235, %v249
    %v253 = vshrl.u32 %v156, 16
    %v254 = vpack.i.b16 %v253, %v253
    %v256 = vlaneseq
    %v257 = vshrl.u32 %v256, 7
    %v258 = vsub.s32 0, %v257
    %v259 = vrot.slane %v254, %v258
    %v261 = vunpack.c.l.b16 %v259
    %v262 = vpack.c.b16 %v261, %v261
    %263 = vrot.lane.b32.xlu0 %v262, 32
    %v264 = vpop.permute.xlu0 %263
    %v266 = vmul.bf16 %v234, %v264
    %v267 = vmul.bf16 %v235, %v264
    %v268 = vlaneseq
    %v269 = vshrl.u32 %v268, 7
    %v270 = vsub.s32 1, %v269
    %v271 = vrot.slane %v239, %v270
    %v273 = vunpack.c.l.b16 %v271
    %v274 = vpack.c.b16 %v273, %v273
    %275 = vrot.lane.b32.xlu0 %v274, 32
    %v276 = vpop.permute.xlu0 %275
    %v278 = vmul.bf16 %v234, %v276
    %v279 = vmul.bf16 %v235, %v276
    %v280 = vlaneseq
    %v281 = vshrl.u32 %v280, 7
    %v282 = vsub.s32 1, %v281
    %v283 = vrot.slane %v254, %v282
    %v285 = vunpack.c.l.b16 %v283
    %v286 = vpack.c.b16 %v285, %v285
    %287 = vrot.lane.b32.xlu0 %v286, 32
    %v288 = vpop.permute.xlu0 %287
    %v290 = vmul.bf16 %v234, %v288
    %v291 = vmul.bf16 %v235, %v288
    %v294 = vunpack.c.l.b16 %v266
    %v295 = vunpack.c.l.b16 %v267
    %v296 = vpack.c.b16 %v294, %v294
    %v297 = vpack.c.b16 %v295, %v295
    %v300 = vunpack.c.l.b16 %v290
    %v301 = vunpack.c.l.b16 %v291
    %v302 = vpack.c.b16 %v300, %v300
    %v303 = vpack.c.b16 %v301, %v301
    %v306 = vsel %vm75, %v251, %v296
    %v309 = vsel %vm75, %v252, %v297
    %v312 = vsel %vm75, %v278, %v302
    %v315 = vsel %vm75, %v279, %v303
    %316 = vrot.lane.b32.xlu0 %v247, 64
    %v317 = vpop.permute.xlu0 %316
    %v319 = vmul.bf16 %v234, %v317
    %v320 = vmul.bf16 %v235, %v317
    %321 = vrot.lane.b32.xlu0 %v262, 64
    %v322 = vpop.permute.xlu0 %321
    %v324 = vmul.bf16 %v234, %v322
    %v325 = vmul.bf16 %v235, %v322
    %326 = vrot.lane.b32.xlu0 %v274, 64
    %v327 = vpop.permute.xlu0 %326
    %v329 = vmul.bf16 %v234, %v327
    %v330 = vmul.bf16 %v235, %v327
    %331 = vrot.lane.b32.xlu0 %v286, 64
    %v332 = vpop.permute.xlu0 %331
    %v334 = vmul.bf16 %v234, %v332
    %v335 = vmul.bf16 %v235, %v332
    %v338 = vunpack.c.l.b16 %v324
    %v339 = vunpack.c.l.b16 %v325
    %v340 = vpack.c.b16 %v338, %v338
    %v341 = vpack.c.b16 %v339, %v339
    %v344 = vunpack.c.l.b16 %v334
    %v345 = vunpack.c.l.b16 %v335
    %v346 = vpack.c.b16 %v344, %v344
    %v347 = vpack.c.b16 %v345, %v345
    %v350 = vsel %vm75, %v319, %v340
    %v353 = vsel %vm75, %v320, %v341
    %v356 = vsel %vm75, %v329, %v346
    %v359 = vsel %vm75, %v330, %v347
    %362 = vrot.lane.b32.xlu0 %v306, 96
    %v363 = vpop.permute.xlu0 %362
    %364 = vrot.lane.b32.xlu0 %v312, 96
    %v365 = vpop.permute.xlu0 %364
    %v367 = vsel %vm185, %v234, 0
    %v370 = vsel %vm185, %v363, 0
    %v373 = vsel %vm185, %v365, 0
    %375 = vmatprep.subr.bf16.mxu0 0
    %376 = vmatpush1.bf16.xpose.msra.mxu0 0
    %377 = vmatprep.subr.bf16.mxu0 0
    %378 = vmatpush1.bf16.xpose.msra.mxu0 0
    %379 = vmatprep.subr.bf16.mxu0 0
    %380 = vmatpush1.bf16.xpose.msra.mxu0 0
    %381 = vmatprep.subr.bf16.mxu0 0
    %382 = vmatpush1.bf16.xpose.msra.mxu0 0
    %383 = vmatprep.subr.bf16.mxu0 0
    %384 = vmatpush1.bf16.xpose.msra.mxu0 0
    %385 = vmatprep.subr.bf16.mxu0 0
    %386 = vmatpush1.bf16.xpose.msra.mxu0 0
    %387 = vmatprep.subr.bf16.mxu0 0
    %388 = vmatpush1.bf16.xpose.msra.mxu0 %v373
    %389 = vmatprep.subr.bf16.mxu0 0
    %390 = vmatpush1.bf16.xpose.msra.mxu0 %v370
    %391 = vmatprep.subr.bf16.mxu0 0
    %392 = vmatpush2.bf16.xpose.msra.mxu0 0
    %393 = vmatprep.subr.bf16.mxu0 0
    %394 = vmatpush2.bf16.xpose.msra.mxu0 0
    %395 = vmatprep.subr.bf16.mxu0 0
    %396 = vmatpush2.bf16.xpose.msra.mxu0 0
    %397 = vmatprep.subr.bf16.mxu0 0
    %398 = vmatpush2.bf16.xpose.msra.mxu0 0
    %399 = vmatprep.subr.bf16.mxu0 0
    %400 = vmatpush2.bf16.xpose.msra.mxu0 0
    %401 = vmatprep.subr.bf16.mxu0 0
    %402 = vmatpush2.bf16.xpose.msra.mxu0 0
    %403 = vmatprep.subr.bf16.mxu0 0
    %404 = vmatpush2.bf16.xpose.msra.mxu0 0
    %405 = vmatprep.subr.bf16.mxu0 0
    %406 = vmatpush2.bf16.xpose.msra.mxu0 0
    %407 = vmatprep.mubr.bf16.mxu0 0
    %408 = vmatmul.mubr.bf16.gmra.mxu0 %v367
    %v409 = vpop.f32.mrf.mxu0
    %v410 = vadd.f32 0.0, %v409
    %v411 = vpop.f32.mrf.mxu0
    %v412 = vpop.f32.mrf.mxu0
    %v413 = vpop.f32.mrf.mxu0
    %414 = vdwg.mxu0
    %417 = vrot.lane.b32.xlu0 %v309, 96
    %v418 = vpop.permute.xlu0 %417
    %419 = vrot.lane.b32.xlu0 %v315, 96
    %v420 = vpop.permute.xlu0 %419
    %v422 = vsel %vm185, %v235, 0
    %v425 = vsel %vm185, %v418, 0
    %v428 = vsel %vm185, %v420, 0
    %430 = vmatprep.subr.bf16.mxu0 0
    %431 = vmatpush1.bf16.xpose.msra.mxu0 0
    %432 = vmatprep.subr.bf16.mxu0 0
    %433 = vmatpush1.bf16.xpose.msra.mxu0 0
    %434 = vmatprep.subr.bf16.mxu0 0
    %435 = vmatpush1.bf16.xpose.msra.mxu0 0
    %436 = vmatprep.subr.bf16.mxu0 0
    %437 = vmatpush1.bf16.xpose.msra.mxu0 0
    %438 = vmatprep.subr.bf16.mxu0 0
    %439 = vmatpush1.bf16.xpose.msra.mxu0 0
    %440 = vmatprep.subr.bf16.mxu0 0
    %441 = vmatpush1.bf16.xpose.msra.mxu0 0
    %442 = vmatprep.subr.bf16.mxu0 0
    %443 = vmatpush1.bf16.xpose.msra.mxu0 %v428
    %444 = vmatprep.subr.bf16.mxu0 0
    %445 = vmatpush1.bf16.xpose.msra.mxu0 %v425
    %446 = vmatprep.subr.bf16.mxu0 0
    %447 = vmatpush2.bf16.xpose.msra.mxu0 0
    %448 = vmatprep.subr.bf16.mxu0 0
    %449 = vmatpush2.bf16.xpose.msra.mxu0 0
    %450 = vmatprep.subr.bf16.mxu0 0
    %451 = vmatpush2.bf16.xpose.msra.mxu0 0
    %452 = vmatprep.subr.bf16.mxu0 0
    %453 = vmatpush2.bf16.xpose.msra.mxu0 0
    %454 = vmatprep.subr.bf16.mxu0 0
    %455 = vmatpush2.bf16.xpose.msra.mxu0 0
    %456 = vmatprep.subr.bf16.mxu0 0
    %457 = vmatpush2.bf16.xpose.msra.mxu0 0
    %458 = vmatprep.subr.bf16.mxu0 0
    %459 = vmatpush2.bf16.xpose.msra.mxu0 0
    %460 = vmatprep.subr.bf16.mxu0 0
    %461 = vmatpush2.bf16.xpose.msra.mxu0 0
    %462 = vmatprep.mubr.bf16.mxu0 0
    %463 = vmatmul.mubr.bf16.gmra.mxu0 %v422
    %v464 = vpop.f32.mrf.mxu0
    %v465 = vadd.f32 0.0, %v464
    %v466 = vpop.f32.mrf.mxu0
    %v467 = vpop.f32.mrf.mxu0
    %v468 = vpop.f32.mrf.mxu0
    %469 = vdwg.mxu0
    %v470 = vsel %vm185, %v410, -inf
    %471 = vmax.xlane.f32.xlu0 %v470
    %v472 = vpop.xlane.xlu0 %471
    %v473 = vsel %vm185, %v465, -inf
    %474 = vmax.xlane.f32.xlu0 %v473
    %v475 = vpop.xlane.xlu0 %474
    %v476 = vsub.f32 %v410, %v472
    %v477 = vsub.f32 %v465, %v475
    %v478 = vmul.f32 %v476, 1.442695
    %v479 = vpow.pop %v478
    %v480 = vmul.f32 %v477, 1.442695
    %v481 = vpow.pop %v480
    %v483 = vsel %vm185, %v479, 0
    %v486 = vsel %vm185, %v481, 0
    %488 = vmatprep.subr.mxu0 0.0
    %489 = vmatpush1.msra.mxu0 0.0
    %490 = vmatprep.subr.mxu0 0.0
    %491 = vmatpush1.msra.mxu0 0.0
    %492 = vmatprep.subr.mxu0 0.0
    %493 = vmatpush1.msra.mxu0 0.0
    %494 = vmatprep.subr.mxu0 0.0
    %495 = vmatpush1.msra.mxu0 0.0
    %496 = vmatprep.subr.mxu0 0.0
    %497 = vmatpush1.msra.mxu0 0.0
    %498 = vmatprep.subr.mxu0 0.0
    %499 = vmatpush1.msra.mxu0 0.0
    %500 = vmatprep.subr.mxu0 0.0
    %501 = vmatpush1.msra.mxu0 0.0
    %502 = vmatprep.subr.mxu0 0.0
    %503 = vmatpush1.msra.mxu0 0.0
    %504 = vmatprep.subr.mxu0 0.0
    %505 = vmatpush1.msra.mxu0 0.0
    %506 = vmatprep.subr.mxu0 0.0
    %507 = vmatpush1.msra.mxu0 0.0
    %508 = vmatprep.subr.mxu0 0.0
    %509 = vmatpush1.msra.mxu0 0.0
    %510 = vmatprep.subr.mxu0 0.0
    %511 = vmatpush1.msra.mxu0 0.0
    %512 = vmatprep.subr.mxu0 0.0
    %513 = vmatpush1.msra.mxu0 %v160
    %514 = vmatprep.subr.mxu0 0.0
    %515 = vmatpush1.msra.mxu0 %v159
    %516 = vmatprep.subr.mxu0 0.0
    %517 = vmatpush1.msra.mxu0 %v158
    %518 = vmatprep.subr.mxu0 0.0
    %519 = vmatpush1.msra.mxu0 %v157
    %520 = vmatprep.subr.mxu0 0.0
    %521 = vmatpush2.msra.mxu0 0.0
    %522 = vmatprep.subr.mxu0 0.0
    %523 = vmatpush2.msra.mxu0 0.0
    %524 = vmatprep.subr.mxu0 0.0
    %525 = vmatpush2.msra.mxu0 0.0
    %526 = vmatprep.subr.mxu0 0.0
    %527 = vmatpush2.msra.mxu0 0.0
    %528 = vmatprep.subr.mxu0 0.0
    %529 = vmatpush2.msra.mxu0 0.0
    %530 = vmatprep.subr.mxu0 0.0
    %531 = vmatpush2.msra.mxu0 0.0
    %532 = vmatprep.subr.mxu0 0.0
    %533 = vmatpush2.msra.mxu0 0.0
    %534 = vmatprep.subr.mxu0 0.0
    %535 = vmatpush2.msra.mxu0 0.0
    %536 = vmatprep.subr.mxu0 0.0
    %537 = vmatpush2.msra.mxu0 0.0
    %538 = vmatprep.subr.mxu0 0.0
    %539 = vmatpush2.msra.mxu0 0.0
    %540 = vmatprep.subr.mxu0 0.0
    %541 = vmatpush2.msra.mxu0 0.0
    %542 = vmatprep.subr.mxu0 0.0
    %543 = vmatpush2.msra.mxu0 0.0
    %544 = vmatprep.subr.mxu0 0.0
    %545 = vmatpush2.msra.mxu0 0.0
    %546 = vmatprep.subr.mxu0 0.0
    %547 = vmatpush2.msra.mxu0 0.0
    %548 = vmatprep.subr.mxu0 0.0
    %549 = vmatpush2.msra.mxu0 0.0
    %550 = vmatprep.subr.mxu0 0.0
    %551 = vmatpush2.msra.mxu0 0.0
    %552 = vmatprep.mubr.f32.mxu0 0.0
    %553 = vmatmul.mubr.f32.gmra.mxu0 %v483
    %v554 = vpop.f32.mrf.mxu0
    %v555 = vadd.f32 0.0, %v554
    %v556 = vpop.f32.mrf.mxu0
    %557 = vmatprep.mubr.f32.mxu0 0.0
    %558 = vmatmul.mubr.f32.gmra.mxu0 %v486
    %v559 = vpop.f32.mrf.mxu0
    %v560 = vadd.f32 0.0, %v559
    %v561 = vpop.f32.mrf.mxu0
    %562 = vdwg.mxu0
    %v563 = vrcp.pop %v555
    %v564 = vrcp.pop %v560
    %v565 = vmul.f32 %v479, %v563
    %v566 = vmul.f32 %v481, %v564
    %v567 = vpack.c.bf16 %v565, %v565
    %v568 = vpack.c.bf16 %v566, %v566
    %571 = vrot.lane.b32.xlu0 %v350, 64
    %v572 = vpop.permute.xlu0 %571
    %573 = vrot.lane.b32.xlu0 %v356, 64
    %v574 = vpop.permute.xlu0 %573
    %v578 = vsel %vm185, %v567, 0
    %580 = vmatprep.subr.bf16.mxu0 0
    %581 = vmatpush1.bf16.msra.mxu0 0
    %582 = vmatprep.subr.bf16.mxu0 0
    %583 = vmatpush1.bf16.msra.mxu0 0
    %584 = vmatprep.subr.bf16.mxu0 0
    %585 = vmatpush1.bf16.msra.mxu0 0
    %586 = vmatprep.subr.bf16.mxu0 0
    %587 = vmatpush1.bf16.msra.mxu0 0
    %588 = vmatprep.subr.bf16.mxu0 0
    %589 = vmatpush1.bf16.msra.mxu0 0
    %590 = vmatprep.subr.bf16.mxu0 0
    %591 = vmatpush1.bf16.msra.mxu0 0
    %592 = vmatprep.subr.bf16.mxu0 0
    %593 = vmatpush1.bf16.msra.mxu0 %v574
    %594 = vmatprep.subr.bf16.mxu0 0
    %595 = vmatpush1.bf16.msra.mxu0 %v572
    %596 = vmatprep.subr.bf16.mxu0 0
    %597 = vmatpush2.bf16.msra.mxu0 0
    %598 = vmatprep.subr.bf16.mxu0 0
    %599 = vmatpush2.bf16.msra.mxu0 0
    %600 = vmatprep.subr.bf16.mxu0 0
    %601 = vmatpush2.bf16.msra.mxu0 0
    %602 = vmatprep.subr.bf16.mxu0 0
    %603 = vmatpush2.bf16.msra.mxu0 0
    %604 = vmatprep.subr.bf16.mxu0 0
    %605 = vmatpush2.bf16.msra.mxu0 0
    %606 = vmatprep.subr.bf16.mxu0 0
    %607 = vmatpush2.bf16.msra.mxu0 0
    %608 = vmatprep.subr.bf16.mxu0 0
    %609 = vmatpush2.bf16.msra.mxu0 0
    %610 = vmatprep.subr.bf16.mxu0 0
    %611 = vmatpush2.bf16.msra.mxu0 0
    %612 = vmatprep.mubr.bf16.mxu0 0
    %613 = vmatmul.mubr.bf16.gmra.mxu0 %v578
    %v614 = vpop.f32.mrf.mxu0
    %v615 = vadd.f32 0.0, %v614
    %v616 = vpop.f32.mrf.mxu0
    %v617 = vpop.f32.mrf.mxu0
    %v618 = vpop.f32.mrf.mxu0
    %619 = vdwg.mxu0
    %622 = vrot.lane.b32.xlu0 %v353, 64
    %v623 = vpop.permute.xlu0 %622
    %624 = vrot.lane.b32.xlu0 %v359, 64
    %v625 = vpop.permute.xlu0 %624
    %v629 = vsel %vm185, %v568, 0
    %631 = vmatprep.subr.bf16.mxu0 0
    %632 = vmatpush1.bf16.msra.mxu0 0
    %633 = vmatprep.subr.bf16.mxu0 0
    %634 = vmatpush1.bf16.msra.mxu0 0
    %635 = vmatprep.subr.bf16.mxu0 0
    %636 = vmatpush1.bf16.msra.mxu0 0
    %637 = vmatprep.subr.bf16.mxu0 0
    %638 = vmatpush1.bf16.msra.mxu0 0
    %639 = vmatprep.subr.bf16.mxu0 0
    %640 = vmatpush1.bf16.msra.mxu0 0
    %641 = vmatprep.subr.bf16.mxu0 0
    %642 = vmatpush1.bf16.msra.mxu0 0
    %643 = vmatprep.subr.bf16.mxu0 0
    %644 = vmatpush1.bf16.msra.mxu0 %v625
    %645 = vmatprep.subr.bf16.mxu0 0
    %646 = vmatpush1.bf16.msra.mxu0 %v623
    %647 = vmatprep.subr.bf16.mxu0 0
    %648 = vmatpush2.bf16.msra.mxu0 0
    %649 = vmatprep.subr.bf16.mxu0 0
    %650 = vmatpush2.bf16.msra.mxu0 0
    %651 = vmatprep.subr.bf16.mxu0 0
    %652 = vmatpush2.bf16.msra.mxu0 0
    %653 = vmatprep.subr.bf16.mxu0 0
    %654 = vmatpush2.bf16.msra.mxu0 0
    %655 = vmatprep.subr.bf16.mxu0 0
    %656 = vmatpush2.bf16.msra.mxu0 0
    %657 = vmatprep.subr.bf16.mxu0 0
    %658 = vmatpush2.bf16.msra.mxu0 0
    %659 = vmatprep.subr.bf16.mxu0 0
    %660 = vmatpush2.bf16.msra.mxu0 0
    %661 = vmatprep.subr.bf16.mxu0 0
    %662 = vmatpush2.bf16.msra.mxu0 0
    %663 = vmatprep.mubr.bf16.mxu0 0
    %664 = vmatmul.mubr.bf16.gmra.mxu0 %v629
    %v665 = vpop.f32.mrf.mxu0
    %v666 = vadd.f32 0.0, %v665
    %v667 = vpop.f32.mrf.mxu0
    %v668 = vpop.f32.mrf.mxu0
    %v669 = vpop.f32.mrf.mxu0
    %670 = vdwg.mxu0
    %v671 = vpack.c.bf16 %v666, %v615
    %v672 = vld [vmem:[%s7] sm:$0xf]
    %v673 = vld [vmem:[%s7 + $0x4] sm:$0xf]
    %v674 = vld [vmem:[%s7 + $0x8] sm:$0xf]
    %v675 = vld [vmem:[%s7 + $0xc] sm:$0xf]
    %v676 = vld [vmem:[%s8] sm:$0x1]
    %v678 = vlaneseq
    %v679 = vshrl.u32 %v678, 7
    %v680 = vsub.s32 0, %v679
    %v681 = vrot.slane %v676, %v680
    %v687 = vunpack.c.l.b16 %v672
    %v688 = vunpack.c.l.b16 %v673
    %v689 = vunpack.c.l.b16 %v674
    %v690 = vunpack.c.l.b16 %v675
    %v691 = vpack.c.b16 %v688, %v687
    %v692 = vpack.c.b16 %v690, %v689
    %v696 = vsel %vm185, %v671, 0
    %698 = vmatprep.subr.bf16.mxu0 0
    %699 = vmatpush1.bf16.msra.mxu0 0
    %700 = vmatprep.subr.bf16.mxu0 0
    %701 = vmatpush1.bf16.msra.mxu0 0
    %702 = vmatprep.subr.bf16.mxu0 0
    %703 = vmatpush1.bf16.msra.mxu0 0
    %704 = vmatprep.subr.bf16.mxu0 0
    %705 = vmatpush1.bf16.msra.mxu0 0
    %706 = vmatprep.subr.bf16.mxu0 0
    %707 = vmatpush1.bf16.msra.mxu0 0
    %708 = vmatprep.subr.bf16.mxu0 0
    %709 = vmatpush1.bf16.msra.mxu0 0
    %710 = vmatprep.subr.bf16.mxu0 0
    %711 = vmatpush1.bf16.msra.mxu0 %v692
    %712 = vmatprep.subr.bf16.mxu0 0
    %713 = vmatpush1.bf16.msra.mxu0 %v691
    %714 = vmatprep.subr.bf16.mxu0 0
    %715 = vmatpush2.bf16.msra.mxu0 0
    %716 = vmatprep.subr.bf16.mxu0 0
    %717 = vmatpush2.bf16.msra.mxu0 0
    %718 = vmatprep.subr.bf16.mxu0 0
    %719 = vmatpush2.bf16.msra.mxu0 0
    %720 = vmatprep.subr.bf16.mxu0 0
    %721 = vmatpush2.bf16.msra.mxu0 0
    %722 = vmatprep.subr.bf16.mxu0 0
    %723 = vmatpush2.bf16.msra.mxu0 0
    %724 = vmatprep.subr.bf16.mxu0 0
    %725 = vmatpush2.bf16.msra.mxu0 0
    %726 = vmatprep.subr.bf16.mxu0 0
    %727 = vmatpush2.bf16.msra.mxu0 0
    %728 = vmatprep.subr.bf16.mxu0 0
    %729 = vmatpush2.bf16.msra.mxu0 0
    %730 = vmatprep.mubr.bf16.mxu0 0
    %731 = vmatmul.mubr.bf16.gmra.mxu0 %v696
    %v732 = vpop.f32.mrf.mxu0
    %v733 = vadd.f32 %v681, %v732
    %v734 = vpop.f32.mrf.mxu0
    %v735 = vpop.f32.mrf.mxu0
    %v736 = vadd.f32 %v681, %v735
    %v737 = vpop.f32.mrf.mxu0
    %738 = vdwg.mxu0
    %v739 = vadd.f32 %v154, %v733
    %v740 = vadd.f32 %v155, %v736
    %v741 = vld [vmem:[%s9] sm:$0x1]
    %v742 = vld [vmem:[%s10] sm:$0x1]
    %v743 = vsel %vm185, %v739, 0.0
    %744 = vadd.xlane.f32.xlu0 %v743
    %v745 = vpop.xlane.xlu0 %744
    %v746 = vsel %vm185, %v740, 0.0
    %747 = vadd.xlane.f32.xlu0 %v746
    %v748 = vpop.xlane.xlu0 %747
    %v749 = vrcp.pop 32.0
    %v750 = vmul.f32 %v745, %v749
    %v751 = vmul.f32 %v748, %v749
    %v752 = vsub.f32 %v739, %v750
    %v753 = vsub.f32 %v740, %v751
    %v754 = vmul.f32 %v752, %v752
    %v755 = vmul.f32 %v753, %v753
    %v756 = vsel %vm185, %v754, 0.0
    %757 = vadd.xlane.f32.xlu0 %v756
    %v758 = vpop.xlane.xlu0 %757
    %v759 = vsel %vm185, %v755, 0.0
    %760 = vadd.xlane.f32.xlu0 %v759
    %v761 = vpop.xlane.xlu0 %760
    %v762 = vmul.f32 %v758, %v749
    %v763 = vmul.f32 %v761, %v749
    %v764 = vadd.f32 %v762, 1e-05
    %v765 = vadd.f32 %v763, 1e-05
    %v766 = vrsqrt.pop %v764
    %v767 = vrsqrt.pop %v765
    %v768 = vmul.f32 %v752, %v766
    %v769 = vmul.f32 %v753, %v767
    %v771 = vlaneseq
    %v772 = vshrl.u32 %v771, 7
    %v773 = vsub.s32 0, %v772
    %v774 = vrot.slane %v741, %v773
    %v776 = vmul.f32 %v768, %v774
    %v777 = vmul.f32 %v769, %v774
    %v779 = vlaneseq
    %v780 = vshrl.u32 %v779, 7
    %v781 = vsub.s32 0, %v780
    %v782 = vrot.slane %v742, %v781
    %v784 = vadd.f32 %v776, %v782
    %v785 = vadd.f32 %v777, %v782
    %v786 = vpack.c.bf16 %v785, %v784
    %v787 = vld [vmem:[%s11] sm:$0xf]
    %v788 = vld [vmem:[%s11 + $0x4] sm:$0xf]
    %v789 = vld [vmem:[%s11 + $0x8] sm:$0xf]
    %v790 = vld [vmem:[%s11 + $0xc] sm:$0xf]
    %v791 = vld [vmem:[%s12] sm:$0x1]
    %v793 = vlaneseq
    %v794 = vshrl.u32 %v793, 7
    %v795 = vsub.s32 0, %v794
    %v796 = vrot.slane %v791, %v795
    %v802 = vunpack.c.l.b16 %v787
    %v803 = vunpack.c.l.b16 %v788
    %v804 = vunpack.c.l.b16 %v789
    %v805 = vunpack.c.l.b16 %v790
    %v806 = vpack.c.b16 %v803, %v802
    %v807 = vpack.c.b16 %v805, %v804
    %v811 = vsel %vm185, %v786, 0
    %813 = vmatprep.subr.bf16.mxu0 0
    %814 = vmatpush1.bf16.msra.mxu0 0
    %815 = vmatprep.subr.bf16.mxu0 0
    %816 = vmatpush1.bf16.msra.mxu0 0
    %817 = vmatprep.subr.bf16.mxu0 0
    %818 = vmatpush1.bf16.msra.mxu0 0
    %819 = vmatprep.subr.bf16.mxu0 0
    %820 = vmatpush1.bf16.msra.mxu0 0
    %821 = vmatprep.subr.bf16.mxu0 0
    %822 = vmatpush1.bf16.msra.mxu0 0
    %823 = vmatprep.subr.bf16.mxu0 0
    %824 = vmatpush1.bf16.msra.mxu0 0
    %825 = vmatprep.subr.bf16.mxu0 0
    %826 = vmatpush1.bf16.msra.mxu0 %v807
    %827 = vmatprep.subr.bf16.mxu0 0
    %828 = vmatpush1.bf16.msra.mxu0 %v806
    %829 = vmatprep.subr.bf16.mxu0 0
    %830 = vmatpush2.bf16.msra.mxu0 0
    %831 = vmatprep.subr.bf16.mxu0 0
    %832 = vmatpush2.bf16.msra.mxu0 0
    %833 = vmatprep.subr.bf16.mxu0 0
    %834 = vmatpush2.bf16.msra.mxu0 0
    %835 = vmatprep.subr.bf16.mxu0 0
    %836 = vmatpush2.bf16.msra.mxu0 0
    %837 = vmatprep.subr.bf16.mxu0 0
    %838 = vmatpush2.bf16.msra.mxu0 0
    %839 = vmatprep.subr.bf16.mxu0 0
    %840 = vmatpush2.bf16.msra.mxu0 0
    %841 = vmatprep.subr.bf16.mxu0 0
    %842 = vmatpush2.bf16.msra.mxu0 0
    %843 = vmatprep.subr.bf16.mxu0 0
    %844 = vmatpush2.bf16.msra.mxu0 0
    %845 = vmatprep.mubr.bf16.mxu0 0
    %846 = vmatmul.mubr.bf16.gmra.mxu0 %v811
    %v847 = vpop.f32.mrf.mxu0
    %v848 = vadd.f32 %v796, %v847
    %v849 = vpop.f32.mrf.mxu0
    %v850 = vpop.f32.mrf.mxu0
    %v851 = vadd.f32 %v796, %v850
    %v852 = vpop.f32.mrf.mxu0
    %853 = vdwg.mxu0
    %v854 = vmax.f32 %v848, 0.0
    %v855 = vmax.f32 %v851, 0.0
    %v856 = vpack.c.bf16 %v855, %v854
    %v857 = vld [vmem:[%s13] sm:$0xf]
    %v858 = vld [vmem:[%s13 + $0x4] sm:$0xf]
    %v859 = vld [vmem:[%s13 + $0x8] sm:$0xf]
    %v860 = vld [vmem:[%s13 + $0xc] sm:$0xf]
    %v861 = vld [vmem:[%s13 + $0x10] sm:$0xf]
    %v862 = vld [vmem:[%s13 + $0x14] sm:$0xf]
    %v863 = vld [vmem:[%s13 + $0x18] sm:$0xf]
    %v864 = vld [vmem:[%s13 + $0x1c] sm:$0xf]
    %v865 = vld [vmem:[%s13 + $0x20] sm:$0xf]
    %v866 = vld [vmem:[%s13 + $0x24] sm:$0xf]
    %v867 = vld [vmem:[%s13 + $0x28] sm:$0xf]
    %v868 = vld [vmem:[%s13 + $0x2c] sm:$0xf]
    %v869 = vld [vmem:[%s13 + $0x30] sm:$0xf]
    %v870 = vld [vmem:[%s13 + $0x34] sm:$0xf]
    %v871 = vld [vmem:[%s13 + $0x38] sm:$0xf]
    %v872 = vld [vmem:[%s13 + $0x3c] sm:$0xf]
    %v873 = vld [vmem:[%s14] sm:$0x1]
    %v875 = vlaneseq
    %v876 = vshrl.u32 %v875, 7
    %v877 = vsub.s32 0, %v876
    %v878 = vrot.slane %v873, %v877
    %v896 = vunpack.c.l.b16 %v857
    %v897 = vunpack.c.l.b16 %v858
    %v898 = vunpack.c.l.b16 %v859
    %v899 = vunpack.c.l.b16 %v860
    %v900 = vunpack.c.l.b16 %v861
    %v901 = vunpack.c.l.b16 %v862
    %v902 = vunpack.c.l.b16 %v863
    %v903 = vunpack.c.l.b16 %v864
    %v904 = vunpack.c.l.b16 %v865
    %v905 = vunpack.c.l.b16 %v866
    %v906 = vunpack.c.l.b16 %v867
    %v907 = vunpack.c.l.b16 %v868
    %v908 = vunpack.c.l.b16 %v869
    %v909 = vunpack.c.l.b16 %v870
    %v910 = vunpack.c.l.b16 %v871
    %v911 = vunpack.c.l.b16 %v872
    %v912 = vpack.c.b16 %v897, %v896
    %v913 = vpack.c.b16 %v899, %v898
    %v914 = vpack.c.b16 %v901, %v900
    %v915 = vpack.c.b16 %v903, %v902
    %v916 = vpack.c.b16 %v905, %v904
    %v917 = vpack.c.b16 %v907, %v906
    %v918 = vpack.c.b16 %v909, %v908
    %v919 = vpack.c.b16 %v911, %v910
    %928 = vmatprep.subr.bf16.mxu0 0
    %929 = vmatpush1.bf16.msra.mxu0 %v919
    %930 = vmatprep.subr.bf16.mxu0 0
    %931 = vmatpush1.bf16.msra.mxu0 %v918
    %932 = vmatprep.subr.bf16.mxu0 0
    %933 = vmatpush1.bf16.msra.mxu0 %v917
    %934 = vmatprep.subr.bf16.mxu0 0
    %935 = vmatpush1.bf16.msra.mxu0 %v916
    %936 = vmatprep.subr.bf16.mxu0 0
    %937 = vmatpush1.bf16.msra.mxu0 %v915
    %938 = vmatprep.subr.bf16.mxu0 0
    %939 = vmatpush1.bf16.msra.mxu0 %v914
    %940 = vmatprep.subr.bf16.mxu0 0
    %941 = vmatpush1.bf16.msra.mxu0 %v913
    %942 = vmatprep.subr.bf16.mxu0 0
    %943 = vmatpush1.bf16.msra.mxu0 %v912
    %944 = vmatprep.subr.bf16.mxu0 0
    %945 = vmatpush2.bf16.msra.mxu0 0
    %946 = vmatprep.subr.bf16.mxu0 0
    %947 = vmatpush2.bf16.msra.mxu0 0
    %948 = vmatprep.subr.bf16.mxu0 0
    %949 = vmatpush2.bf16.msra.mxu0 0
    %950 = vmatprep.subr.bf16.mxu0 0
    %951 = vmatpush2.bf16.msra.mxu0 0
    %952 = vmatprep.subr.bf16.mxu0 0
    %953 = vmatpush2.bf16.msra.mxu0 0
    %954 = vmatprep.subr.bf16.mxu0 0
    %955 = vmatpush2.bf16.msra.mxu0 0
    %956 = vmatprep.subr.bf16.mxu0 0
    %957 = vmatpush2.bf16.msra.mxu0 0
    %958 = vmatprep.subr.bf16.mxu0 0
    %959 = vmatpush2.bf16.msra.mxu0 0
    %960 = vmatprep.mubr.bf16.mxu0 0
    %961 = vmatmul.mubr.bf16.gmra.mxu0 %v856
    %v962 = vpop.f32.mrf.mxu0
    %v963 = vadd.f32 %v878, %v962
    %v964 = vpop.f32.mrf.mxu0
    %v965 = vpop.f32.mrf.mxu0
    %v966 = vadd.f32 %v878, %v965
    %v967 = vpop.f32.mrf.mxu0
    %968 = vdwg.mxu0
    %v969 = vadd.f32 %v784, %v963
    %v970 = vadd.f32 %v785, %v966
    %v971 = vld [vmem:[%s15] sm:$0x1]
    %v972 = vld [vmem:[%s16] sm:$0x1]
    %v973 = vsel %vm185, %v969, 0.0
    %974 = vadd.xlane.f32.xlu0 %v973
    %v975 = vpop.xlane.xlu0 %974
    %v976 = vsel %vm185, %v970, 0.0
    %977 = vadd.xlane.f32.xlu0 %v976
    %v978 = vpop.xlane.xlu0 %977
    %v979 = vmul.f32 %v975, %v749
    %v980 = vmul.f32 %v978, %v749
    %v981 = vsub.f32 %v969, %v979
    %v982 = vsub.f32 %v970, %v980
    %v983 = vmul.f32 %v981, %v981
    %v984 = vmul.f32 %v982, %v982
    %v985 = vsel %vm185, %v983, 0.0
    %986 = vadd.xlane.f32.xlu0 %v985
    %v987 = vpop.xlane.xlu0 %986
    %v988 = vsel %vm185, %v984, 0.0
    %989 = vadd.xlane.f32.xlu0 %v988
    %v990 = vpop.xlane.xlu0 %989
    %v991 = vmul.f32 %v987, %v749
    %v992 = vmul.f32 %v990, %v749
    %v993 = vadd.f32 %v991, 1e-05
    %v994 = vadd.f32 %v992, 1e-05
    %v995 = vrsqrt.pop %v993
    %v996 = vrsqrt.pop %v994
    %v997 = vmul.f32 %v981, %v995
    %v998 = vmul.f32 %v982, %v996
    %v1000 = vlaneseq
    %v1001 = vshrl.u32 %v1000, 7
    %v1002 = vsub.s32 0, %v1001
    %v1003 = vrot.slane %v971, %v1002
    %v1005 = vmul.f32 %v997, %v1003
    %v1006 = vmul.f32 %v998, %v1003
    %v1008 = vlaneseq
    %v1009 = vshrl.u32 %v1008, 7
    %v1010 = vsub.s32 0, %v1009
    %v1011 = vrot.slane %v972, %v1010
    %v1013 = vadd.f32 %v1005, %v1011
    %v1014 = vadd.f32 %v1006, %v1011
    %v1015 = vpack.c.bf16 %v1014, %v1013
    %s1016 = scalar_lea.vmem %s5, 16
    %v1017 = vld [vmem:[%s1016] sm:$0xf]
    %v1018 = vld [vmem:[%s1016 + $0x4] sm:$0xf]
    %v1019 = vld [vmem:[%s1016 + $0x8] sm:$0xf]
    %v1020 = vld [vmem:[%s1016 + $0xc] sm:$0xf]
    %s1021 = scalar_lea.vmem %s6, 1
    %v1022 = vld [vmem:[%s1021] sm:$0x1]
    %v1024 = vlaneseq
    %v1025 = vshrl.u32 %v1024, 7
    %v1026 = vsub.s32 0, %v1025
    %v1027 = vrot.slane %v1022, %v1026
    %v1033 = vunpack.c.l.b16 %v1017
    %v1034 = vunpack.c.l.b16 %v1018
    %v1035 = vunpack.c.l.b16 %v1019
    %v1036 = vunpack.c.l.b16 %v1020
    %v1037 = vpack.c.b16 %v1034, %v1033
    %v1038 = vpack.c.b16 %v1036, %v1035
    %v1042 = vsel %vm185, %v1015, 0
    %1044 = vmatprep.subr.bf16.mxu0 0
    %1045 = vmatpush1.bf16.msra.mxu0 0
    %1046 = vmatprep.subr.bf16.mxu0 0
    %1047 = vmatpush1.bf16.msra.mxu0 0
    %1048 = vmatprep.subr.bf16.mxu0 0
    %1049 = vmatpush1.bf16.msra.mxu0 0
    %1050 = vmatprep.subr.bf16.mxu0 0
    %1051 = vmatpush1.bf16.msra.mxu0 0
    %1052 = vmatprep.subr.bf16.mxu0 0
    %1053 = vmatpush1.bf16.msra.mxu0 0
    %1054 = vmatprep.subr.bf16.mxu0 0
    %1055 = vmatpush1.bf16.msra.mxu0 0
    %1056 = vmatprep.subr.bf16.mxu0 0
    %1057 = vmatpush1.bf16.msra.mxu0 %v1038
    %1058 = vmatprep.subr.bf16.mxu0 0
    %1059 = vmatpush1.bf16.msra.mxu0 %v1037
    %1060 = vmatprep.subr.bf16.mxu0 0
    %1061 = vmatpush2.bf16.msra.mxu0 0
    %1062 = vmatprep.subr.bf16.mxu0 0
    %1063 = vmatpush2.bf16.msra.mxu0 0
    %1064 = vmatprep.subr.bf16.mxu0 0
    %1065 = vmatpush2.bf16.msra.mxu0 0
    %1066 = vmatprep.subr.bf16.mxu0 0
    %1067 = vmatpush2.bf16.msra.mxu0 0
    %1068 = vmatprep.subr.bf16.mxu0 0
    %1069 = vmatpush2.bf16.msra.mxu0 0
    %1070 = vmatprep.subr.bf16.mxu0 0
    %1071 = vmatpush2.bf16.msra.mxu0 0
    %1072 = vmatprep.subr.bf16.mxu0 0
    %1073 = vmatpush2.bf16.msra.mxu0 0
    %1074 = vmatprep.subr.bf16.mxu0 0
    %1075 = vmatpush2.bf16.msra.mxu0 0
    %1076 = vmatprep.mubr.bf16.mxu0 0
    %1077 = vmatmul.mubr.bf16.gmra.mxu0 %v1042
    %v1078 = vpop.f32.mrf.mxu0
    %v1079 = vadd.f32 %v1027, %v1078
    %v1080 = vpop.f32.mrf.mxu0
    %v1081 = vpop.f32.mrf.mxu0
    %v1082 = vadd.f32 %v1027, %v1081
    %v1083 = vpop.f32.mrf.mxu0
    %1084 = vdwg.mxu0
    %v1085 = vpack.c.bf16 %v1082, %v1079
    %v1087 = vunpack.c.l.b16 %v1085
    %v1088 = vunpack.c.h.b16 %v1085
    %v1089 = vpack.c.b16 %v1087, %v1087
    %v1090 = vpack.c.b16 %v1088, %v1088
    %v1093 = vmul.bf16 %v1089, %v249
    %v1094 = vmul.bf16 %v1090, %v249
    %v1095 = vmul.bf16 %v1089, %v264
    %v1096 = vmul.bf16 %v1090, %v264
    %v1097 = vmul.bf16 %v1089, %v276
    %v1098 = vmul.bf16 %v1090, %v276
    %v1099 = vmul.bf16 %v1089, %v288
    %v1100 = vmul.bf16 %v1090, %v288
    %v1103 = vunpack.c.l.b16 %v1095
    %v1104 = vunpack.c.l.b16 %v1096
    %v1105 = vpack.c.b16 %v1103, %v1103
    %v1106 = vpack.c.b16 %v1104, %v1104
    %v1109 = vunpack.c.l.b16 %v1099
    %v1110 = vunpack.c.l.b16 %v1100
    %v1111 = vpack.c.b16 %v1109, %v1109
    %v1112 = vpack.c.b16 %v1110, %v1110
    %v1115 = vsel %vm75, %v1093, %v1105
    %v1118 = vsel %vm75, %v1094, %v1106
    %v1121 = vsel %vm75, %v1097, %v1111
    %v1124 = vsel %vm75, %v1098, %v1112
    %v1125 = vmul.bf16 %v1089, %v317
    %v1126 = vmul.bf16 %v1090, %v317
    %v1127 = vmul.bf16 %v1089, %v322
    %v1128 = vmul.bf16 %v1090, %v322
    %v1129 = vmul.bf16 %v1089, %v327
    %v1130 = vmul.bf16 %v1090, %v327
    %v1131 = vmul.bf16 %v1089, %v332
    %v1132 = vmul.bf16 %v1090, %v332
    %v1135 = vunpack.c.l.b16 %v1127
    %v1136 = vunpack.c.l.b16 %v1128
    %v1137 = vpack.c.b16 %v1135, %v1135
    %v1138 = vpack.c.b16 %v1136, %v1136
    %v1141 = vunpack.c.l.b16 %v1131
    %v1142 = vunpack.c.l.b16 %v1132
    %v1143 = vpack.c.b16 %v1141, %v1141
    %v1144 = vpack.c.b16 %v1142, %v1142
    %v1147 = vsel %vm75, %v1125, %v1137
    %v1150 = vsel %vm75, %v1126, %v1138
    %v1153 = vsel %vm75, %v1129, %v1143
    %v1156 = vsel %vm75, %v1130, %v1144
    %1159 = vrot.lane.b32.xlu0 %v1115, 96
    %v1160 = vpop.permute.xlu0 %1159
    %1161 = vrot.lane.b32.xlu0 %v1121, 96
    %v1162 = vpop.permute.xlu0 %1161
    %v1164 = vsel %vm185, %v1089, 0
    %v1167 = vsel %vm185, %v1160, 0
    %v1170 = vsel %vm185, %v1162, 0
    %1172 = vmatprep.subr.bf16.mxu0 0
    %1173 = vmatpush1.bf16.xpose.msra.mxu0 0
    %1174 = vmatprep.subr.bf16.mxu0 0
    %1175 = vmatpush1.bf16.xpose.msra.mxu0 0
    %1176 = vmatprep.subr.bf16.mxu0 0
    %1177 = vmatpush1.bf16.xpose.msra.mxu0 0
    %1178 = vmatprep.subr.bf16.mxu0 0
    %1179 = vmatpush1.bf16.xpose.msra.mxu0 0
    %1180 = vmatprep.subr.bf16.mxu0 0
    %1181 = vmatpush1.bf16.xpose.msra.mxu0 0
    %1182 = vmatprep.subr.bf16.mxu0 0
    %1183 = vmatpush1.bf16.xpose.msra.mxu0 0
    %1184 = vmatprep.subr.bf16.mxu0 0
    %1185 = vmatpush1.bf16.xpose.msra.mxu0 %v1170
    %1186 = vmatprep.subr.bf16.mxu0 0
    %1187 = vmatpush1.bf16.xpose.msra.mxu0 %v1167
    %1188 = vmatprep.subr.bf16.mxu0 0
    %1189 = vmatpush2.bf16.xpose.msra.mxu0 0
    %1190 = vmatprep.subr.bf16.mxu0 0
    %1191 = vmatpush2.bf16.xpose.msra.mxu0 0
    %1192 = vmatprep.subr.bf16.mxu0 0
    %1193 = vmatpush2.bf16.xpose.msra.mxu0 0
    %1194 = vmatprep.subr.bf16.mxu0 0
    %1195 = vmatpush2.bf16.xpose.msra.mxu0 0
    %1196 = vmatprep.subr.bf16.mxu0 0
    %1197 = vmatpush2.bf16.xpose.msra.mxu0 0
    %1198 = vmatprep.subr.bf16.mxu0 0
    %1199 = vmatpush2.bf16.xpose.msra.mxu0 0
    %1200 = vmatprep.subr.bf16.mxu0 0
    %1201 = vmatpush2.bf16.xpose.msra.mxu0 0
    %1202 = vmatprep.subr.bf16.mxu0 0
    %1203 = vmatpush2.bf16.xpose.msra.mxu0 0
    %1204 = vmatprep.mubr.bf16.mxu0 0
    %1205 = vmatmul.mubr.bf16.gmra.mxu0 %v1164
    %v1206 = vpop.f32.mrf.mxu0
    %v1207 = vadd.f32 0.0, %v1206
    %v1208 = vpop.f32.mrf.mxu0
    %v1209 = vpop.f32.mrf.mxu0
    %v1210 = vpop.f32.mrf.mxu0
    %1211 = vdwg.mxu0
    %1214 = vrot.lane.b32.xlu0 %v1118, 96
    %v1215 = vpop.permute.xlu0 %1214
    %1216 = vrot.lane.b32.xlu0 %v1124, 96
    %v1217 = vpop.permute.xlu0 %1216
    %v1219 = vsel %vm185, %v1090, 0
    %v1222 = vsel %vm185, %v1215, 0
    %v1225 = vsel %vm185, %v1217, 0
    %1227 = vmatprep.subr.bf16.mxu0 0
    %1228 = vmatpush1.bf16.xpose.msra.mxu0 0
    %1229 = vmatprep.subr.bf16.mxu0 0
    %1230 = vmatpush1.bf16.xpose.msra.mxu0 0
    %1231 = vmatprep.subr.bf16.mxu0 0
    %1232 = vmatpush1.bf16.xpose.msra.mxu0 0
    %1233 = vmatprep.subr.bf16.mxu0 0
    %1234 = vmatpush1.bf16.xpose.msra.mxu0 0
    %1235 = vmatprep.subr.bf16.mxu0 0
    %1236 = vmatpush1.bf16.xpose.msra.mxu0 0
    %1237 = vmatprep.subr.bf16.mxu0 0
    %1238 = vmatpush1.bf16.xpose.msra.mxu0 0
    %1239 = vmatprep.subr.bf16.mxu0 0
    %1240 = vmatpush1.bf16.xpose.msra.mxu0 %v1225
    %1241 = vmatprep.subr.bf16.mxu0 0
    %1242 = vmatpush1.bf16.xpose.msra.mxu0 %v1222
    %1243 = vmatprep.subr.bf16.mxu0 0
    %1244 = vmatpush2.bf16.xpose.msra.mxu0 0
    %1245 = vmatprep.subr.bf16.mxu0 0
    %1246 = vmatpush2.bf16.xpose.msra.mxu0 0
    %1247 = vmatprep.subr.bf16.mxu0 0
    %1248 = vmatpush2.bf16.xpose.msra.mxu0 0
    %1249 = vmatprep.subr.bf16.mxu0 0
    %1250 = vmatpush2.bf16.xpose.msra.mxu0 0
    %1251 = vmatprep.subr.bf16.mxu0 0
    %1252 = vmatpush2.bf16.xpose.msra.mxu0 0
    %1253 = vmatprep.subr.bf16.mxu0 0
    %1254 = vmatpush2.bf16.xpose.msra.mxu0 0
    %1255 = vmatprep.subr.bf16.mxu0 0
    %1256 = vmatpush2.bf16.xpose.msra.mxu0 0
    %1257 = vmatprep.subr.bf16.mxu0 0
    %1258 = vmatpush2.bf16.xpose.msra.mxu0 0
    %1259 = vmatprep.mubr.bf16.mxu0 0
    %1260 = vmatmul.mubr.bf16.gmra.mxu0 %v1219
    %v1261 = vpop.f32.mrf.mxu0
    %v1262 = vadd.f32 0.0, %v1261
    %v1263 = vpop.f32.mrf.mxu0
    %v1264 = vpop.f32.mrf.mxu0
    %v1265 = vpop.f32.mrf.mxu0
    %1266 = vdwg.mxu0
    %v1267 = vsel %vm185, %v1207, -inf
    %1268 = vmax.xlane.f32.xlu0 %v1267
    %v1269 = vpop.xlane.xlu0 %1268
    %v1270 = vsel %vm185, %v1262, -inf
    %1271 = vmax.xlane.f32.xlu0 %v1270
    %v1272 = vpop.xlane.xlu0 %1271
    %v1273 = vsub.f32 %v1207, %v1269
    %v1274 = vsub.f32 %v1262, %v1272
    %v1275 = vmul.f32 %v1273, 1.442695
    %v1276 = vpow.pop %v1275
    %v1277 = vmul.f32 %v1274, 1.442695
    %v1278 = vpow.pop %v1277
    %v1280 = vsel %vm185, %v1276, 0
    %v1283 = vsel %vm185, %v1278, 0
    %1285 = vmatprep.subr.mxu0 0.0
    %1286 = vmatpush1.msra.mxu0 0.0
    %1287 = vmatprep.subr.mxu0 0.0
    %1288 = vmatpush1.msra.mxu0 0.0
    %1289 = vmatprep.subr.mxu0 0.0
    %1290 = vmatpush1.msra.mxu0 0.0
    %1291 = vmatprep.subr.mxu0 0.0
    %1292 = vmatpush1.msra.mxu0 0.0
    %1293 = vmatprep.subr.mxu0 0.0
    %1294 = vmatpush1.msra.mxu0 0.0
    %1295 = vmatprep.subr.mxu0 0.0
    %1296 = vmatpush1.msra.mxu0 0.0
    %1297 = vmatprep.subr.mxu0 0.0
    %1298 = vmatpush1.msra.mxu0 0.0
    %1299 = vmatprep.subr.mxu0 0.0
    %1300 = vmatpush1.msra.mxu0 0.0
    %1301 = vmatprep.subr.mxu0 0.0
    %1302 = vmatpush1.msra.mxu0 0.0
    %1303 = vmatprep.subr.mxu0 0.0
    %1304 = vmatpush1.msra.mxu0 0.0
    %1305 = vmatprep.subr.mxu0 0.0
    %1306 = vmatpush1.msra.mxu0 0.0
    %1307 = vmatprep.subr.mxu0 0.0
    %1308 = vmatpush1.msra.mxu0 0.0
    %1309 = vmatprep.subr.mxu0 0.0
    %1310 = vmatpush1.msra.mxu0 %v160
    %1311 = vmatprep.subr.mxu0 0.0
    %1312 = vmatpush1.msra.mxu0 %v159
    %1313 = vmatprep.subr.mxu0 0.0
    %1314 = vmatpush1.msra.mxu0 %v158
    %1315 = vmatprep.subr.mxu0 0.0
    %1316 = vmatpush1.msra.mxu0 %v157
    %1317 = vmatprep.subr.mxu0 0.0
    %1318 = vmatpush2.msra.mxu0 0.0
    %1319 = vmatprep.subr.mxu0 0.0
    %1320 = vmatpush2.msra.mxu0 0.0
    %1321 = vmatprep.subr.mxu0 0.0
    %1322 = vmatpush2.msra.mxu0 0.0
    %1323 = vmatprep.subr.mxu0 0.0
    %1324 = vmatpush2.msra.mxu0 0.0
    %1325 = vmatprep.subr.mxu0 0.0
    %1326 = vmatpush2.msra.mxu0 0.0
    %1327 = vmatprep.subr.mxu0 0.0
    %1328 = vmatpush2.msra.mxu0 0.0
    %1329 = vmatprep.subr.mxu0 0.0
    %1330 = vmatpush2.msra.mxu0 0.0
    %1331 = vmatprep.subr.mxu0 0.0
    %1332 = vmatpush2.msra.mxu0 0.0
    %1333 = vmatprep.subr.mxu0 0.0
    %1334 = vmatpush2.msra.mxu0 0.0
    %1335 = vmatprep.subr.mxu0 0.0
    %1336 = vmatpush2.msra.mxu0 0.0
    %1337 = vmatprep.subr.mxu0 0.0
    %1338 = vmatpush2.msra.mxu0 0.0
    %1339 = vmatprep.subr.mxu0 0.0
    %1340 = vmatpush2.msra.mxu0 0.0
    %1341 = vmatprep.subr.mxu0 0.0
    %1342 = vmatpush2.msra.mxu0 0.0
    %1343 = vmatprep.subr.mxu0 0.0
    %1344 = vmatpush2.msra.mxu0 0.0
    %1345 = vmatprep.subr.mxu0 0.0
    %1346 = vmatpush2.msra.mxu0 0.0
    %1347 = vmatprep.subr.mxu0 0.0
    %1348 = vmatpush2.msra.mxu0 0.0
    %1349 = vmatprep.mubr.f32.mxu0 0.0
    %1350 = vmatmul.mubr.f32.gmra.mxu0 %v1280
    %v1351 = vpop.f32.mrf.mxu0
    %v1352 = vadd.f32 0.0, %v1351
    %v1353 = vpop.f32.mrf.mxu0
    %1354 = vmatprep.mubr.f32.mxu0 0.0
    %1355 = vmatmul.mubr.f32.gmra.mxu0 %v1283
    %v1356 = vpop.f32.mrf.mxu0
    %v1357 = vadd.f32 0.0, %v1356
    %v1358 = vpop.f32.mrf.mxu0
    %1359 = vdwg.mxu0
    %v1360 = vrcp.pop %v1352
    %v1361 = vrcp.pop %v1357
    %v1362 = vmul.f32 %v1276, %v1360
    %v1363 = vmul.f32 %v1278, %v1361
    %v1364 = vpack.c.bf16 %v1362, %v1362
    %v1365 = vpack.c.bf16 %v1363, %v1363
    %1368 = vrot.lane.b32.xlu0 %v1147, 64
    %v1369 = vpop.permute.xlu0 %1368
    %1370 = vrot.lane.b32.xlu0 %v1153, 64
    %v1371 = vpop.permute.xlu0 %1370
    %v1375 = vsel %vm185, %v1364, 0
    %1377 = vmatprep.subr.bf16.mxu0 0
    %1378 = vmatpush1.bf16.msra.mxu0 0
    %1379 = vmatprep.subr.bf16.mxu0 0
    %1380 = vmatpush1.bf16.msra.mxu0 0
    %1381 = vmatprep.subr.bf16.mxu0 0
    %1382 = vmatpush1.bf16.msra.mxu0 0
    %1383 = vmatprep.subr.bf16.mxu0 0
    %1384 = vmatpush1.bf16.msra.mxu0 0
    %1385 = vmatprep.subr.bf16.mxu0 0
    %1386 = vmatpush1.bf16.msra.mxu0 0
    %1387 = vmatprep.subr.bf16.mxu0 0
    %1388 = vmatpush1.bf16.msra.mxu0 0
    %1389 = vmatprep.subr.bf16.mxu0 0
    %1390 = vmatpush1.bf16.msra.mxu0 %v1371
    %1391 = vmatprep.subr.bf16.mxu0 0
    %1392 = vmatpush1.bf16.msra.mxu0 %v1369
    %1393 = vmatprep.subr.bf16.mxu0 0
    %1394 = vmatpush2.bf16.msra.mxu0 0
    %1395 = vmatprep.subr.bf16.mxu0 0
    %1396 = vmatpush2.bf16.msra.mxu0 0
    %1397 = vmatprep.subr.bf16.mxu0 0
    %1398 = vmatpush2.bf16.msra.mxu0 0
    %1399 = vmatprep.subr.bf16.mxu0 0
    %1400 = vmatpush2.bf16.msra.mxu0 0
    %1401 = vmatprep.subr.bf16.mxu0 0
    %1402 = vmatpush2.bf16.msra.mxu0 0
    %1403 = vmatprep.subr.bf16.mxu0 0
    %1404 = vmatpush2.bf16.msra.mxu0 0
    %1405 = vmatprep.subr.bf16.mxu0 0
    %1406 = vmatpush2.bf16.msra.mxu0 0
    %1407 = vmatprep.subr.bf16.mxu0 0
    %1408 = vmatpush2.bf16.msra.mxu0 0
    %1409 = vmatprep.mubr.bf16.mxu0 0
    %1410 = vmatmul.mubr.bf16.gmra.mxu0 %v1375
    %v1411 = vpop.f32.mrf.mxu0
    %v1412 = vadd.f32 0.0, %v1411
    %v1413 = vpop.f32.mrf.mxu0
    %v1414 = vpop.f32.mrf.mxu0
    %v1415 = vpop.f32.mrf.mxu0
    %1416 = vdwg.mxu0
    %1419 = vrot.lane.b32.xlu0 %v1150, 64
    %v1420 = vpop.permute.xlu0 %1419
    %1421 = vrot.lane.b32.xlu0 %v1156, 64
    %v1422 = vpop.permute.xlu0 %1421
    %v1426 = vsel %vm185, %v1365, 0
    %1428 = vmatprep.subr.bf16.mxu0 0
    %1429 = vmatpush1.bf16.msra.mxu0 0
    %1430 = vmatprep.subr.bf16.mxu0 0
    %1431 = vmatpush1.bf16.msra.mxu0 0
    %1432 = vmatprep.subr.bf16.mxu0 0
    %1433 = vmatpush1.bf16.msra.mxu0 0
    %1434 = vmatprep.subr.bf16.mxu0 0
    %1435 = vmatpush1.bf16.msra.mxu0 0
    %1436 = vmatprep.subr.bf16.mxu0 0
    %1437 = vmatpush1.bf16.msra.mxu0 0
    %1438 = vmatprep.subr.bf16.mxu0 0
    %1439 = vmatpush1.bf16.msra.mxu0 0
    %1440 = vmatprep.subr.bf16.mxu0 0
    %1441 = vmatpush1.bf16.msra.mxu0 %v1422
    %1442 = vmatprep.subr.bf16.mxu0 0
    %1443 = vmatpush1.bf16.msra.mxu0 %v1420
    %1444 = vmatprep.subr.bf16.mxu0 0
    %1445 = vmatpush2.bf16.msra.mxu0 0
    %1446 = vmatprep.subr.bf16.mxu0 0
    %1447 = vmatpush2.bf16.msra.mxu0 0
    %1448 = vmatprep.subr.bf16.mxu0 0
    %1449 = vmatpush2.bf16.msra.mxu0 0
    %1450 = vmatprep.subr.bf16.mxu0 0
    %1451 = vmatpush2.bf16.msra.mxu0 0
    %1452 = vmatprep.subr.bf16.mxu0 0
    %1453 = vmatpush2.bf16.msra.mxu0 0
    %1454 = vmatprep.subr.bf16.mxu0 0
    %1455 = vmatpush2.bf16.msra.mxu0 0
    %1456 = vmatprep.subr.bf16.mxu0 0
    %1457 = vmatpush2.bf16.msra.mxu0 0
    %1458 = vmatprep.subr.bf16.mxu0 0
    %1459 = vmatpush2.bf16.msra.mxu0 0
    %1460 = vmatprep.mubr.bf16.mxu0 0
    %1461 = vmatmul.mubr.bf16.gmra.mxu0 %v1426
    %v1462 = vpop.f32.mrf.mxu0
    %v1463 = vadd.f32 0.0, %v1462
    %v1464 = vpop.f32.mrf.mxu0
    %v1465 = vpop.f32.mrf.mxu0
    %v1466 = vpop.f32.mrf.mxu0
    %1467 = vdwg.mxu0
    %v1468 = vpack.c.bf16 %v1463, %v1412
    %s1469 = scalar_lea.vmem %s7, 16
    %v1470 = vld [vmem:[%s1469] sm:$0xf]
    %v1471 = vld [vmem:[%s1469 + $0x4] sm:$0xf]
    %v1472 = vld [vmem:[%s1469 + $0x8] sm:$0xf]
    %v1473 = vld [vmem:[%s1469 + $0xc] sm:$0xf]
    %s1474 = scalar_lea.vmem %s8, 1
    %v1475 = vld [vmem:[%s1474] sm:$0x1]
    %v1477 = vlaneseq
    %v1478 = vshrl.u32 %v1477, 7
    %v1479 = vsub.s32 0, %v1478
    %v1480 = vrot.slane %v1475, %v1479
    %v1486 = vunpack.c.l.b16 %v1470
    %v1487 = vunpack.c.l.b16 %v1471
    %v1488 = vunpack.c.l.b16 %v1472
    %v1489 = vunpack.c.l.b16 %v1473
    %v1490 = vpack.c.b16 %v1487, %v1486
    %v1491 = vpack.c.b16 %v1489, %v1488
    %v1495 = vsel %vm185, %v1468, 0
    %1497 = vmatprep.subr.bf16.mxu0 0
    %1498 = vmatpush1.bf16.msra.mxu0 0
    %1499 = vmatprep.subr.bf16.mxu0 0
    %1500 = vmatpush1.bf16.msra.mxu0 0
    %1501 = vmatprep.subr.bf16.mxu0 0
    %1502 = vmatpush1.bf16.msra.mxu0 0
    %1503 = vmatprep.subr.bf16.mxu0 0
    %1504 = vmatpush1.bf16.msra.mxu0 0
    %1505 = vmatprep.subr.bf16.mxu0 0
    %1506 = vmatpush1.bf16.msra.mxu0 0
    %1507 = vmatprep.subr.bf16.mxu0 0
    %1508 = vmatpush1.bf16.msra.mxu0 0
    %1509 = vmatprep.subr.bf16.mxu0 0
    %1510 = vmatpush1.bf16.msra.mxu0 %v1491
    %1511 = vmatprep.subr.bf16.mxu0 0
    %1512 = vmatpush1.bf16.msra.mxu0 %v1490
    %1513 = vmatprep.subr.bf16.mxu0 0
    %1514 = vmatpush2.bf16.msra.mxu0 0
    %1515 = vmatprep.subr.bf16.mxu0 0
    %1516 = vmatpush2.bf16.msra.mxu0 0
    %1517 = vmatprep.subr.bf16.mxu0 0
    %1518 = vmatpush2.bf16.msra.mxu0 0
    %1519 = vmatprep.subr.bf16.mxu0 0
    %1520 = vmatpush2.bf16.msra.mxu0 0
    %1521 = vmatprep.subr.bf16.mxu0 0
    %1522 = vmatpush2.bf16.msra.mxu0 0
    %1523 = vmatprep.subr.bf16.mxu0 0
    %1524 = vmatpush2.bf16.msra.mxu0 0
    %1525 = vmatprep.subr.bf16.mxu0 0
    %1526 = vmatpush2.bf16.msra.mxu0 0
    %1527 = vmatprep.subr.bf16.mxu0 0
    %1528 = vmatpush2.bf16.msra.mxu0 0
    %1529 = vmatprep.mubr.bf16.mxu0 0
    %1530 = vmatmul.mubr.bf16.gmra.mxu0 %v1495
    %v1531 = vpop.f32.mrf.mxu0
    %v1532 = vadd.f32 %v1480, %v1531
    %v1533 = vpop.f32.mrf.mxu0
    %v1534 = vpop.f32.mrf.mxu0
    %v1535 = vadd.f32 %v1480, %v1534
    %v1536 = vpop.f32.mrf.mxu0
    %1537 = vdwg.mxu0
    %v1538 = vadd.f32 %v1013, %v1532
    %v1539 = vadd.f32 %v1014, %v1535
    %s1540 = scalar_lea.vmem %s9, 1
    %v1541 = vld [vmem:[%s1540] sm:$0x1]
    %s1542 = scalar_lea.vmem %s10, 1
    %v1543 = vld [vmem:[%s1542] sm:$0x1]
    %v1544 = vsel %vm185, %v1538, 0.0
    %1545 = vadd.xlane.f32.xlu0 %v1544
    %v1546 = vpop.xlane.xlu0 %1545
    %v1547 = vsel %vm185, %v1539, 0.0
    %1548 = vadd.xlane.f32.xlu0 %v1547
    %v1549 = vpop.xlane.xlu0 %1548
    %v1550 = vmul.f32 %v1546, %v749
    %v1551 = vmul.f32 %v1549, %v749
    %v1552 = vsub.f32 %v1538, %v1550
    %v1553 = vsub.f32 %v1539, %v1551
    %v1554 = vmul.f32 %v1552, %v1552
    %v1555 = vmul.f32 %v1553, %v1553
    %v1556 = vsel %vm185, %v1554, 0.0
    %1557 = vadd.xlane.f32.xlu0 %v1556
    %v1558 = vpop.xlane.xlu0 %1557
    %v1559 = vsel %vm185, %v1555, 0.0
    %1560 = vadd.xlane.f32.xlu0 %v1559
    %v1561 = vpop.xlane.xlu0 %1560
    %v1562 = vmul.f32 %v1558, %v749
    %v1563 = vmul.f32 %v1561, %v749
    %v1564 = vadd.f32 %v1562, 1e-05
    %v1565 = vadd.f32 %v1563, 1e-05
    %v1566 = vrsqrt.pop %v1564
    %v1567 = vrsqrt.pop %v1565
    %v1568 = vmul.f32 %v1552, %v1566
    %v1569 = vmul.f32 %v1553, %v1567
    %v1571 = vlaneseq
    %v1572 = vshrl.u32 %v1571, 7
    %v1573 = vsub.s32 0, %v1572
    %v1574 = vrot.slane %v1541, %v1573
    %v1576 = vmul.f32 %v1568, %v1574
    %v1577 = vmul.f32 %v1569, %v1574
    %v1579 = vlaneseq
    %v1580 = vshrl.u32 %v1579, 7
    %v1581 = vsub.s32 0, %v1580
    %v1582 = vrot.slane %v1543, %v1581
    %v1584 = vadd.f32 %v1576, %v1582
    %v1585 = vadd.f32 %v1577, %v1582
    %v1586 = vpack.c.bf16 %v1585, %v1584
    %s1587 = scalar_lea.vmem %s11, 16
    %v1588 = vld [vmem:[%s1587] sm:$0xf]
    %v1589 = vld [vmem:[%s1587 + $0x4] sm:$0xf]
    %v1590 = vld [vmem:[%s1587 + $0x8] sm:$0xf]
    %v1591 = vld [vmem:[%s1587 + $0xc] sm:$0xf]
    %s1592 = scalar_lea.vmem %s12, 1
    %v1593 = vld [vmem:[%s1592] sm:$0x1]
    %v1595 = vlaneseq
    %v1596 = vshrl.u32 %v1595, 7
    %v1597 = vsub.s32 0, %v1596
    %v1598 = vrot.slane %v1593, %v1597
    %v1604 = vunpack.c.l.b16 %v1588
    %v1605 = vunpack.c.l.b16 %v1589
    %v1606 = vunpack.c.l.b16 %v1590
    %v1607 = vunpack.c.l.b16 %v1591
    %v1608 = vpack.c.b16 %v1605, %v1604
    %v1609 = vpack.c.b16 %v1607, %v1606
    %v1613 = vsel %vm185, %v1586, 0
    %1615 = vmatprep.subr.bf16.mxu0 0
    %1616 = vmatpush1.bf16.msra.mxu0 0
    %1617 = vmatprep.subr.bf16.mxu0 0
    %1618 = vmatpush1.bf16.msra.mxu0 0
    %1619 = vmatprep.subr.bf16.mxu0 0
    %1620 = vmatpush1.bf16.msra.mxu0 0
    %1621 = vmatprep.subr.bf16.mxu0 0
    %1622 = vmatpush1.bf16.msra.mxu0 0
    %1623 = vmatprep.subr.bf16.mxu0 0
    %1624 = vmatpush1.bf16.msra.mxu0 0
    %1625 = vmatprep.subr.bf16.mxu0 0
    %1626 = vmatpush1.bf16.msra.mxu0 0
    %1627 = vmatprep.subr.bf16.mxu0 0
    %1628 = vmatpush1.bf16.msra.mxu0 %v1609
    %1629 = vmatprep.subr.bf16.mxu0 0
    %1630 = vmatpush1.bf16.msra.mxu0 %v1608
    %1631 = vmatprep.subr.bf16.mxu0 0
    %1632 = vmatpush2.bf16.msra.mxu0 0
    %1633 = vmatprep.subr.bf16.mxu0 0
    %1634 = vmatpush2.bf16.msra.mxu0 0
    %1635 = vmatprep.subr.bf16.mxu0 0
    %1636 = vmatpush2.bf16.msra.mxu0 0
    %1637 = vmatprep.subr.bf16.mxu0 0
    %1638 = vmatpush2.bf16.msra.mxu0 0
    %1639 = vmatprep.subr.bf16.mxu0 0
    %1640 = vmatpush2.bf16.msra.mxu0 0
    %1641 = vmatprep.subr.bf16.mxu0 0
    %1642 = vmatpush2.bf16.msra.mxu0 0
    %1643 = vmatprep.subr.bf16.mxu0 0
    %1644 = vmatpush2.bf16.msra.mxu0 0
    %1645 = vmatprep.subr.bf16.mxu0 0
    %1646 = vmatpush2.bf16.msra.mxu0 0
    %1647 = vmatprep.mubr.bf16.mxu0 0
    %1648 = vmatmul.mubr.bf16.gmra.mxu0 %v1613
    %v1649 = vpop.f32.mrf.mxu0
    %v1650 = vadd.f32 %v1598, %v1649
    %v1651 = vpop.f32.mrf.mxu0
    %v1652 = vpop.f32.mrf.mxu0
    %v1653 = vadd.f32 %v1598, %v1652
    %v1654 = vpop.f32.mrf.mxu0
    %1655 = vdwg.mxu0
    %v1656 = vmax.f32 %v1650, 0.0
    %v1657 = vmax.f32 %v1653, 0.0
    %v1658 = vpack.c.bf16 %v1657, %v1656
    %s1659 = scalar_lea.vmem %s13, 64
    %v1660 = vld [vmem:[%s1659] sm:$0xf]
    %v1661 = vld [vmem:[%s1659 + $0x4] sm:$0xf]
    %v1662 = vld [vmem:[%s1659 + $0x8] sm:$0xf]
    %v1663 = vld [vmem:[%s1659 + $0xc] sm:$0xf]
    %v1664 = vld [vmem:[%s1659 + $0x10] sm:$0xf]
    %v1665 = vld [vmem:[%s1659 + $0x14] sm:$0xf]
    %v1666 = vld [vmem:[%s1659 + $0x18] sm:$0xf]
    %v1667 = vld [vmem:[%s1659 + $0x1c] sm:$0xf]
    %v1668 = vld [vmem:[%s1659 + $0x20] sm:$0xf]
    %v1669 = vld [vmem:[%s1659 + $0x24] sm:$0xf]
    %v1670 = vld [vmem:[%s1659 + $0x28] sm:$0xf]
    %v1671 = vld [vmem:[%s1659 + $0x2c] sm:$0xf]
    %v1672 = vld [vmem:[%s1659 + $0x30] sm:$0xf]
    %v1673 = vld [vmem:[%s1659 + $0x34] sm:$0xf]
    %v1674 = vld [vmem:[%s1659 + $0x38] sm:$0xf]
    %v1675 = vld [vmem:[%s1659 + $0x3c] sm:$0xf]
    %s1676 = scalar_lea.vmem %s14, 1
    %v1677 = vld [vmem:[%s1676] sm:$0x1]
    %v1679 = vlaneseq
    %v1680 = vshrl.u32 %v1679, 7
    %v1681 = vsub.s32 0, %v1680
    %v1682 = vrot.slane %v1677, %v1681
    %v1700 = vunpack.c.l.b16 %v1660
    %v1701 = vunpack.c.l.b16 %v1661
    %v1702 = vunpack.c.l.b16 %v1662
    %v1703 = vunpack.c.l.b16 %v1663
    %v1704 = vunpack.c.l.b16 %v1664
    %v1705 = vunpack.c.l.b16 %v1665
    %v1706 = vunpack.c.l.b16 %v1666
    %v1707 = vunpack.c.l.b16 %v1667
    %v1708 = vunpack.c.l.b16 %v1668
    %v1709 = vunpack.c.l.b16 %v1669
    %v1710 = vunpack.c.l.b16 %v1670
    %v1711 = vunpack.c.l.b16 %v1671
    %v1712 = vunpack.c.l.b16 %v1672
    %v1713 = vunpack.c.l.b16 %v1673
    %v1714 = vunpack.c.l.b16 %v1674
    %v1715 = vunpack.c.l.b16 %v1675
    %v1716 = vpack.c.b16 %v1701, %v1700
    %v1717 = vpack.c.b16 %v1703, %v1702
    %v1718 = vpack.c.b16 %v1705, %v1704
    %v1719 = vpack.c.b16 %v1707, %v1706
    %v1720 = vpack.c.b16 %v1709, %v1708
    %v1721 = vpack.c.b16 %v1711, %v1710
    %v1722 = vpack.c.b16 %v1713, %v1712
    %v1723 = vpack.c.b16 %v1715, %v1714
    %1732 = vmatprep.subr.bf16.mxu0 0
    %1733 = vmatpush1.bf16.msra.mxu0 %v1723
    %1734 = vmatprep.subr.bf16.mxu0 0
    %1735 = vmatpush1.bf16.msra.mxu0 %v1722
    %1736 = vmatprep.subr.bf16.mxu0 0
    %1737 = vmatpush1.bf16.msra.mxu0 %v1721
    %1738 = vmatprep.subr.bf16.mxu0 0
    %1739 = vmatpush1.bf16.msra.mxu0 %v1720
    %1740 = vmatprep.subr.bf16.mxu0 0
    %1741 = vmatpush1.bf16.msra.mxu0 %v1719
    %1742 = vmatprep.subr.bf16.mxu0 0
    %1743 = vmatpush1.bf16.msra.mxu0 %v1718
    %1744 = vmatprep.subr.bf16.mxu0 0
    %1745 = vmatpush1.bf16.msra.mxu0 %v1717
    %1746 = vmatprep.subr.bf16.mxu0 0
    %1747 = vmatpush1.bf16.msra.mxu0 %v1716
    %1748 = vmatprep.subr.bf16.mxu0 0
    %1749 = vmatpush2.bf16.msra.mxu0 0
    %1750 = vmatprep.subr.bf16.mxu0 0
    %1751 = vmatpush2.bf16.msra.mxu0 0
    %1752 = vmatprep.subr.bf16.mxu0 0
    %1753 = vmatpush2.bf16.msra.mxu0 0
    %1754 = vmatprep.subr.bf16.mxu0 0
    %1755 = vmatpush2.bf16.msra.mxu0 0
    %1756 = vmatprep.subr.bf16.mxu0 0
    %1757 = vmatpush2.bf16.msra.mxu0 0
    %1758 = vmatprep.subr.bf16.mxu0 0
    %1759 = vmatpush2.bf16.msra.mxu0 0
    %1760 = vmatprep.subr.bf16.mxu0 0
    %1761 = vmatpush2.bf16.msra.mxu0 0
    %1762 = vmatprep.subr.bf16.mxu0 0
    %1763 = vmatpush2.bf16.msra.mxu0 0
    %1764 = vmatprep.mubr.bf16.mxu0 0
    %1765 = vmatmul.mubr.bf16.gmra.mxu0 %v1658
    %v1766 = vpop.f32.mrf.mxu0
    %v1767 = vadd.f32 %v1682, %v1766
    %v1768 = vpop.f32.mrf.mxu0
    %v1769 = vpop.f32.mrf.mxu0
    %v1770 = vadd.f32 %v1682, %v1769
    %v1771 = vpop.f32.mrf.mxu0
    %1772 = vdwg.mxu0
    %v1773 = vadd.f32 %v1584, %v1767
    %v1774 = vadd.f32 %v1585, %v1770
    %s1775 = scalar_lea.vmem %s15, 1
    %v1776 = vld [vmem:[%s1775] sm:$0x1]
    %s1777 = scalar_lea.vmem %s16, 1
    %v1778 = vld [vmem:[%s1777] sm:$0x1]
    %v1779 = vsel %vm185, %v1773, 0.0
    %1780 = vadd.xlane.f32.xlu0 %v1779
    %v1781 = vpop.xlane.xlu0 %1780
    %v1782 = vsel %vm185, %v1774, 0.0
    %1783 = vadd.xlane.f32.xlu0 %v1782
    %v1784 = vpop.xlane.xlu0 %1783
    %v1785 = vmul.f32 %v1781, %v749
    %v1786 = vmul.f32 %v1784, %v749
    %v1787 = vsub.f32 %v1773, %v1785
    %v1788 = vsub.f32 %v1774, %v1786
    %v1789 = vmul.f32 %v1787, %v1787
    %v1790 = vmul.f32 %v1788, %v1788
    %v1791 = vsel %vm185, %v1789, 0.0
    %1792 = vadd.xlane.f32.xlu0 %v1791
    %v1793 = vpop.xlane.xlu0 %1792
    %v1794 = vsel %vm185, %v1790, 0.0
    %1795 = vadd.xlane.f32.xlu0 %v1794
    %v1796 = vpop.xlane.xlu0 %1795
    %v1797 = vmul.f32 %v1793, %v749
    %v1798 = vmul.f32 %v1796, %v749
    %v1799 = vadd.f32 %v1797, 1e-05
    %v1800 = vadd.f32 %v1798, 1e-05
    %v1801 = vrsqrt.pop %v1799
    %v1802 = vrsqrt.pop %v1800
    %v1803 = vmul.f32 %v1787, %v1801
    %v1804 = vmul.f32 %v1788, %v1802
    %v1806 = vlaneseq
    %v1807 = vshrl.u32 %v1806, 7
    %v1808 = vsub.s32 0, %v1807
    %v1809 = vrot.slane %v1776, %v1808
    %v1811 = vmul.f32 %v1803, %v1809
    %v1812 = vmul.f32 %v1804, %v1809
    %v1814 = vlaneseq
    %v1815 = vshrl.u32 %v1814, 7
    %v1816 = vsub.s32 0, %v1815
    %v1817 = vrot.slane %v1778, %v1816
    %v1819 = vadd.f32 %v1811, %v1817
    %v1820 = vadd.f32 %v1812, %v1817
    %v1821 = vpack.c.bf16 %v1820, %v1819
    %s1822 = scalar_lea.vmem %s5, 32
    %v1823 = vld [vmem:[%s1822] sm:$0xf]
    %v1824 = vld [vmem:[%s1822 + $0x4] sm:$0xf]
    %v1825 = vld [vmem:[%s1822 + $0x8] sm:$0xf]
    %v1826 = vld [vmem:[%s1822 + $0xc] sm:$0xf]
    %s1827 = scalar_lea.vmem %s6, 2
    %v1828 = vld [vmem:[%s1827] sm:$0x1]
    %v1830 = vlaneseq
    %v1831 = vshrl.u32 %v1830, 7
    %v1832 = vsub.s32 0, %v1831
    %v1833 = vrot.slane %v1828, %v1832
    %v1839 = vunpack.c.l.b16 %v1823
    %v1840 = vunpack.c.l.b16 %v1824
    %v1841 = vunpack.c.l.b16 %v1825
    %v1842 = vunpack.c.l.b16 %v1826
    %v1843 = vpack.c.b16 %v1840, %v1839
    %v1844 = vpack.c.b16 %v1842, %v1841
    %v1848 = vsel %vm185, %v1821, 0
    %1850 = vmatprep.subr.bf16.mxu0 0
    %1851 = vmatpush1.bf16.msra.mxu0 0
    %1852 = vmatprep.subr.bf16.mxu0 0
    %1853 = vmatpush1.bf16.msra.mxu0 0
    %1854 = vmatprep.subr.bf16.mxu0 0
    %1855 = vmatpush1.bf16.msra.mxu0 0
    %1856 = vmatprep.subr.bf16.mxu0 0
    %1857 = vmatpush1.bf16.msra.mxu0 0
    %1858 = vmatprep.subr.bf16.mxu0 0
    %1859 = vmatpush1.bf16.msra.mxu0 0
    %1860 = vmatprep.subr.bf16.mxu0 0
    %1861 = vmatpush1.bf16.msra.mxu0 0
    %1862 = vmatprep.subr.bf16.mxu0 0
    %1863 = vmatpush1.bf16.msra.mxu0 %v1844
    %1864 = vmatprep.subr.bf16.mxu0 0
    %1865 = vmatpush1.bf16.msra.mxu0 %v1843
    %1866 = vmatprep.subr.bf16.mxu0 0
    %1867 = vmatpush2.bf16.msra.mxu0 0
    %1868 = vmatprep.subr.bf16.mxu0 0
    %1869 = vmatpush2.bf16.msra.mxu0 0
    %1870 = vmatprep.subr.bf16.mxu0 0
    %1871 = vmatpush2.bf16.msra.mxu0 0
    %1872 = vmatprep.subr.bf16.mxu0 0
    %1873 = vmatpush2.bf16.msra.mxu0 0
    %1874 = vmatprep.subr.bf16.mxu0 0
    %1875 = vmatpush2.bf16.msra.mxu0 0
    %1876 = vmatprep.subr.bf16.mxu0 0
    %1877 = vmatpush2.bf16.msra.mxu0 0
    %1878 = vmatprep.subr.bf16.mxu0 0
    %1879 = vmatpush2.bf16.msra.mxu0 0
    %1880 = vmatprep.subr.bf16.mxu0 0
    %1881 = vmatpush2.bf16.msra.mxu0 0
    %1882 = vmatprep.mubr.bf16.mxu0 0
    %1883 = vmatmul.mubr.bf16.gmra.mxu0 %v1848
    %v1884 = vpop.f32.mrf.mxu0
    %v1885 = vadd.f32 %v1833, %v1884
    %v1886 = vpop.f32.mrf.mxu0
    %v1887 = vpop.f32.mrf.mxu0
    %v1888 = vadd.f32 %v1833, %v1887
    %v1889 = vpop.f32.mrf.mxu0
    %1890 = vdwg.mxu0
    %v1891 = vpack.c.bf16 %v1888, %v1885
    %v1893 = vunpack.c.l.b16 %v1891
    %v1894 = vunpack.c.h.b16 %v1891
    %v1895 = vpack.c.b16 %v1893, %v1893
    %v1896 = vpack.c.b16 %v1894, %v1894
    %v1899 = vmul.bf16 %v1895, %v249
    %v1900 = vmul.bf16 %v1896, %v249
    %v1901 = vmul.bf16 %v1895, %v264
    %v1902 = vmul.bf16 %v1896, %v264
    %v1903 = vmul.bf16 %v1895, %v276
    %v1904 = vmul.bf16 %v1896, %v276
    %v1905 = vmul.bf16 %v1895, %v288
    %v1906 = vmul.bf16 %v1896, %v288
    %v1909 = vunpack.c.l.b16 %v1901
    %v1910 = vunpack.c.l.b16 %v1902
    %v1911 = vpack.c.b16 %v1909, %v1909
    %v1912 = vpack.c.b16 %v1910, %v1910
    %v1915 = vunpack.c.l.b16 %v1905
    %v1916 = vunpack.c.l.b16 %v1906
    %v1917 = vpack.c.b16 %v1915, %v1915
    %v1918 = vpack.c.b16 %v1916, %v1916
    %v1921 = vsel %vm75, %v1899, %v1911
    %v1924 = vsel %vm75, %v1900, %v1912
    %v1927 = vsel %vm75, %v1903, %v1917
    %v1930 = vsel %vm75, %v1904, %v1918
    %v1931 = vmul.bf16 %v1895, %v317
    %v1932 = vmul.bf16 %v1896, %v317
    %v1933 = vmul.bf16 %v1895, %v322
    %v1934 = vmul.bf16 %v1896, %v322
    %v1935 = vmul.bf16 %v1895, %v327
    %v1936 = vmul.bf16 %v1896, %v327
    %v1937 = vmul.bf16 %v1895, %v332
    %v1938 = vmul.bf16 %v1896, %v332
    %v1941 = vunpack.c.l.b16 %v1933
    %v1942 = vunpack.c.l.b16 %v1934
    %v1943 = vpack.c.b16 %v1941, %v1941
    %v1944 = vpack.c.b16 %v1942, %v1942
    %v1947 = vunpack.c.l.b16 %v1937
    %v1948 = vunpack.c.l.b16 %v1938
    %v1949 = vpack.c.b16 %v1947, %v1947
    %v1950 = vpack.c.b16 %v1948, %v1948
    %v1953 = vsel %vm75, %v1931, %v1943
    %v1956 = vsel %vm75, %v1932, %v1944
    %v1959 = vsel %vm75, %v1935, %v1949
    %v1962 = vsel %vm75, %v1936, %v1950
    %1965 = vrot.lane.b32.xlu0 %v1921, 96
    %v1966 = vpop.permute.xlu0 %1965
    %1967 = vrot.lane.b32.xlu0 %v1927, 96
    %v1968 = vpop.permute.xlu0 %1967
    %v1970 = vsel %vm185, %v1895, 0
    %v1973 = vsel %vm185, %v1966, 0
    %v1976 = vsel %vm185, %v1968, 0
    %1978 = vmatprep.subr.bf16.mxu0 0
    %1979 = vmatpush1.bf16.xpose.msra.mxu0 0
    %1980 = vmatprep.subr.bf16.mxu0 0
    %1981 = vmatpush1.bf16.xpose.msra.mxu0 0
    %1982 = vmatprep.subr.bf16.mxu0 0
    %1983 = vmatpush1.bf16.xpose.msra.mxu0 0
    %1984 = vmatprep.subr.bf16.mxu0 0
    %1985 = vmatpush1.bf16.xpose.msra.mxu0 0
    %1986 = vmatprep.subr.bf16.mxu0 0
    %1987 = vmatpush1.bf16.xpose.msra.mxu0 0
    %1988 = vmatprep.subr.bf16.mxu0 0
    %1989 = vmatpush1.bf16.xpose.msra.mxu0 0
    %1990 = vmatprep.subr.bf16.mxu0 0
    %1991 = vmatpush1.bf16.xpose.msra.mxu0 %v1976
    %1992 = vmatprep.subr.bf16.mxu0 0
    %1993 = vmatpush1.bf16.xpose.msra.mxu0 %v1973
    %1994 = vmatprep.subr.bf16.mxu0 0
    %1995 = vmatpush2.bf16.xpose.msra.mxu0 0
    %1996 = vmatprep.subr.bf16.mxu0 0
    %1997 = vmatpush2.bf16.xpose.msra.mxu0 0
    %1998 = vmatprep.subr.bf16.mxu0 0
    %1999 = vmatpush2.bf16.xpose.msra.mxu0 0
    %2000 = vmatprep.subr.bf16.mxu0 0
    %2001 = vmatpush2.bf16.xpose.msra.mxu0 0
    %2002 = vmatprep.subr.bf16.mxu0 0
    %2003 = vmatpush2.bf16.xpose.msra.mxu0 0
    %2004 = vmatprep.subr.bf16.mxu0 0
    %2005 = vmatpush2.bf16.xpose.msra.mxu0 0
    %2006 = vmatprep.subr.bf16.mxu0 0
    %2007 = vmatpush2.bf16.xpose.msra.mxu0 0
    %2008 = vmatprep.subr.bf16.mxu0 0
    %2009 = vmatpush2.bf16.xpose.msra.mxu0 0
    %2010 = vmatprep.mubr.bf16.mxu0 0
    %2011 = vmatmul.mubr.bf16.gmra.mxu0 %v1970
    %v2012 = vpop.f32.mrf.mxu0
    %v2013 = vadd.f32 0.0, %v2012
    %v2014 = vpop.f32.mrf.mxu0
    %v2015 = vpop.f32.mrf.mxu0
    %v2016 = vpop.f32.mrf.mxu0
    %2017 = vdwg.mxu0
    %2020 = vrot.lane.b32.xlu0 %v1924, 96
    %v2021 = vpop.permute.xlu0 %2020
    %2022 = vrot.lane.b32.xlu0 %v1930, 96
    %v2023 = vpop.permute.xlu0 %2022
    %v2025 = vsel %vm185, %v1896, 0
    %v2028 = vsel %vm185, %v2021, 0
    %v2031 = vsel %vm185, %v2023, 0
    %2033 = vmatprep.subr.bf16.mxu0 0
    %2034 = vmatpush1.bf16.xpose.msra.mxu0 0
    %2035 = vmatprep.subr.bf16.mxu0 0
    %2036 = vmatpush1.bf16.xpose.msra.mxu0 0
    %2037 = vmatprep.subr.bf16.mxu0 0
    %2038 = vmatpush1.bf16.xpose.msra.mxu0 0
    %2039 = vmatprep.subr.bf16.mxu0 0
    %2040 = vmatpush1.bf16.xpose.msra.mxu0 0
    %2041 = vmatprep.subr.bf16.mxu0 0
    %2042 = vmatpush1.bf16.xpose.msra.mxu0 0
    %2043 = vmatprep.subr.bf16.mxu0 0
    %2044 = vmatpush1.bf16.xpose.msra.mxu0 0
    %2045 = vmatprep.subr.bf16.mxu0 0
    %2046 = vmatpush1.bf16.xpose.msra.mxu0 %v2031
    %2047 = vmatprep.subr.bf16.mxu0 0
    %2048 = vmatpush1.bf16.xpose.msra.mxu0 %v2028
    %2049 = vmatprep.subr.bf16.mxu0 0
    %2050 = vmatpush2.bf16.xpose.msra.mxu0 0
    %2051 = vmatprep.subr.bf16.mxu0 0
    %2052 = vmatpush2.bf16.xpose.msra.mxu0 0
    %2053 = vmatprep.subr.bf16.mxu0 0
    %2054 = vmatpush2.bf16.xpose.msra.mxu0 0
    %2055 = vmatprep.subr.bf16.mxu0 0
    %2056 = vmatpush2.bf16.xpose.msra.mxu0 0
    %2057 = vmatprep.subr.bf16.mxu0 0
    %2058 = vmatpush2.bf16.xpose.msra.mxu0 0
    %2059 = vmatprep.subr.bf16.mxu0 0
    %2060 = vmatpush2.bf16.xpose.msra.mxu0 0
    %2061 = vmatprep.subr.bf16.mxu0 0
    %2062 = vmatpush2.bf16.xpose.msra.mxu0 0
    %2063 = vmatprep.subr.bf16.mxu0 0
    %2064 = vmatpush2.bf16.xpose.msra.mxu0 0
    %2065 = vmatprep.mubr.bf16.mxu0 0
    %2066 = vmatmul.mubr.bf16.gmra.mxu0 %v2025
    %v2067 = vpop.f32.mrf.mxu0
    %v2068 = vadd.f32 0.0, %v2067
    %v2069 = vpop.f32.mrf.mxu0
    %v2070 = vpop.f32.mrf.mxu0
    %v2071 = vpop.f32.mrf.mxu0
    %2072 = vdwg.mxu0
    %v2073 = vsel %vm185, %v2013, -inf
    %2074 = vmax.xlane.f32.xlu0 %v2073
    %v2075 = vpop.xlane.xlu0 %2074
    %v2076 = vsel %vm185, %v2068, -inf
    %2077 = vmax.xlane.f32.xlu0 %v2076
    %v2078 = vpop.xlane.xlu0 %2077
    %v2079 = vsub.f32 %v2013, %v2075
    %v2080 = vsub.f32 %v2068, %v2078
    %v2081 = vmul.f32 %v2079, 1.442695
    %v2082 = vpow.pop %v2081
    %v2083 = vmul.f32 %v2080, 1.442695
    %v2084 = vpow.pop %v2083
    %v2086 = vsel %vm185, %v2082, 0
    %v2089 = vsel %vm185, %v2084, 0
    %2091 = vmatprep.subr.mxu0 0.0
    %2092 = vmatpush1.msra.mxu0 0.0
    %2093 = vmatprep.subr.mxu0 0.0
    %2094 = vmatpush1.msra.mxu0 0.0
    %2095 = vmatprep.subr.mxu0 0.0
    %2096 = vmatpush1.msra.mxu0 0.0
    %2097 = vmatprep.subr.mxu0 0.0
    %2098 = vmatpush1.msra.mxu0 0.0
    %2099 = vmatprep.subr.mxu0 0.0
    %2100 = vmatpush1.msra.mxu0 0.0
    %2101 = vmatprep.subr.mxu0 0.0
    %2102 = vmatpush1.msra.mxu0 0.0
    %2103 = vmatprep.subr.mxu0 0.0
    %2104 = vmatpush1.msra.mxu0 0.0
    %2105 = vmatprep.subr.mxu0 0.0
    %2106 = vmatpush1.msra.mxu0 0.0
    %2107 = vmatprep.subr.mxu0 0.0
    %2108 = vmatpush1.msra.mxu0 0.0
    %2109 = vmatprep.subr.mxu0 0.0
    %2110 = vmatpush1.msra.mxu0 0.0
    %2111 = vmatprep.subr.mxu0 0.0
    %2112 = vmatpush1.msra.mxu0 0.0
    %2113 = vmatprep.subr.mxu0 0.0
    %2114 = vmatpush1.msra.mxu0 0.0
    %2115 = vmatprep.subr.mxu0 0.0
    %2116 = vmatpush1.msra.mxu0 %v160
    %2117 = vmatprep.subr.mxu0 0.0
    %2118 = vmatpush1.msra.mxu0 %v159
    %2119 = vmatprep.subr.mxu0 0.0
    %2120 = vmatpush1.msra.mxu0 %v158
    %2121 = vmatprep.subr.mxu0 0.0
    %2122 = vmatpush1.msra.mxu0 %v157
    %2123 = vmatprep.subr.mxu0 0.0
    %2124 = vmatpush2.msra.mxu0 0.0
    %2125 = vmatprep.subr.mxu0 0.0
    %2126 = vmatpush2.msra.mxu0 0.0
    %2127 = vmatprep.subr.mxu0 0.0
    %2128 = vmatpush2.msra.mxu0 0.0
    %2129 = vmatprep.subr.mxu0 0.0
    %2130 = vmatpush2.msra.mxu0 0.0
    %2131 = vmatprep.subr.mxu0 0.0
    %2132 = vmatpush2.msra.mxu0 0.0
    %2133 = vmatprep.subr.mxu0 0.0
    %2134 = vmatpush2.msra.mxu0 0.0
    %2135 = vmatprep.subr.mxu0 0.0
    %2136 = vmatpush2.msra.mxu0 0.0
    %2137 = vmatprep.subr.mxu0 0.0
    %2138 = vmatpush2.msra.mxu0 0.0
    %2139 = vmatprep.subr.mxu0 0.0
    %2140 = vmatpush2.msra.mxu0 0.0
    %2141 = vmatprep.subr.mxu0 0.0
    %2142 = vmatpush2.msra.mxu0 0.0
    %2143 = vmatprep.subr.mxu0 0.0
    %2144 = vmatpush2.msra.mxu0 0.0
    %2145 = vmatprep.subr.mxu0 0.0
    %2146 = vmatpush2.msra.mxu0 0.0
    %2147 = vmatprep.subr.mxu0 0.0
    %2148 = vmatpush2.msra.mxu0 0.0
    %2149 = vmatprep.subr.mxu0 0.0
    %2150 = vmatpush2.msra.mxu0 0.0
    %2151 = vmatprep.subr.mxu0 0.0
    %2152 = vmatpush2.msra.mxu0 0.0
    %2153 = vmatprep.subr.mxu0 0.0
    %2154 = vmatpush2.msra.mxu0 0.0
    %2155 = vmatprep.mubr.f32.mxu0 0.0
    %2156 = vmatmul.mubr.f32.gmra.mxu0 %v2086
    %v2157 = vpop.f32.mrf.mxu0
    %v2158 = vadd.f32 0.0, %v2157
    %v2159 = vpop.f32.mrf.mxu0
    %2160 = vmatprep.mubr.f32.mxu0 0.0
    %2161 = vmatmul.mubr.f32.gmra.mxu0 %v2089
    %v2162 = vpop.f32.mrf.mxu0
    %v2163 = vadd.f32 0.0, %v2162
    %v2164 = vpop.f32.mrf.mxu0
    %2165 = vdwg.mxu0
    %v2166 = vrcp.pop %v2158
    %v2167 = vrcp.pop %v2163
    %v2168 = vmul.f32 %v2082, %v2166
    %v2169 = vmul.f32 %v2084, %v2167
    %v2170 = vpack.c.bf16 %v2168, %v2168
    %v2171 = vpack.c.bf16 %v2169, %v2169
    %2174 = vrot.lane.b32.xlu0 %v1953, 64
    %v2175 = vpop.permute.xlu0 %2174
    %2176 = vrot.lane.b32.xlu0 %v1959, 64
    %v2177 = vpop.permute.xlu0 %2176
    %v2181 = vsel %vm185, %v2170, 0
    %2183 = vmatprep.subr.bf16.mxu0 0
    %2184 = vmatpush1.bf16.msra.mxu0 0
    %2185 = vmatprep.subr.bf16.mxu0 0
    %2186 = vmatpush1.bf16.msra.mxu0 0
    %2187 = vmatprep.subr.bf16.mxu0 0
    %2188 = vmatpush1.bf16.msra.mxu0 0
    %2189 = vmatprep.subr.bf16.mxu0 0
    %2190 = vmatpush1.bf16.msra.mxu0 0
    %2191 = vmatprep.subr.bf16.mxu0 0
    %2192 = vmatpush1.bf16.msra.mxu0 0
    %2193 = vmatprep.subr.bf16.mxu0 0
    %2194 = vmatpush1.bf16.msra.mxu0 0
    %2195 = vmatprep.subr.bf16.mxu0 0
    %2196 = vmatpush1.bf16.msra.mxu0 %v2177
    %2197 = vmatprep.subr.bf16.mxu0 0
    %2198 = vmatpush1.bf16.msra.mxu0 %v2175
    %2199 = vmatprep.subr.bf16.mxu0 0
    %2200 = vmatpush2.bf16.msra.mxu0 0
    %2201 = vmatprep.subr.bf16.mxu0 0
    %2202 = vmatpush2.bf16.msra.mxu0 0
    %2203 = vmatprep.subr.bf16.mxu0 0
    %2204 = vmatpush2.bf16.msra.mxu0 0
    %2205 = vmatprep.subr.bf16.mxu0 0
    %2206 = vmatpush2.bf16.msra.mxu0 0
    %2207 = vmatprep.subr.bf16.mxu0 0
    %2208 = vmatpush2.bf16.msra.mxu0 0
    %2209 = vmatprep.subr.bf16.mxu0 0
    %2210 = vmatpush2.bf16.msra.mxu0 0
    %2211 = vmatprep.subr.bf16.mxu0 0
    %2212 = vmatpush2.bf16.msra.mxu0 0
    %2213 = vmatprep.subr.bf16.mxu0 0
    %2214 = vmatpush2.bf16.msra.mxu0 0
    %2215 = vmatprep.mubr.bf16.mxu0 0
    %2216 = vmatmul.mubr.bf16.gmra.mxu0 %v2181
    %v2217 = vpop.f32.mrf.mxu0
    %v2218 = vadd.f32 0.0, %v2217
    %v2219 = vpop.f32.mrf.mxu0
    %v2220 = vpop.f32.mrf.mxu0
    %v2221 = vpop.f32.mrf.mxu0
    %2222 = vdwg.mxu0
    %2225 = vrot.lane.b32.xlu0 %v1956, 64
    %v2226 = vpop.permute.xlu0 %2225
    %2227 = vrot.lane.b32.xlu0 %v1962, 64
    %v2228 = vpop.permute.xlu0 %2227
    %v2232 = vsel %vm185, %v2171, 0
    %2234 = vmatprep.subr.bf16.mxu0 0
    %2235 = vmatpush1.bf16.msra.mxu0 0
    %2236 = vmatprep.subr.bf16.mxu0 0
    %2237 = vmatpush1.bf16.msra.mxu0 0
    %2238 = vmatprep.subr.bf16.mxu0 0
    %2239 = vmatpush1.bf16.msra.mxu0 0
    %2240 = vmatprep.subr.bf16.mxu0 0
    %2241 = vmatpush1.bf16.msra.mxu0 0
    %2242 = vmatprep.subr.bf16.mxu0 0
    %2243 = vmatpush1.bf16.msra.mxu0 0
    %2244 = vmatprep.subr.bf16.mxu0 0
    %2245 = vmatpush1.bf16.msra.mxu0 0
    %2246 = vmatprep.subr.bf16.mxu0 0
    %2247 = vmatpush1.bf16.msra.mxu0 %v2228
    %2248 = vmatprep.subr.bf16.mxu0 0
    %2249 = vmatpush1.bf16.msra.mxu0 %v2226
    %2250 = vmatprep.subr.bf16.mxu0 0
    %2251 = vmatpush2.bf16.msra.mxu0 0
    %2252 = vmatprep.subr.bf16.mxu0 0
    %2253 = vmatpush2.bf16.msra.mxu0 0
    %2254 = vmatprep.subr.bf16.mxu0 0
    %2255 = vmatpush2.bf16.msra.mxu0 0
    %2256 = vmatprep.subr.bf16.mxu0 0
    %2257 = vmatpush2.bf16.msra.mxu0 0
    %2258 = vmatprep.subr.bf16.mxu0 0
    %2259 = vmatpush2.bf16.msra.mxu0 0
    %2260 = vmatprep.subr.bf16.mxu0 0
    %2261 = vmatpush2.bf16.msra.mxu0 0
    %2262 = vmatprep.subr.bf16.mxu0 0
    %2263 = vmatpush2.bf16.msra.mxu0 0
    %2264 = vmatprep.subr.bf16.mxu0 0
    %2265 = vmatpush2.bf16.msra.mxu0 0
    %2266 = vmatprep.mubr.bf16.mxu0 0
    %2267 = vmatmul.mubr.bf16.gmra.mxu0 %v2232
    %v2268 = vpop.f32.mrf.mxu0
    %v2269 = vadd.f32 0.0, %v2268
    %v2270 = vpop.f32.mrf.mxu0
    %v2271 = vpop.f32.mrf.mxu0
    %v2272 = vpop.f32.mrf.mxu0
    %2273 = vdwg.mxu0
    %v2274 = vpack.c.bf16 %v2269, %v2218
    %s2275 = scalar_lea.vmem %s7, 32
    %v2276 = vld [vmem:[%s2275] sm:$0xf]
    %v2277 = vld [vmem:[%s2275 + $0x4] sm:$0xf]
    %v2278 = vld [vmem:[%s2275 + $0x8] sm:$0xf]
    %v2279 = vld [vmem:[%s2275 + $0xc] sm:$0xf]
    %s2280 = scalar_lea.vmem %s8, 2
    %v2281 = vld [vmem:[%s2280] sm:$0x1]
    %v2283 = vlaneseq
    %v2284 = vshrl.u32 %v2283, 7
    %v2285 = vsub.s32 0, %v2284
    %v2286 = vrot.slane %v2281, %v2285
    %v2292 = vunpack.c.l.b16 %v2276
    %v2293 = vunpack.c.l.b16 %v2277
    %v2294 = vunpack.c.l.b16 %v2278
    %v2295 = vunpack.c.l.b16 %v2279
    %v2296 = vpack.c.b16 %v2293, %v2292
    %v2297 = vpack.c.b16 %v2295, %v2294
    %v2301 = vsel %vm185, %v2274, 0
    %2303 = vmatprep.subr.bf16.mxu0 0
    %2304 = vmatpush1.bf16.msra.mxu0 0
    %2305 = vmatprep.subr.bf16.mxu0 0
    %2306 = vmatpush1.bf16.msra.mxu0 0
    %2307 = vmatprep.subr.bf16.mxu0 0
    %2308 = vmatpush1.bf16.msra.mxu0 0
    %2309 = vmatprep.subr.bf16.mxu0 0
    %2310 = vmatpush1.bf16.msra.mxu0 0
    %2311 = vmatprep.subr.bf16.mxu0 0
    %2312 = vmatpush1.bf16.msra.mxu0 0
    %2313 = vmatprep.subr.bf16.mxu0 0
    %2314 = vmatpush1.bf16.msra.mxu0 0
    %2315 = vmatprep.subr.bf16.mxu0 0
    %2316 = vmatpush1.bf16.msra.mxu0 %v2297
    %2317 = vmatprep.subr.bf16.mxu0 0
    %2318 = vmatpush1.bf16.msra.mxu0 %v2296
    %2319 = vmatprep.subr.bf16.mxu0 0
    %2320 = vmatpush2.bf16.msra.mxu0 0
    %2321 = vmatprep.subr.bf16.mxu0 0
    %2322 = vmatpush2.bf16.msra.mxu0 0
    %2323 = vmatprep.subr.bf16.mxu0 0
    %2324 = vmatpush2.bf16.msra.mxu0 0
    %2325 = vmatprep.subr.bf16.mxu0 0
    %2326 = vmatpush2.bf16.msra.mxu0 0
    %2327 = vmatprep.subr.bf16.mxu0 0
    %2328 = vmatpush2.bf16.msra.mxu0 0
    %2329 = vmatprep.subr.bf16.mxu0 0
    %2330 = vmatpush2.bf16.msra.mxu0 0
    %2331 = vmatprep.subr.bf16.mxu0 0
    %2332 = vmatpush2.bf16.msra.mxu0 0
    %2333 = vmatprep.subr.bf16.mxu0 0
    %2334 = vmatpush2.bf16.msra.mxu0 0
    %2335 = vmatprep.mubr.bf16.mxu0 0
    %2336 = vmatmul.mubr.bf16.gmra.mxu0 %v2301
    %v2337 = vpop.f32.mrf.mxu0
    %v2338 = vadd.f32 %v2286, %v2337
    %v2339 = vpop.f32.mrf.mxu0
    %v2340 = vpop.f32.mrf.mxu0
    %v2341 = vadd.f32 %v2286, %v2340
    %v2342 = vpop.f32.mrf.mxu0
    %2343 = vdwg.mxu0
    %v2344 = vadd.f32 %v1819, %v2338
    %v2345 = vadd.f32 %v1820, %v2341
    %s2346 = scalar_lea.vmem %s9, 2
    %v2347 = vld [vmem:[%s2346] sm:$0x1]
    %s2348 = scalar_lea.vmem %s10, 2
    %v2349 = vld [vmem:[%s2348] sm:$0x1]
    %v2350 = vsel %vm185, %v2344, 0.0
    %2351 = vadd.xlane.f32.xlu0 %v2350
    %v2352 = vpop.xlane.xlu0 %2351
    %v2353 = vsel %vm185, %v2345, 0.0
    %2354 = vadd.xlane.f32.xlu0 %v2353
    %v2355 = vpop.xlane.xlu0 %2354
    %v2356 = vmul.f32 %v2352, %v749
    %v2357 = vmul.f32 %v2355, %v749
    %v2358 = vsub.f32 %v2344, %v2356
    %v2359 = vsub.f32 %v2345, %v2357
    %v2360 = vmul.f32 %v2358, %v2358
    %v2361 = vmul.f32 %v2359, %v2359
    %v2362 = vsel %vm185, %v2360, 0.0
    %2363 = vadd.xlane.f32.xlu0 %v2362
    %v2364 = vpop.xlane.xlu0 %2363
    %v2365 = vsel %vm185, %v2361, 0.0
    %2366 = vadd.xlane.f32.xlu0 %v2365
    %v2367 = vpop.xlane.xlu0 %2366
    %v2368 = vmul.f32 %v2364, %v749
    %v2369 = vmul.f32 %v2367, %v749
    %v2370 = vadd.f32 %v2368, 1e-05
    %v2371 = vadd.f32 %v2369, 1e-05
    %v2372 = vrsqrt.pop %v2370
    %v2373 = vrsqrt.pop %v2371
    %v2374 = vmul.f32 %v2358, %v2372
    %v2375 = vmul.f32 %v2359, %v2373
    %v2377 = vlaneseq
    %v2378 = vshrl.u32 %v2377, 7
    %v2379 = vsub.s32 0, %v2378
    %v2380 = vrot.slane %v2347, %v2379
    %v2382 = vmul.f32 %v2374, %v2380
    %v2383 = vmul.f32 %v2375, %v2380
    %v2385 = vlaneseq
    %v2386 = vshrl.u32 %v2385, 7
    %v2387 = vsub.s32 0, %v2386
    %v2388 = vrot.slane %v2349, %v2387
    %v2390 = vadd.f32 %v2382, %v2388
    %v2391 = vadd.f32 %v2383, %v2388
    %v2392 = vpack.c.bf16 %v2391, %v2390
    %s2393 = scalar_lea.vmem %s11, 32
    %v2394 = vld [vmem:[%s2393] sm:$0xf]
    %v2395 = vld [vmem:[%s2393 + $0x4] sm:$0xf]
    %v2396 = vld [vmem:[%s2393 + $0x8] sm:$0xf]
    %v2397 = vld [vmem:[%s2393 + $0xc] sm:$0xf]
    %s2398 = scalar_lea.vmem %s12, 2
    %v2399 = vld [vmem:[%s2398] sm:$0x1]
    %v2401 = vlaneseq
    %v2402 = vshrl.u32 %v2401, 7
    %v2403 = vsub.s32 0, %v2402
    %v2404 = vrot.slane %v2399, %v2403
    %v2410 = vunpack.c.l.b16 %v2394
    %v2411 = vunpack.c.l.b16 %v2395
    %v2412 = vunpack.c.l.b16 %v2396
    %v2413 = vunpack.c.l.b16 %v2397
    %v2414 = vpack.c.b16 %v2411, %v2410
    %v2415 = vpack.c.b16 %v2413, %v2412
    %v2419 = vsel %vm185, %v2392, 0
    %2421 = vmatprep.subr.bf16.mxu0 0
    %2422 = vmatpush1.bf16.msra.mxu0 0
    %2423 = vmatprep.subr.bf16.mxu0 0
    %2424 = vmatpush1.bf16.msra.mxu0 0
    %2425 = vmatprep.subr.bf16.mxu0 0
    %2426 = vmatpush1.bf16.msra.mxu0 0
    %2427 = vmatprep.subr.bf16.mxu0 0
    %2428 = vmatpush1.bf16.msra.mxu0 0
    %2429 = vmatprep.subr.bf16.mxu0 0
    %2430 = vmatpush1.bf16.msra.mxu0 0
    %2431 = vmatprep.subr.bf16.mxu0 0
    %2432 = vmatpush1.bf16.msra.mxu0 0
    %2433 = vmatprep.subr.bf16.mxu0 0
    %2434 = vmatpush1.bf16.msra.mxu0 %v2415
    %2435 = vmatprep.subr.bf16.mxu0 0
    %2436 = vmatpush1.bf16.msra.mxu0 %v2414
    %2437 = vmatprep.subr.bf16.mxu0 0
    %2438 = vmatpush2.bf16.msra.mxu0 0
    %2439 = vmatprep.subr.bf16.mxu0 0
    %2440 = vmatpush2.bf16.msra.mxu0 0
    %2441 = vmatprep.subr.bf16.mxu0 0
    %2442 = vmatpush2.bf16.msra.mxu0 0
    %2443 = vmatprep.subr.bf16.mxu0 0
    %2444 = vmatpush2.bf16.msra.mxu0 0
    %2445 = vmatprep.subr.bf16.mxu0 0
    %2446 = vmatpush2.bf16.msra.mxu0 0
    %2447 = vmatprep.subr.bf16.mxu0 0
    %2448 = vmatpush2.bf16.msra.mxu0 0
    %2449 = vmatprep.subr.bf16.mxu0 0
    %2450 = vmatpush2.bf16.msra.mxu0 0
    %2451 = vmatprep.subr.bf16.mxu0 0
    %2452 = vmatpush2.bf16.msra.mxu0 0
    %2453 = vmatprep.mubr.bf16.mxu0 0
    %2454 = vmatmul.mubr.bf16.gmra.mxu0 %v2419
    %v2455 = vpop.f32.mrf.mxu0
    %v2456 = vadd.f32 %v2404, %v2455
    %v2457 = vpop.f32.mrf.mxu0
    %v2458 = vpop.f32.mrf.mxu0
    %v2459 = vadd.f32 %v2404, %v2458
    %v2460 = vpop.f32.mrf.mxu0
    %2461 = vdwg.mxu0
    %v2462 = vmax.f32 %v2456, 0.0
    %v2463 = vmax.f32 %v2459, 0.0
    %v2464 = vpack.c.bf16 %v2463, %v2462
    %s2465 = scalar_lea.vmem %s13, 128
    %v2466 = vld [vmem:[%s2465] sm:$0xf]
    %v2467 = vld [vmem:[%s2465 + $0x4] sm:$0xf]
    %v2468 = vld [vmem:[%s2465 + $0x8] sm:$0xf]
    %v2469 = vld [vmem:[%s2465 + $0xc] sm:$0xf]
    %v2470 = vld [vmem:[%s2465 + $0x10] sm:$0xf]
    %v2471 = vld [vmem:[%s2465 + $0x14] sm:$0xf]
    %v2472 = vld [vmem:[%s2465 + $0x18] sm:$0xf]
    %v2473 = vld [vmem:[%s2465 + $0x1c] sm:$0xf]
    %v2474 = vld [vmem:[%s2465 + $0x20] sm:$0xf]
    %v2475 = vld [vmem:[%s2465 + $0x24] sm:$0xf]
    %v2476 = vld [vmem:[%s2465 + $0x28] sm:$0xf]
    %v2477 = vld [vmem:[%s2465 + $0x2c] sm:$0xf]
    %v2478 = vld [vmem:[%s2465 + $0x30] sm:$0xf]
    %v2479 = vld [vmem:[%s2465 + $0x34] sm:$0xf]
    %v2480 = vld [vmem:[%s2465 + $0x38] sm:$0xf]
    %v2481 = vld [vmem:[%s2465 + $0x3c] sm:$0xf]
    %s2482 = scalar_lea.vmem %s14, 2
    %v2483 = vld [vmem:[%s2482] sm:$0x1]
    %v2485 = vlaneseq
    %v2486 = vshrl.u32 %v2485, 7
    %v2487 = vsub.s32 0, %v2486
    %v2488 = vrot.slane %v2483, %v2487
    %v2506 = vunpack.c.l.b16 %v2466
    %v2507 = vunpack.c.l.b16 %v2467
    %v2508 = vunpack.c.l.b16 %v2468
    %v2509 = vunpack.c.l.b16 %v2469
    %v2510 = vunpack.c.l.b16 %v2470
    %v2511 = vunpack.c.l.b16 %v2471
    %v2512 = vunpack.c.l.b16 %v2472
    %v2513 = vunpack.c.l.b16 %v2473
    %v2514 = vunpack.c.l.b16 %v2474
    %v2515 = vunpack.c.l.b16 %v2475
    %v2516 = vunpack.c.l.b16 %v2476
    %v2517 = vunpack.c.l.b16 %v2477
    %v2518 = vunpack.c.l.b16 %v2478
    %v2519 = vunpack.c.l.b16 %v2479
    %v2520 = vunpack.c.l.b16 %v2480
    %v2521 = vunpack.c.l.b16 %v2481
    %v2522 = vpack.c.b16 %v2507, %v2506
    %v2523 = vpack.c.b16 %v2509, %v2508
    %v2524 = vpack.c.b16 %v2511, %v2510
    %v2525 = vpack.c.b16 %v2513, %v2512
    %v2526 = vpack.c.b16 %v2515, %v2514
    %v2527 = vpack.c.b16 %v2517, %v2516
    %v2528 = vpack.c.b16 %v2519, %v2518
    %v2529 = vpack.c.b16 %v2521, %v2520
    %2538 = vmatprep.subr.bf16.mxu0 0
    %2539 = vmatpush1.bf16.msra.mxu0 %v2529
    %2540 = vmatprep.subr.bf16.mxu0 0
    %2541 = vmatpush1.bf16.msra.mxu0 %v2528
    %2542 = vmatprep.subr.bf16.mxu0 0
    %2543 = vmatpush1.bf16.msra.mxu0 %v2527
    %2544 = vmatprep.subr.bf16.mxu0 0
    %2545 = vmatpush1.bf16.msra.mxu0 %v2526
    %2546 = vmatprep.subr.bf16.mxu0 0
    %2547 = vmatpush1.bf16.msra.mxu0 %v2525
    %2548 = vmatprep.subr.bf16.mxu0 0
    %2549 = vmatpush1.bf16.msra.mxu0 %v2524
    %2550 = vmatprep.subr.bf16.mxu0 0
    %2551 = vmatpush1.bf16.msra.mxu0 %v2523
    %2552 = vmatprep.subr.bf16.mxu0 0
    %2553 = vmatpush1.bf16.msra.mxu0 %v2522
    %2554 = vmatprep.subr.bf16.mxu0 0
    %2555 = vmatpush2.bf16.msra.mxu0 0
    %2556 = vmatprep.subr.bf16.mxu0 0
    %2557 = vmatpush2.bf16.msra.mxu0 0
    %2558 = vmatprep.subr.bf16.mxu0 0
    %2559 = vmatpush2.bf16.msra.mxu0 0
    %2560 = vmatprep.subr.bf16.mxu0 0
    %2561 = vmatpush2.bf16.msra.mxu0 0
    %2562 = vmatprep.subr.bf16.mxu0 0
    %2563 = vmatpush2.bf16.msra.mxu0 0
    %2564 = vmatprep.subr.bf16.mxu0 0
    %2565 = vmatpush2.bf16.msra.mxu0 0
    %2566 = vmatprep.subr.bf16.mxu0 0
    %2567 = vmatpush2.bf16.msra.mxu0 0
    %2568 = vmatprep.subr.bf16.mxu0 0
    %2569 = vmatpush2.bf16.msra.mxu0 0
    %2570 = vmatprep.mubr.bf16.mxu0 0
    %2571 = vmatmul.mubr.bf16.gmra.mxu0 %v2464
    %v2572 = vpop.f32.mrf.mxu0
    %v2573 = vadd.f32 %v2488, %v2572
    %v2574 = vpop.f32.mrf.mxu0
    %v2575 = vpop.f32.mrf.mxu0
    %v2576 = vadd.f32 %v2488, %v2575
    %v2577 = vpop.f32.mrf.mxu0
    %2578 = vdwg.mxu0
    %v2579 = vadd.f32 %v2390, %v2573
    %v2580 = vadd.f32 %v2391, %v2576
    %s2581 = scalar_lea.vmem %s15, 2
    %v2582 = vld [vmem:[%s2581] sm:$0x1]
    %s2583 = scalar_lea.vmem %s16, 2
    %v2584 = vld [vmem:[%s2583] sm:$0x1]
    %v2585 = vsel %vm185, %v2579, 0.0
    %2586 = vadd.xlane.f32.xlu0 %v2585
    %v2587 = vpop.xlane.xlu0 %2586
    %v2588 = vsel %vm185, %v2580, 0.0
    %2589 = vadd.xlane.f32.xlu0 %v2588
    %v2590 = vpop.xlane.xlu0 %2589
    %v2591 = vmul.f32 %v2587, %v749
    %v2592 = vmul.f32 %v2590, %v749
    %v2593 = vsub.f32 %v2579, %v2591
    %v2594 = vsub.f32 %v2580, %v2592
    %v2595 = vmul.f32 %v2593, %v2593
    %v2596 = vmul.f32 %v2594, %v2594
    %v2597 = vsel %vm185, %v2595, 0.0
    %2598 = vadd.xlane.f32.xlu0 %v2597
    %v2599 = vpop.xlane.xlu0 %2598
    %v2600 = vsel %vm185, %v2596, 0.0
    %2601 = vadd.xlane.f32.xlu0 %v2600
    %v2602 = vpop.xlane.xlu0 %2601
    %v2603 = vmul.f32 %v2599, %v749
    %v2604 = vmul.f32 %v2602, %v749
    %v2605 = vadd.f32 %v2603, 1e-05
    %v2606 = vadd.f32 %v2604, 1e-05
    %v2607 = vrsqrt.pop %v2605
    %v2608 = vrsqrt.pop %v2606
    %v2609 = vmul.f32 %v2593, %v2607
    %v2610 = vmul.f32 %v2594, %v2608
    %v2612 = vlaneseq
    %v2613 = vshrl.u32 %v2612, 7
    %v2614 = vsub.s32 0, %v2613
    %v2615 = vrot.slane %v2582, %v2614
    %v2617 = vmul.f32 %v2609, %v2615
    %v2618 = vmul.f32 %v2610, %v2615
    %v2620 = vlaneseq
    %v2621 = vshrl.u32 %v2620, 7
    %v2622 = vsub.s32 0, %v2621
    %v2623 = vrot.slane %v2584, %v2622
    %v2625 = vadd.f32 %v2617, %v2623
    %v2626 = vadd.f32 %v2618, %v2623
    %2627 = vst.msk [vmem:[#allocation2] sm:$0xff] %vm185, %v2625
    %2628 = vst.msk [vmem:[#allocation2 + $0x8] sm:$0xff] %vm185, %v2626
    // Predicated region
    $region70: #{tpu_custom_call.1} parent=1 // pred_check
      _
    $region71: #{tpu_custom_call.1} parent=1 // pred_check_branch
      %2630 = sbr.rel (0) target = $region73
    $region72: #{tpu_custom_call.1} parent=1 // pred_region
      %s2632 = ssub.s32 256, 256
      %2633 = vsyncadd [#allocation3], %s2632
      %s2634 = sshll.u32 [#allocation2], 4
      %s2635 = int_to_ptr.vmem [resolvable:$true] %s2634
      %2640 = dma.vmem_to_hbm [thread:$0]  %s2635, 256, %s17, [#allocation3], 128, 128, 8
    $region73: #{tpu_custom_call.1} parent=1 // pred_fallthru
      _
    // Predicated region
    $region74: #{tpu_custom_call.1} parent=1 // pred_check
      _
    $region75: #{tpu_custom_call.1} parent=1 // pred_check_branch
      %2642 = sbr.rel (0) target = $region77
    $region76: #{tpu_custom_call.1} parent=1 // pred_region
      %2643 = dma.done [#allocation3], 256
    $region77: #{tpu_custom_call.1} parent=1 // pred_fallthru
      _
    %2644 = vsyncpa [#allocation3], 1

</llo_original>
